<compile_context>
chip_gen: v5e
topology: v5e:2x2
jax: 0.10.0
libtpu: 0.0.40
codegen_flags: <defaults>
</compile_context>

<pallas_src>
import functools

import jax
import jax.numpy as jnp
import numpy as np
from jax import lax
from jax.experimental import pallas as pl
from jax.experimental.pallas import tpu as pltpu

_BN_EPS = 1e-5


# ----------------------------------------------------------------------------
# Fused kernel: one batch-tile (the whole batch by default) of the whole
# DepthCSPStage forward pass.
# ----------------------------------------------------------------------------
def _depth_csp_kernel(x_ref, mask_ref, wslab_ref, bslab_ref, dwm_ref, o_ref,
                      *, nb, W, dims, woffs, boffs):
    cf = dims['ch_first']
    cm = dims['ch_mid']
    ch = dims['ch_hidden']
    co = dims['cout']
    cin1 = x_ref.shape[0]              # Cin + 1 (ones row folds conv1/2 bias)
    L = x_ref.shape[1]                 # batch_tile * H * W lanes

    maskv = mask_ref[...]              # (9, L) 0/1 f32; row 4 (tap 0,0) == 1.0

    def silu(v):
        # sigmoid via EUP exp + EUP approx reciprocal (frees VALU slots)
        return v * pl.reciprocal(1.0 + jnp.exp(-v), approx=True)

    def relu(v):
        return jnp.maximum(v, 0.0)

    def rolled(a, off):
        # a[:, n*HW + i*W + j] -> value at (i+dh, j+dw) of the SAME image;
        # out-of-image taps are zeroed by the boundary masks (which also kill
        # any cross-image leakage from the flat batch*HW rotate).
        if off == 0:
            return a
        return pltpu.roll(a, shift=(-off) % L, axis=1)

    def wmat(off, rows, k):            # bf16 MXU operand from the f32 slab
        return wslab_ref[off:off + rows, 0:k].astype(jnp.bfloat16)

    def bcol(off, rows):               # (rows, 1) f32 bias column
        return bslab_ref[off:off + rows, :]

    def mxu(w, a):
        return jnp.dot(w, a.astype(jnp.bfloat16),
                       preferred_element_type=jnp.float32)

    x = x_ref[...]                     # (Cin+1, L) f32, last row = ones

    # ----- DepthCSPStage.forward ---------------------------------------------
    # conv1 + conv2: two 1x1 ConvBNAct(SiLU) on the same input, fused into one
    # matmul; biases folded via the ones row of x.
    y12 = silu(mxu(wmat(woffs['w12'], cf + cm, cin1), x))
    y1 = y12[0:cf, :]
    y2 = y12[cf:cf + cm, :]

    mid = [y1]
    for bi in range(nb):               # BasicBlock_3x3_Reverse_Depth
        # block.conv2: 3x3 ConvBNAct (SiLU); im2col -> one K = 9*cm+1 matmul.
        cols = []
        tap = 0
        for dh in (-1, 0, 1):
            for dw in (-1, 0, 1):
                s = rolled(y2, dh * W + dw)
                if dh == 0 and dw == 0:
                    cols.append(s)                     # center tap: mask == 1
                else:
                    cols.append(s * maskv[tap:tap + 1, :])
                tap += 1
        cols.append(maskv[4:5, :])                     # all-ones row folds bias
        patches = jnp.concatenate(cols, axis=0)        # (9*cm + 1, L)
        h = silu(mxu(wmat(woffs['w3'][bi], ch, 9 * cm + 1), patches))

        # block.conv1 (DepthwiseSeparableConv): depthwise 5x5 + BN + ReLU.
        # Weights are pre-masked in the wrapper -> pure roll + MAC loop.
        acc = None
        tap = 0
        for dh in (-2, -1, 0, 1, 2):
            for dw in (-2, -1, 0, 1, 2):
                term = dwm_ref[bi * 25 + tap] * rolled(h, dh * W + dw)
                acc = term if acc is None else acc + term
                tap += 1
        h = relu(acc + bcol(boffs['bdw'][bi], ch))

        # pointwise 1x1 + BN + ReLU
        h = relu(mxu(wmat(woffs['wpw'][bi], cm, ch), h)
                 + bcol(boffs['bpw'][bi], cm))

        y2 = y2 + h                                    # shortcut=True
        mid.append(y2)

    y = jnp.concatenate(mid, axis=0)                   # (cm*nb + cf, L) in VMEM
    out = silu(mxu(wmat(woffs['w3cat'], co, cm * nb + cf), y)
               + bcol(boffs['bcat'], co))
    o_ref[...] = out.astype(o_ref.dtype)               # lane-dense store


# ----------------------------------------------------------------------------
# Wrapper
# ----------------------------------------------------------------------------
def _tap_masks(H, W, r):
    """((2r+1)^2, H*W) 0/1 masks: tap (dh,dw) valid iff (i+dh, j+dw) in-image."""
    HW = H * W
    ii, jj = np.divmod(np.arange(HW, dtype=np.int64), W)
    rows = []
    for dh in range(-r, r + 1):
        for dw in range(-r, r + 1):
            rows.append(((ii + dh >= 0) & (ii + dh < H) &
                         (jj + dw >= 0) & (jj + dw < W)).astype(np.float32))
    return np.stack(rows, axis=0)


def depth_gfpn_pallas(x_nchw, params, batch_tile=None):
    """x_nchw: (N, Cin, H, W) float32 (PyTorch NCHW layout)."""
    N, Cin, H, W = x_nchw.shape
    HW = H * W
    nb = params['n']
    dims = params['dims']
    Cout = dims['cout']
    ch = dims['ch_hidden']

    # One fused step over the whole batch by default (removes all per-step grid
    # overhead on v5e/v6e).  For larger batches on v7x, set batch_tile = N//2 so
    # each TensorCore gets its own slab of images via the 'parallel' grid axis.
    if batch_tile is None:
        batch_tile = N
    assert N % batch_tile == 0
    num_tiles = N // batch_tile
    L = batch_tile * HW

    # Lane-dense, batch-in-lanes layout: channels -> sublanes, (batch, H*W) ->
    # lanes; the appended ones row folds the conv1/conv2 biases into their MXU
    # matmul.
    x_lane = jnp.transpose(x_nchw.reshape(N, Cin, HW), (1, 0, 2)).reshape(Cin, N * HW)
    x_aug = jnp.concatenate([x_lane, jnp.ones((1, N * HW), x_nchw.dtype)], axis=0)

    # Boundary masks tiled batch_tile times along lanes.
    mask9 = jnp.asarray(np.tile(_tap_masks(H, W, 1), (1, batch_tile)))   # (9, L)
    mask25 = jnp.asarray(_tap_masks(H, W, 2))                            # (25, HW)

    # Pre-masked depthwise 5x5 weights: (nb*25, ch_hidden, L); the in-kernel
    # depthwise conv becomes roll + MAC with no per-tap broadcast/mask work.
    dw_w = params['dw_w']                                                # (nb, ch, 25)
    dwm = jnp.transpose(dw_w, (0, 2, 1))[:, :, :, None] * mask25[None, :, None, :]
    dwm = jnp.tile(dwm, (1, 1, 1, batch_tile)).reshape(nb * 25, ch, L)

    kern = functools.partial(
        _depth_csp_kernel, nb=nb, W=W, dims=dims,
        woffs=params['woffs'], boffs=params['boffs'])

    out = pl.pallas_call(
        kern,
        out_shape=jax.ShapeDtypeStruct((Cout, N * HW), x_nchw.dtype),
        grid=(num_tiles,),
        in_specs=[
            pl.BlockSpec((Cin + 1, L), lambda t: (0, t)),
            pl.BlockSpec(mask9.shape, lambda t: (0, 0)),
            pl.BlockSpec(params['wslab'].shape, lambda t: (0, 0)),
            pl.BlockSpec(params['bslab'].shape, lambda t: (0, 0)),
            pl.BlockSpec(dwm.shape, lambda t: (0, 0, 0)),
        ],
        out_specs=pl.BlockSpec((Cout, L), lambda t: (0, t)),
        compiler_params=pltpu.CompilerParams(
            dimension_semantics=("parallel",),
            vmem_limit_bytes=32 * 1024 * 1024),
    )(x_aug, mask9, params['wslab'], params['bslab'], dwm)

    return jnp.transpose(out.reshape(Cout, N, HW), (1, 0, 2)).reshape(N, Cout, H, W)


# ----------------------------------------------------------------------------
# Deterministic parameters (Conv2d + eval-mode BN folded into conv+bias)
# ----------------------------------------------------------------------------
def _convbn(key, cin, cout, k, groups=1):
    """Conv2d(bias=False) + eval-mode BatchNorm2d folded to (weight, bias).

    Parameters are rounded to bf16-representable values so the in-kernel bf16
    MXU path and the f32 XLA reference use bit-identical parameter values."""
    k1, k2, k3, k4, k5 = jax.random.split(key, 5)
    fan_in = (cin // groups) * k * k
    w = jax.random.normal(k1, (cout, cin // groups, k, k), jnp.float32)
    w = w / np.sqrt(fan_in)
    gamma = jax.random.uniform(k2, (cout,), minval=0.75, maxval=1.25)
    beta = jax.random.normal(k3, (cout,)) * 0.1
    mean = jax.random.normal(k4, (cout,)) * 0.1
    var = jax.random.uniform(k5, (cout,), minval=0.75, maxval=1.25)
    scale = gamma / jnp.sqrt(var + _BN_EPS)
    w_f = (w * scale[:, None, None, None]).astype(jnp.bfloat16).astype(jnp.float32)
    b_f = (beta - mean * scale).astype(jnp.bfloat16).astype(jnp.float32)
    return w_f, b_f


def _aug1x1(w, b):   # (Cout,Cin,1,1),(Cout,) -> (Cout, Cin+1), bias as last col
    return jnp.concatenate([w[:, :, 0, 0], b[:, None]], axis=1)


def _aug3x3(w, b):   # (Cout,Cin,3,3) -> (Cout, 9*Cin+1), tap-major, bias last
    co, ci, kh, kw = w.shape
    m = jnp.transpose(w, (0, 2, 3, 1)).reshape(co, kh * kw * ci)
    return jnp.concatenate([m, b[:, None]], axis=1)


def build_depth_gfpn_params(key, in_channels, out_channels, depth=1.0,
                            hidden_ratio=1.0, split_ratio=0.5):
    n = round(3 * depth)
    ch_first = int(out_channels * split_ratio)
    ch_mid = ch_first
    keys = jax.random.split(key, 3 + 3 * n)

    conv1 = _convbn(keys[0], in_channels, ch_first, 1)        # 1x1, SiLU
    conv2 = _convbn(keys[1], in_channels, ch_mid, 1)          # 1x1, SiLU
    blocks = []
    next_ch_in = ch_mid
    ch_hidden = int(next_ch_in * hidden_ratio)
    for i in range(n):
        ch_hidden = int(next_ch_in * hidden_ratio)
        c2 = _convbn(keys[2 + 3 * i], next_ch_in, ch_hidden, 3)   # 3x3, SiLU
        # TODO(synk): yolov6.layers.RTMDet.DepthwiseSeparableConv source is not
        # in the spec; assuming dw5x5(groups=C)+BN+ReLU followed by pw1x1+BN+ReLU.
        dw = _convbn(keys[3 + 3 * i], ch_hidden, ch_hidden, 5, groups=ch_hidden)
        pw = _convbn(keys[4 + 3 * i], ch_hidden, ch_mid, 1)
        blocks.append({'c2': c2, 'dw': dw, 'pw': pw, 'ch_hidden': ch_hidden})
        next_ch_in = ch_mid
    conv3 = _convbn(keys[2 + 3 * n], ch_mid * n + ch_first, out_channels, 1)

    # --- pack all MXU weight matrices into one lane-padded f32 slab ----------
    entries, woffs, cur = [], {}, 0

    def _add(mat):
        nonlocal cur
        off = cur
        entries.append((off, np.asarray(mat, np.float32)))
        cur += ((mat.shape[0] + 7) // 8) * 8
        return off

    woffs['w12'] = _add(jnp.concatenate([_aug1x1(*conv1), _aug1x1(*conv2)], axis=0))
    woffs['w3'], woffs['wpw'] = [], []
    for blk in blocks:
        woffs['w3'].append(_add(_aug3x3(*blk['c2'])))
        woffs['wpw'].append(_add(blk['pw'][0][:, :, 0, 0]))
    woffs['w3cat'] = _add(conv3[0][:, :, 0, 0])
    kpad = ((max(m.shape[1] for _, m in entries) + 127) // 128) * 128
    wslab = np.zeros((max(cur, 8), kpad), np.float32)
    for off, m in entries:
        wslab[off:off + m.shape[0], :m.shape[1]] = m

    # --- pack the remaining bias columns into one slab -----------------------
    bentries, boffs, bcur = [], {'bdw': [], 'bpw': []}, 0

    def _addb(vec):
        nonlocal bcur
        off = bcur
        bentries.append((off, np.asarray(vec, np.float32)))
        bcur += ((vec.shape[0] + 7) // 8) * 8
        return off

    for blk in blocks:
        boffs['bdw'].append(_addb(blk['dw'][1]))
        boffs['bpw'].append(_addb(blk['pw'][1]))
    boffs['bcat'] = _addb(conv3[1])
    bslab = np.zeros((max(bcur, 8), 1), np.float32)
    for off, v in bentries:
        bslab[off:off + v.shape[0], 0] = v

    dw_w = jnp.stack([blk['dw'][0].reshape(blk['ch_hidden'], 25) for blk in blocks])

    dims = {'cin': in_channels, 'ch_first': ch_first, 'ch_mid': ch_mid,
            'ch_hidden': ch_hidden, 'cout': out_channels}
    return {'n': n, 'dims': dims,
            'wslab': jnp.asarray(wslab), 'woffs': woffs,
            'bslab': jnp.asarray(bslab), 'boffs': boffs,
            'dw_w': dw_w,
            'conv1': conv1, 'conv2': conv2, 'blocks': blocks, 'conv3': conv3}


# ----------------------------------------------------------------------------
# Pure-JAX reference (XLA convolutions, f32) for the silent correctness check
# ----------------------------------------------------------------------------
def _conv_ref(x, w, b, groups=1):
    y = lax.conv_general_dilated(
        x, w, window_strides=(1, 1), padding='SAME',
        dimension_numbers=('NCHW', 'OIHW', 'NCHW'),
        feature_group_count=groups, precision=lax.Precision.HIGHEST)
    return y + b.reshape(1, -1, 1, 1)


def _silu_ref(v):
    return v * (1.0 / (1.0 + jnp.exp(-v)))


def depth_gfpn_ref(x, params):
    y1 = _silu_ref(_conv_ref(x, *params['conv1']))
    y2 = _silu_ref(_conv_ref(x, *params['conv2']))
    mid = [y1]
    for blk in params['blocks']:
        t = _silu_ref(_conv_ref(y2, *blk['c2']))
        t = jnp.maximum(_conv_ref(t, *blk['dw'], groups=blk['ch_hidden']), 0.0)
        t = jnp.maximum(_conv_ref(t, *blk['pw']), 0.0)
        y2 = y2 + t
        mid.append(y2)
    y = jnp.concatenate(mid, axis=1)
    return _silu_ref(_conv_ref(y, *params['conv3']))


if __name__ == "__main__":
    key = jax.random.PRNGKey(0)
    k_param, k_x = jax.random.split(key)

    N, H, W = 2, 16, 16
    in_channels, out_channels = 16, 16

    params = build_depth_gfpn_params(k_param, in_channels, out_channels,
                                     depth=1.0, hidden_ratio=1.0,
                                     split_ratio=0.5)
    # NCHW input, matching the PyTorch module's layout.
    x = jax.random.normal(k_x, (N, in_channels, H, W), jnp.float32)

    out = jax.block_until_ready(depth_gfpn_pallas(x, params))

    # Silent correctness check against an f32 XLA conv reference.  Tolerance is
    # loosened vs the pure-f32 kernel because the MXU operands are bf16 and the
    # sigmoid uses the EUP approx reciprocal (weights themselves are identical
    # bf16-representable values in both paths).
    ref = jax.block_until_ready(depth_gfpn_ref(x, params))
    assert out.shape == (N, out_channels, H, W)
    assert np.allclose(np.asarray(out), np.asarray(ref), rtol=5e-2, atol=5e-2)

    print("KERNEL_OK")
</pallas_src>

<mosaic_0001>
module attributes {stable_mosaic.version = 11 : i64} {
  func.func @_depth_csp_kernel(%arg0: i32, %arg1: memref<17x512xf32, #tpu.memory_space<vmem>>, %arg2: memref<9x512xf32, #tpu.memory_space<vmem>>, %arg3: memref<80x128xf32, #tpu.memory_space<vmem>>, %arg4: memref<64x1xf32, #tpu.memory_space<vmem>>, %arg5: memref<75x8x512xf32, #tpu.memory_space<vmem>>, %arg6: memref<16x512xf32, #tpu.memory_space<vmem>>) attributes {dimension_semantics = [#tpu.dimension_semantics<parallel>], iteration_bounds = array<i64: 1>, scalar_prefetch = 0 : i64, scratch_operands = 0 : i64, tpu.core_type = #tpu.core_type<tc>, window_params = [{transform_indices = @transform_0, window_bounds = array<i64: 17, 512>}, {pipeline_mode = #tpu.pipeline_mode<synchronous>, transform_indices = @transform_1, window_bounds = array<i64: 9, 512>}, {pipeline_mode = #tpu.pipeline_mode<synchronous>, transform_indices = @transform_2, window_bounds = array<i64: 80, 128>}, {pipeline_mode = #tpu.pipeline_mode<synchronous>, transform_indices = @transform_3, window_bounds = array<i64: 64, 1>}, {pipeline_mode = #tpu.pipeline_mode<synchronous>, transform_indices = @transform_4, window_bounds = array<i64: 75, 8, 512>}, {transform_indices = @transform_5, window_bounds = array<i64: 16, 512>}]} {
    %c0 = arith.constant 0 : index
    %c0_0 = arith.constant 0 : index
    %0 = vector.load %arg2[%c0, %c0_0] : memref<9x512xf32, #tpu.memory_space<vmem>>, vector<9x512xf32>
    %c0_1 = arith.constant 0 : index
    %c0_2 = arith.constant 0 : index
    %1 = vector.load %arg1[%c0_1, %c0_2] : memref<17x512xf32, #tpu.memory_space<vmem>>, vector<17x512xf32>
    %c0_3 = arith.constant 0 : index
    %c0_4 = arith.constant 0 : index
    %2 = vector.load %arg3[%c0_3, %c0_4] : memref<80x128xf32, #tpu.memory_space<vmem>>, vector<16x17xf32>
    %3 = arith.truncf %2 : vector<16x17xf32> to vector<16x17xbf16>
    %4 = arith.truncf %1 : vector<17x512xf32> to vector<17x512xbf16>
    %cst = arith.constant dense<0.000000e+00> : vector<16x512xf32>
    %5 = tpu.matmul %3, %4, %cst {dimension_numbers = #tpu.dot_dimension_numbers<[1], [0], [0], [1], [0, 0, 1, 1], [], []>} : vector<16x17xbf16>, vector<17x512xbf16>, vector<16x512xf32> -> vector<16x512xf32>
    %cst_5 = arith.constant 0.000000e+00 : f32
    %6 = vector.broadcast %cst_5 : f32 to vector<16x512xf32>
    %7 = arith.subf %6, %5 : vector<16x512xf32>
    %8 = math.exp %7 : vector<16x512xf32>
    %cst_6 = arith.constant 1.000000e+00 : f32
    %9 = vector.broadcast %cst_6 : f32 to vector<16x512xf32>
    %10 = arith.addf %9, %8 : vector<16x512xf32>
    %11 = tpu.reciprocal %10 {approx = true} : vector<16x512xf32> -> vector<16x512xf32>
    %12 = arith.mulf %5, %11 : vector<16x512xf32>
    %13 = vector.extract_strided_slice %12 {offsets = [0, 0], sizes = [8, 512], strides = [1, 1]} : vector<16x512xf32> to vector<8x512xf32>
    %14 = vector.extract_strided_slice %12 {offsets = [8, 0], sizes = [8, 512], strides = [1, 1]} : vector<16x512xf32> to vector<8x512xf32>
    %c17_i32 = arith.constant 17 : i32
    %15 = tpu.dynamic_rotate %14 by %c17_i32 dim 1 : vector<8x512xf32>, i32 -> vector<8x512xf32>
    %16 = vector.extract_strided_slice %0 {offsets = [0, 0], sizes = [1, 512], strides = [1, 1]} : vector<9x512xf32> to vector<1x512xf32>
    %17 = vector.broadcast %16 : vector<1x512xf32> to vector<8x512xf32>
    %18 = arith.mulf %15, %17 : vector<8x512xf32>
    %c16_i32 = arith.constant 16 : i32
    %19 = tpu.dynamic_rotate %14 by %c16_i32 dim 1 : vector<8x512xf32>, i32 -> vector<8x512xf32>
    %20 = vector.extract_strided_slice %0 {offsets = [1, 0], sizes = [1, 512], strides = [1, 1]} : vector<9x512xf32> to vector<1x512xf32>
    %21 = vector.broadcast %20 : vector<1x512xf32> to vector<8x512xf32>
    %22 = arith.mulf %19, %21 : vector<8x512xf32>
    %c15_i32 = arith.constant 15 : i32
    %23 = tpu.dynamic_rotate %14 by %c15_i32 dim 1 : vector<8x512xf32>, i32 -> vector<8x512xf32>
    %24 = vector.extract_strided_slice %0 {offsets = [2, 0], sizes = [1, 512], strides = [1, 1]} : vector<9x512xf32> to vector<1x512xf32>
    %25 = vector.broadcast %24 : vector<1x512xf32> to vector<8x512xf32>
    %26 = arith.mulf %23, %25 : vector<8x512xf32>
    %c1_i32 = arith.constant 1 : i32
    %27 = tpu.dynamic_rotate %14 by %c1_i32 dim 1 : vector<8x512xf32>, i32 -> vector<8x512xf32>
    %28 = vector.extract_strided_slice %0 {offsets = [3, 0], sizes = [1, 512], strides = [1, 1]} : vector<9x512xf32> to vector<1x512xf32>
    %29 = vector.broadcast %28 : vector<1x512xf32> to vector<8x512xf32>
    %30 = arith.mulf %27, %29 : vector<8x512xf32>
    %c511_i32 = arith.constant 511 : i32
    %31 = tpu.dynamic_rotate %14 by %c511_i32 dim 1 : vector<8x512xf32>, i32 -> vector<8x512xf32>
    %32 = vector.extract_strided_slice %0 {offsets = [5, 0], sizes = [1, 512], strides = [1, 1]} : vector<9x512xf32> to vector<1x512xf32>
    %33 = vector.broadcast %32 : vector<1x512xf32> to vector<8x512xf32>
    %34 = arith.mulf %31, %33 : vector<8x512xf32>
    %c497_i32 = arith.constant 497 : i32
    %35 = tpu.dynamic_rotate %14 by %c497_i32 dim 1 : vector<8x512xf32>, i32 -> vector<8x512xf32>
    %36 = vector.extract_strided_slice %0 {offsets = [6, 0], sizes = [1, 512], strides = [1, 1]} : vector<9x512xf32> to vector<1x512xf32>
    %37 = vector.broadcast %36 : vector<1x512xf32> to vector<8x512xf32>
    %38 = arith.mulf %35, %37 : vector<8x512xf32>
    %c496_i32 = arith.constant 496 : i32
    %39 = tpu.dynamic_rotate %14 by %c496_i32 dim 1 : vector<8x512xf32>, i32 -> vector<8x512xf32>
    %40 = vector.extract_strided_slice %0 {offsets = [7, 0], sizes = [1, 512], strides = [1, 1]} : vector<9x512xf32> to vector<1x512xf32>
    %41 = vector.broadcast %40 : vector<1x512xf32> to vector<8x512xf32>
    %42 = arith.mulf %39, %41 : vector<8x512xf32>
    %c495_i32 = arith.constant 495 : i32
    %43 = tpu.dynamic_rotate %14 by %c495_i32 dim 1 : vector<8x512xf32>, i32 -> vector<8x512xf32>
    %44 = vector.extract_strided_slice %0 {offsets = [8, 0], sizes = [1, 512], strides = [1, 1]} : vector<9x512xf32> to vector<1x512xf32>
    %45 = vector.broadcast %44 : vector<1x512xf32> to vector<8x512xf32>
    %46 = arith.mulf %43, %45 : vector<8x512xf32>
    %47 = vector.extract_strided_slice %0 {offsets = [4, 0], sizes = [1, 512], strides = [1, 1]} : vector<9x512xf32> to vector<1x512xf32>
    %48 = tpu.concatenate %18, %22, %26, %30, %14, %34, %38, %42, %46, %47 in 0 : vector<8x512xf32>, vector<8x512xf32>, vector<8x512xf32>, vector<8x512xf32>, vector<8x512xf32>, vector<8x512xf32>, vector<8x512xf32>, vector<8x512xf32>, vector<8x512xf32>, vector<1x512xf32> -> vector<73x512xf32>
    %c16 = arith.constant 16 : index
    %c0_7 = arith.constant 0 : index
    %49 = vector.load %arg3[%c16, %c0_7] : memref<80x128xf32, #tpu.memory_space<vmem>>, vector<8x73xf32>
    %50 = arith.truncf %49 : vector<8x73xf32> to vector<8x73xbf16>
    %51 = arith.truncf %48 : vector<73x512xf32> to vector<73x512xbf16>
    %cst_8 = arith.constant dense<0.000000e+00> : vector<8x512xf32>
    %52 = tpu.matmul %50, %51, %cst_8 {dimension_numbers = #tpu.dot_dimension_numbers<[1], [0], [0], [1], [0, 0, 1, 1], [], []>} : vector<8x73xbf16>, vector<73x512xbf16>, vector<8x512xf32> -> vector<8x512xf32>
    %cst_9 = arith.constant 0.000000e+00 : f32
    %53 = vector.broadcast %cst_9 : f32 to vector<8x512xf32>
    %54 = arith.subf %53, %52 : vector<8x512xf32>
    %55 = math.exp %54 : vector<8x512xf32>
    %cst_10 = arith.constant 1.000000e+00 : f32
    %56 = vector.broadcast %cst_10 : f32 to vector<8x512xf32>
    %57 = arith.addf %56, %55 : vector<8x512xf32>
    %58 = tpu.reciprocal %57 {approx = true} : vector<8x512xf32> -> vector<8x512xf32>
    %59 = arith.mulf %52, %58 : vector<8x512xf32>
    %c0_11 = arith.constant 0 : index
    %c0_12 = arith.constant 0 : index
    %c0_13 = arith.constant 0 : index
    %60 = vector.load %arg5[%c0_11, %c0_12, %c0_13] : memref<75x8x512xf32, #tpu.memory_space<vmem>>, vector<1x8x512xf32>
    %61 = vector.shape_cast %60 : vector<1x8x512xf32> to vector<8x512xf32>
    %c34_i32 = arith.constant 34 : i32
    %62 = tpu.dynamic_rotate %59 by %c34_i32 dim 1 : vector<8x512xf32>, i32 -> vector<8x512xf32>
    %63 = arith.mulf %61, %62 : vector<8x512xf32>
    %c1 = arith.constant 1 : index
    %c0_14 = arith.constant 0 : index
    %c0_15 = arith.constant 0 : index
    %64 = vector.load %arg5[%c1, %c0_14, %c0_15] : memref<75x8x512xf32, #tpu.memory_space<vmem>>, vector<1x8x512xf32>
    %65 = vector.shape_cast %64 : vector<1x8x512xf32> to vector<8x512xf32>
    %c33_i32 = arith.constant 33 : i32
    %66 = tpu.dynamic_rotate %59 by %c33_i32 dim 1 : vector<8x512xf32>, i32 -> vector<8x512xf32>
    %67 = arith.mulf %65, %66 : vector<8x512xf32>
    %68 = arith.addf %63, %67 : vector<8x512xf32>
    %c2 = arith.constant 2 : index
    %c0_16 = arith.constant 0 : index
    %c0_17 = arith.constant 0 : index
    %69 = vector.load %arg5[%c2, %c0_16, %c0_17] : memref<75x8x512xf32, #tpu.memory_space<vmem>>, vector<1x8x512xf32>
    %70 = vector.shape_cast %69 : vector<1x8x512xf32> to vector<8x512xf32>
    %c32_i32 = arith.constant 32 : i32
    %71 = tpu.dynamic_rotate %59 by %c32_i32 dim 1 : vector<8x512xf32>, i32 -> vector<8x512xf32>
    %72 = arith.mulf %70, %71 : vector<8x512xf32>
    %73 = arith.addf %68, %72 : vector<8x512xf32>
    %c3 = arith.constant 3 : index
    %c0_18 = arith.constant 0 : index
    %c0_19 = arith.constant 0 : index
    %74 = vector.load %arg5[%c3, %c0_18, %c0_19] : memref<75x8x512xf32, #tpu.memory_space<vmem>>, vector<1x8x512xf32>
    %75 = vector.shape_cast %74 : vector<1x8x512xf32> to vector<8x512xf32>
    %c31_i32 = arith.constant 31 : i32
    %76 = tpu.dynamic_rotate %59 by %c31_i32 dim 1 : vector<8x512xf32>, i32 -> vector<8x512xf32>
    %77 = arith.mulf %75, %76 : vector<8x512xf32>
    %78 = arith.addf %73, %77 : vector<8x512xf32>
    %c4 = arith.constant 4 : index
    %c0_20 = arith.constant 0 : index
    %c0_21 = arith.constant 0 : index
    %79 = vector.load %arg5[%c4, %c0_20, %c0_21] : memref<75x8x512xf32, #tpu.memory_space<vmem>>, vector<1x8x512xf32>
    %80 = vector.shape_cast %79 : vector<1x8x512xf32> to vector<8x512xf32>
    %c30_i32 = arith.constant 30 : i32
    %81 = tpu.dynamic_rotate %59 by %c30_i32 dim 1 : vector<8x512xf32>, i32 -> vector<8x512xf32>
    %82 = arith.mulf %80, %81 : vector<8x512xf32>
    %83 = arith.addf %78, %82 : vector<8x512xf32>
    %c5 = arith.constant 5 : index
    %c0_22 = arith.constant 0 : index
    %c0_23 = arith.constant 0 : index
    %84 = vector.load %arg5[%c5, %c0_22, %c0_23] : memref<75x8x512xf32, #tpu.memory_space<vmem>>, vector<1x8x512xf32>
    %85 = vector.shape_cast %84 : vector<1x8x512xf32> to vector<8x512xf32>
    %c18_i32 = arith.constant 18 : i32
    %86 = tpu.dynamic_rotate %59 by %c18_i32 dim 1 : vector<8x512xf32>, i32 -> vector<8x512xf32>
    %87 = arith.mulf %85, %86 : vector<8x512xf32>
    %88 = arith.addf %83, %87 : vector<8x512xf32>
    %c6 = arith.constant 6 : index
    %c0_24 = arith.constant 0 : index
    %c0_25 = arith.constant 0 : index
    %89 = vector.load %arg5[%c6, %c0_24, %c0_25] : memref<75x8x512xf32, #tpu.memory_space<vmem>>, vector<1x8x512xf32>
    %90 = vector.shape_cast %89 : vector<1x8x512xf32> to vector<8x512xf32>
    %c17_i32_26 = arith.constant 17 : i32
    %91 = tpu.dynamic_rotate %59 by %c17_i32_26 dim 1 : vector<8x512xf32>, i32 -> vector<8x512xf32>
    %92 = arith.mulf %90, %91 : vector<8x512xf32>
    %93 = arith.addf %88, %92 : vector<8x512xf32>
    %c7 = arith.constant 7 : index
    %c0_27 = arith.constant 0 : index
    %c0_28 = arith.constant 0 : index
    %94 = vector.load %arg5[%c7, %c0_27, %c0_28] : memref<75x8x512xf32, #tpu.memory_space<vmem>>, vector<1x8x512xf32>
    %95 = vector.shape_cast %94 : vector<1x8x512xf32> to vector<8x512xf32>
    %c16_i32_29 = arith.constant 16 : i32
    %96 = tpu.dynamic_rotate %59 by %c16_i32_29 dim 1 : vector<8x512xf32>, i32 -> vector<8x512xf32>
    %97 = arith.mulf %95, %96 : vector<8x512xf32>
    %98 = arith.addf %93, %97 : vector<8x512xf32>
    %c8 = arith.constant 8 : index
    %c0_30 = arith.constant 0 : index
    %c0_31 = arith.constant 0 : index
    %99 = vector.load %arg5[%c8, %c0_30, %c0_31] : memref<75x8x512xf32, #tpu.memory_space<vmem>>, vector<1x8x512xf32>
    %100 = vector.shape_cast %99 : vector<1x8x512xf32> to vector<8x512xf32>
    %c15_i32_32 = arith.constant 15 : i32
    %101 = tpu.dynamic_rotate %59 by %c15_i32_32 dim 1 : vector<8x512xf32>, i32 -> vector<8x512xf32>
    %102 = arith.mulf %100, %101 : vector<8x512xf32>
    %103 = arith.addf %98, %102 : vector<8x512xf32>
    %c9 = arith.constant 9 : index
    %c0_33 = arith.constant 0 : index
    %c0_34 = arith.constant 0 : index
    %104 = vector.load %arg5[%c9, %c0_33, %c0_34] : memref<75x8x512xf32, #tpu.memory_space<vmem>>, vector<1x8x512xf32>
    %105 = vector.shape_cast %104 : vector<1x8x512xf32> to vector<8x512xf32>
    %c14_i32 = arith.constant 14 : i32
    %106 = tpu.dynamic_rotate %59 by %c14_i32 dim 1 : vector<8x512xf32>, i32 -> vector<8x512xf32>
    %107 = arith.mulf %105, %106 : vector<8x512xf32>
    %108 = arith.addf %103, %107 : vector<8x512xf32>
    %c10 = arith.constant 10 : index
    %c0_35 = arith.constant 0 : index
    %c0_36 = arith.constant 0 : index
    %109 = vector.load %arg5[%c10, %c0_35, %c0_36] : memref<75x8x512xf32, #tpu.memory_space<vmem>>, vector<1x8x512xf32>
    %110 = vector.shape_cast %109 : vector<1x8x512xf32> to vector<8x512xf32>
    %c2_i32 = arith.constant 2 : i32
    %111 = tpu.dynamic_rotate %59 by %c2_i32 dim 1 : vector<8x512xf32>, i32 -> vector<8x512xf32>
    %112 = arith.mulf %110, %111 : vector<8x512xf32>
    %113 = arith.addf %108, %112 : vector<8x512xf32>
    %c11 = arith.constant 11 : index
    %c0_37 = arith.constant 0 : index
    %c0_38 = arith.constant 0 : index
    %114 = vector.load %arg5[%c11, %c0_37, %c0_38] : memref<75x8x512xf32, #tpu.memory_space<vmem>>, vector<1x8x512xf32>
    %115 = vector.shape_cast %114 : vector<1x8x512xf32> to vector<8x512xf32>
    %c1_i32_39 = arith.constant 1 : i32
    %116 = tpu.dynamic_rotate %59 by %c1_i32_39 dim 1 : vector<8x512xf32>, i32 -> vector<8x512xf32>
    %117 = arith.mulf %115, %116 : vector<8x512xf32>
    %118 = arith.addf %113, %117 : vector<8x512xf32>
    %c12 = arith.constant 12 : index
    %c0_40 = arith.constant 0 : index
    %c0_41 = arith.constant 0 : index
    %119 = vector.load %arg5[%c12, %c0_40, %c0_41] : memref<75x8x512xf32, #tpu.memory_space<vmem>>, vector<1x8x512xf32>
    %120 = vector.shape_cast %119 : vector<1x8x512xf32> to vector<8x512xf32>
    %121 = arith.mulf %120, %59 : vector<8x512xf32>
    %122 = arith.addf %118, %121 : vector<8x512xf32>
    %c13 = arith.constant 13 : index
    %c0_42 = arith.constant 0 : index
    %c0_43 = arith.constant 0 : index
    %123 = vector.load %arg5[%c13, %c0_42, %c0_43] : memref<75x8x512xf32, #tpu.memory_space<vmem>>, vector<1x8x512xf32>
    %124 = vector.shape_cast %123 : vector<1x8x512xf32> to vector<8x512xf32>
    %c511_i32_44 = arith.constant 511 : i32
    %125 = tpu.dynamic_rotate %59 by %c511_i32_44 dim 1 : vector<8x512xf32>, i32 -> vector<8x512xf32>
    %126 = arith.mulf %124, %125 : vector<8x512xf32>
    %127 = arith.addf %122, %126 : vector<8x512xf32>
    %c14 = arith.constant 14 : index
    %c0_45 = arith.constant 0 : index
    %c0_46 = arith.constant 0 : index
    %128 = vector.load %arg5[%c14, %c0_45, %c0_46] : memref<75x8x512xf32, #tpu.memory_space<vmem>>, vector<1x8x512xf32>
    %129 = vector.shape_cast %128 : vector<1x8x512xf32> to vector<8x512xf32>
    %c510_i32 = arith.constant 510 : i32
    %130 = tpu.dynamic_rotate %59 by %c510_i32 dim 1 : vector<8x512xf32>, i32 -> vector<8x512xf32>
    %131 = arith.mulf %129, %130 : vector<8x512xf32>
    %132 = arith.addf %127, %131 : vector<8x512xf32>
    %c15 = arith.constant 15 : index
    %c0_47 = arith.constant 0 : index
    %c0_48 = arith.constant 0 : index
    %133 = vector.load %arg5[%c15, %c0_47, %c0_48] : memref<75x8x512xf32, #tpu.memory_space<vmem>>, vector<1x8x512xf32>
    %134 = vector.shape_cast %133 : vector<1x8x512xf32> to vector<8x512xf32>
    %c498_i32 = arith.constant 498 : i32
    %135 = tpu.dynamic_rotate %59 by %c498_i32 dim 1 : vector<8x512xf32>, i32 -> vector<8x512xf32>
    %136 = arith.mulf %134, %135 : vector<8x512xf32>
    %137 = arith.addf %132, %136 : vector<8x512xf32>
    %c16_49 = arith.constant 16 : index
    %c0_50 = arith.constant 0 : index
    %c0_51 = arith.constant 0 : index
    %138 = vector.load %arg5[%c16_49, %c0_50, %c0_51] : memref<75x8x512xf32, #tpu.memory_space<vmem>>, vector<1x8x512xf32>
    %139 = vector.shape_cast %138 : vector<1x8x512xf32> to vector<8x512xf32>
    %c497_i32_52 = arith.constant 497 : i32
    %140 = tpu.dynamic_rotate %59 by %c497_i32_52 dim 1 : vector<8x512xf32>, i32 -> vector<8x512xf32>
    %141 = arith.mulf %139, %140 : vector<8x512xf32>
    %142 = arith.addf %137, %141 : vector<8x512xf32>
    %c17 = arith.constant 17 : index
    %c0_53 = arith.constant 0 : index
    %c0_54 = arith.constant 0 : index
    %143 = vector.load %arg5[%c17, %c0_53, %c0_54] : memref<75x8x512xf32, #tpu.memory_space<vmem>>, vector<1x8x512xf32>
    %144 = vector.shape_cast %143 : vector<1x8x512xf32> to vector<8x512xf32>
    %c496_i32_55 = arith.constant 496 : i32
    %145 = tpu.dynamic_rotate %59 by %c496_i32_55 dim 1 : vector<8x512xf32>, i32 -> vector<8x512xf32>
    %146 = arith.mulf %144, %145 : vector<8x512xf32>
    %147 = arith.addf %142, %146 : vector<8x512xf32>
    %c18 = arith.constant 18 : index
    %c0_56 = arith.constant 0 : index
    %c0_57 = arith.constant 0 : index
    %148 = vector.load %arg5[%c18, %c0_56, %c0_57] : memref<75x8x512xf32, #tpu.memory_space<vmem>>, vector<1x8x512xf32>
    %149 = vector.shape_cast %148 : vector<1x8x512xf32> to vector<8x512xf32>
    %c495_i32_58 = arith.constant 495 : i32
    %150 = tpu.dynamic_rotate %59 by %c495_i32_58 dim 1 : vector<8x512xf32>, i32 -> vector<8x512xf32>
    %151 = arith.mulf %149, %150 : vector<8x512xf32>
    %152 = arith.addf %147, %151 : vector<8x512xf32>
    %c19 = arith.constant 19 : index
    %c0_59 = arith.constant 0 : index
    %c0_60 = arith.constant 0 : index
    %153 = vector.load %arg5[%c19, %c0_59, %c0_60] : memref<75x8x512xf32, #tpu.memory_space<vmem>>, vector<1x8x512xf32>
    %154 = vector.shape_cast %153 : vector<1x8x512xf32> to vector<8x512xf32>
    %c494_i32 = arith.constant 494 : i32
    %155 = tpu.dynamic_rotate %59 by %c494_i32 dim 1 : vector<8x512xf32>, i32 -> vector<8x512xf32>
    %156 = arith.mulf %154, %155 : vector<8x512xf32>
    %157 = arith.addf %152, %156 : vector<8x512xf32>
    %c20 = arith.constant 20 : index
    %c0_61 = arith.constant 0 : index
    %c0_62 = arith.constant 0 : index
    %158 = vector.load %arg5[%c20, %c0_61, %c0_62] : memref<75x8x512xf32, #tpu.memory_space<vmem>>, vector<1x8x512xf32>
    %159 = vector.shape_cast %158 : vector<1x8x512xf32> to vector<8x512xf32>
    %c482_i32 = arith.constant 482 : i32
    %160 = tpu.dynamic_rotate %59 by %c482_i32 dim 1 : vector<8x512xf32>, i32 -> vector<8x512xf32>
    %161 = arith.mulf %159, %160 : vector<8x512xf32>
    %162 = arith.addf %157, %161 : vector<8x512xf32>
    %c21 = arith.constant 21 : index
    %c0_63 = arith.constant 0 : index
    %c0_64 = arith.constant 0 : index
    %163 = vector.load %arg5[%c21, %c0_63, %c0_64] : memref<75x8x512xf32, #tpu.memory_space<vmem>>, vector<1x8x512xf32>
    %164 = vector.shape_cast %163 : vector<1x8x512xf32> to vector<8x512xf32>
    %c481_i32 = arith.constant 481 : i32
    %165 = tpu.dynamic_rotate %59 by %c481_i32 dim 1 : vector<8x512xf32>, i32 -> vector<8x512xf32>
    %166 = arith.mulf %164, %165 : vector<8x512xf32>
    %167 = arith.addf %162, %166 : vector<8x512xf32>
    %c22 = arith.constant 22 : index
    %c0_65 = arith.constant 0 : index
    %c0_66 = arith.constant 0 : index
    %168 = vector.load %arg5[%c22, %c0_65, %c0_66] : memref<75x8x512xf32, #tpu.memory_space<vmem>>, vector<1x8x512xf32>
    %169 = vector.shape_cast %168 : vector<1x8x512xf32> to vector<8x512xf32>
    %c480_i32 = arith.constant 480 : i32
    %170 = tpu.dynamic_rotate %59 by %c480_i32 dim 1 : vector<8x512xf32>, i32 -> vector<8x512xf32>
    %171 = arith.mulf %169, %170 : vector<8x512xf32>
    %172 = arith.addf %167, %171 : vector<8x512xf32>
    %c23 = arith.constant 23 : index
    %c0_67 = arith.constant 0 : index
    %c0_68 = arith.constant 0 : index
    %173 = vector.load %arg5[%c23, %c0_67, %c0_68] : memref<75x8x512xf32, #tpu.memory_space<vmem>>, vector<1x8x512xf32>
    %174 = vector.shape_cast %173 : vector<1x8x512xf32> to vector<8x512xf32>
    %c479_i32 = arith.constant 479 : i32
    %175 = tpu.dynamic_rotate %59 by %c479_i32 dim 1 : vector<8x512xf32>, i32 -> vector<8x512xf32>
    %176 = arith.mulf %174, %175 : vector<8x512xf32>
    %177 = arith.addf %172, %176 : vector<8x512xf32>
    %c24 = arith.constant 24 : index
    %c0_69 = arith.constant 0 : index
    %c0_70 = arith.constant 0 : index
    %178 = vector.load %arg5[%c24, %c0_69, %c0_70] : memref<75x8x512xf32, #tpu.memory_space<vmem>>, vector<1x8x512xf32>
    %179 = vector.shape_cast %178 : vector<1x8x512xf32> to vector<8x512xf32>
    %c478_i32 = arith.constant 478 : i32
    %180 = tpu.dynamic_rotate %59 by %c478_i32 dim 1 : vector<8x512xf32>, i32 -> vector<8x512xf32>
    %181 = arith.mulf %179, %180 : vector<8x512xf32>
    %182 = arith.addf %177, %181 : vector<8x512xf32>
    %c0_71 = arith.constant 0 : index
    %c0_72 = arith.constant 0 : index
    %183 = vector.load %arg4[%c0_71, %c0_72] : memref<64x1xf32, #tpu.memory_space<vmem>>, vector<8x1xf32>
    %184 = vector.broadcast %183 : vector<8x1xf32> to vector<8x512xf32>
    %185 = arith.addf %182, %184 : vector<8x512xf32>
    %cst_73 = arith.constant 0.000000e+00 : f32
    %186 = vector.broadcast %cst_73 : f32 to vector<8x512xf32>
    %187 = arith.maximumf %185, %186 : vector<8x512xf32>
    %c24_74 = arith.constant 24 : index
    %c0_75 = arith.constant 0 : index
    %188 = vector.load %arg3[%c24_74, %c0_75] : memref<80x128xf32, #tpu.memory_space<vmem>>, vector<8x8xf32>
    %189 = arith.truncf %188 : vector<8x8xf32> to vector<8x8xbf16>
    %190 = arith.truncf %187 : vector<8x512xf32> to vector<8x512xbf16>
    %cst_76 = arith.constant dense<0.000000e+00> : vector<8x512xf32>
    %191 = tpu.matmul %189, %190, %cst_76 {dimension_numbers = #tpu.dot_dimension_numbers<[1], [0], [0], [1], [0, 0, 1, 1], [], []>} : vector<8x8xbf16>, vector<8x512xbf16>, vector<8x512xf32> -> vector<8x512xf32>
    %c8_77 = arith.constant 8 : index
    %c0_78 = arith.constant 0 : index
    %192 = vector.load %arg4[%c8_77, %c0_78] : memref<64x1xf32, #tpu.memory_space<vmem>>, vector<8x1xf32>
    %193 = vector.broadcast %192 : vector<8x1xf32> to vector<8x512xf32>
    %194 = arith.addf %191, %193 : vector<8x512xf32>
    %cst_79 = arith.constant 0.000000e+00 : f32
    %195 = vector.broadcast %cst_79 : f32 to vector<8x512xf32>
    %196 = arith.maximumf %194, %195 : vector<8x512xf32>
    %197 = arith.addf %14, %196 : vector<8x512xf32>
    %c17_i32_80 = arith.constant 17 : i32
    %198 = tpu.dynamic_rotate %197 by %c17_i32_80 dim 1 : vector<8x512xf32>, i32 -> vector<8x512xf32>
    %199 = vector.extract_strided_slice %0 {offsets = [0, 0], sizes = [1, 512], strides = [1, 1]} : vector<9x512xf32> to vector<1x512xf32>
    %200 = vector.broadcast %199 : vector<1x512xf32> to vector<8x512xf32>
    %201 = arith.mulf %198, %200 : vector<8x512xf32>
    %c16_i32_81 = arith.constant 16 : i32
    %202 = tpu.dynamic_rotate %197 by %c16_i32_81 dim 1 : vector<8x512xf32>, i32 -> vector<8x512xf32>
    %203 = vector.extract_strided_slice %0 {offsets = [1, 0], sizes = [1, 512], strides = [1, 1]} : vector<9x512xf32> to vector<1x512xf32>
    %204 = vector.broadcast %203 : vector<1x512xf32> to vector<8x512xf32>
    %205 = arith.mulf %202, %204 : vector<8x512xf32>
    %c15_i32_82 = arith.constant 15 : i32
    %206 = tpu.dynamic_rotate %197 by %c15_i32_82 dim 1 : vector<8x512xf32>, i32 -> vector<8x512xf32>
    %207 = vector.extract_strided_slice %0 {offsets = [2, 0], sizes = [1, 512], strides = [1, 1]} : vector<9x512xf32> to vector<1x512xf32>
    %208 = vector.broadcast %207 : vector<1x512xf32> to vector<8x512xf32>
    %209 = arith.mulf %206, %208 : vector<8x512xf32>
    %c1_i32_83 = arith.constant 1 : i32
    %210 = tpu.dynamic_rotate %197 by %c1_i32_83 dim 1 : vector<8x512xf32>, i32 -> vector<8x512xf32>
    %211 = vector.extract_strided_slice %0 {offsets = [3, 0], sizes = [1, 512], strides = [1, 1]} : vector<9x512xf32> to vector<1x512xf32>
    %212 = vector.broadcast %211 : vector<1x512xf32> to vector<8x512xf32>
    %213 = arith.mulf %210, %212 : vector<8x512xf32>
    %c511_i32_84 = arith.constant 511 : i32
    %214 = tpu.dynamic_rotate %197 by %c511_i32_84 dim 1 : vector<8x512xf32>, i32 -> vector<8x512xf32>
    %215 = vector.extract_strided_slice %0 {offsets = [5, 0], sizes = [1, 512], strides = [1, 1]} : vector<9x512xf32> to vector<1x512xf32>
    %216 = vector.broadcast %215 : vector<1x512xf32> to vector<8x512xf32>
    %217 = arith.mulf %214, %216 : vector<8x512xf32>
    %c497_i32_85 = arith.constant 497 : i32
    %218 = tpu.dynamic_rotate %197 by %c497_i32_85 dim 1 : vector<8x512xf32>, i32 -> vector<8x512xf32>
    %219 = vector.extract_strided_slice %0 {offsets = [6, 0], sizes = [1, 512], strides = [1, 1]} : vector<9x512xf32> to vector<1x512xf32>
    %220 = vector.broadcast %219 : vector<1x512xf32> to vector<8x512xf32>
    %221 = arith.mulf %218, %220 : vector<8x512xf32>
    %c496_i32_86 = arith.constant 496 : i32
    %222 = tpu.dynamic_rotate %197 by %c496_i32_86 dim 1 : vector<8x512xf32>, i32 -> vector<8x512xf32>
    %223 = vector.extract_strided_slice %0 {offsets = [7, 0], sizes = [1, 512], strides = [1, 1]} : vector<9x512xf32> to vector<1x512xf32>
    %224 = vector.broadcast %223 : vector<1x512xf32> to vector<8x512xf32>
    %225 = arith.mulf %222, %224 : vector<8x512xf32>
    %c495_i32_87 = arith.constant 495 : i32
    %226 = tpu.dynamic_rotate %197 by %c495_i32_87 dim 1 : vector<8x512xf32>, i32 -> vector<8x512xf32>
    %227 = vector.extract_strided_slice %0 {offsets = [8, 0], sizes = [1, 512], strides = [1, 1]} : vector<9x512xf32> to vector<1x512xf32>
    %228 = vector.broadcast %227 : vector<1x512xf32> to vector<8x512xf32>
    %229 = arith.mulf %226, %228 : vector<8x512xf32>
    %230 = vector.extract_strided_slice %0 {offsets = [4, 0], sizes = [1, 512], strides = [1, 1]} : vector<9x512xf32> to vector<1x512xf32>
    %231 = tpu.concatenate %201, %205, %209, %213, %197, %217, %221, %225, %229, %230 in 0 : vector<8x512xf32>, vector<8x512xf32>, vector<8x512xf32>, vector<8x512xf32>, vector<8x512xf32>, vector<8x512xf32>, vector<8x512xf32>, vector<8x512xf32>, vector<8x512xf32>, vector<1x512xf32> -> vector<73x512xf32>
    %c32 = arith.constant 32 : index
    %c0_88 = arith.constant 0 : index
    %232 = vector.load %arg3[%c32, %c0_88] : memref<80x128xf32, #tpu.memory_space<vmem>>, vector<8x73xf32>
    %233 = arith.truncf %232 : vector<8x73xf32> to vector<8x73xbf16>
    %234 = arith.truncf %231 : vector<73x512xf32> to vector<73x512xbf16>
    %cst_89 = arith.constant dense<0.000000e+00> : vector<8x512xf32>
    %235 = tpu.matmul %233, %234, %cst_89 {dimension_numbers = #tpu.dot_dimension_numbers<[1], [0], [0], [1], [0, 0, 1, 1], [], []>} : vector<8x73xbf16>, vector<73x512xbf16>, vector<8x512xf32> -> vector<8x512xf32>
    %cst_90 = arith.constant 0.000000e+00 : f32
    %236 = vector.broadcast %cst_90 : f32 to vector<8x512xf32>
    %237 = arith.subf %236, %235 : vector<8x512xf32>
    %238 = math.exp %237 : vector<8x512xf32>
    %cst_91 = arith.constant 1.000000e+00 : f32
    %239 = vector.broadcast %cst_91 : f32 to vector<8x512xf32>
    %240 = arith.addf %239, %238 : vector<8x512xf32>
    %241 = tpu.reciprocal %240 {approx = true} : vector<8x512xf32> -> vector<8x512xf32>
    %242 = arith.mulf %235, %241 : vector<8x512xf32>
    %c25 = arith.constant 25 : index
    %c0_92 = arith.constant 0 : index
    %c0_93 = arith.constant 0 : index
    %243 = vector.load %arg5[%c25, %c0_92, %c0_93] : memref<75x8x512xf32, #tpu.memory_space<vmem>>, vector<1x8x512xf32>
    %244 = vector.shape_cast %243 : vector<1x8x512xf32> to vector<8x512xf32>
    %c34_i32_94 = arith.constant 34 : i32
    %245 = tpu.dynamic_rotate %242 by %c34_i32_94 dim 1 : vector<8x512xf32>, i32 -> vector<8x512xf32>
    %246 = arith.mulf %244, %245 : vector<8x512xf32>
    %c26 = arith.constant 26 : index
    %c0_95 = arith.constant 0 : index
    %c0_96 = arith.constant 0 : index
    %247 = vector.load %arg5[%c26, %c0_95, %c0_96] : memref<75x8x512xf32, #tpu.memory_space<vmem>>, vector<1x8x512xf32>
    %248 = vector.shape_cast %247 : vector<1x8x512xf32> to vector<8x512xf32>
    %c33_i32_97 = arith.constant 33 : i32
    %249 = tpu.dynamic_rotate %242 by %c33_i32_97 dim 1 : vector<8x512xf32>, i32 -> vector<8x512xf32>
    %250 = arith.mulf %248, %249 : vector<8x512xf32>
    %251 = arith.addf %246, %250 : vector<8x512xf32>
    %c27 = arith.constant 27 : index
    %c0_98 = arith.constant 0 : index
    %c0_99 = arith.constant 0 : index
    %252 = vector.load %arg5[%c27, %c0_98, %c0_99] : memref<75x8x512xf32, #tpu.memory_space<vmem>>, vector<1x8x512xf32>
    %253 = vector.shape_cast %252 : vector<1x8x512xf32> to vector<8x512xf32>
    %c32_i32_100 = arith.constant 32 : i32
    %254 = tpu.dynamic_rotate %242 by %c32_i32_100 dim 1 : vector<8x512xf32>, i32 -> vector<8x512xf32>
    %255 = arith.mulf %253, %254 : vector<8x512xf32>
    %256 = arith.addf %251, %255 : vector<8x512xf32>
    %c28 = arith.constant 28 : index
    %c0_101 = arith.constant 0 : index
    %c0_102 = arith.constant 0 : index
    %257 = vector.load %arg5[%c28, %c0_101, %c0_102] : memref<75x8x512xf32, #tpu.memory_space<vmem>>, vector<1x8x512xf32>
    %258 = vector.shape_cast %257 : vector<1x8x512xf32> to vector<8x512xf32>
    %c31_i32_103 = arith.constant 31 : i32
    %259 = tpu.dynamic_rotate %242 by %c31_i32_103 dim 1 : vector<8x512xf32>, i32 -> vector<8x512xf32>
    %260 = arith.mulf %258, %259 : vector<8x512xf32>
    %261 = arith.addf %256, %260 : vector<8x512xf32>
    %c29 = arith.constant 29 : index
    %c0_104 = arith.constant 0 : index
    %c0_105 = arith.constant 0 : index
    %262 = vector.load %arg5[%c29, %c0_104, %c0_105] : memref<75x8x512xf32, #tpu.memory_space<vmem>>, vector<1x8x512xf32>
    %263 = vector.shape_cast %262 : vector<1x8x512xf32> to vector<8x512xf32>
    %c30_i32_106 = arith.constant 30 : i32
    %264 = tpu.dynamic_rotate %242 by %c30_i32_106 dim 1 : vector<8x512xf32>, i32 -> vector<8x512xf32>
    %265 = arith.mulf %263, %264 : vector<8x512xf32>
    %266 = arith.addf %261, %265 : vector<8x512xf32>
    %c30 = arith.constant 30 : index
    %c0_107 = arith.constant 0 : index
    %c0_108 = arith.constant 0 : index
    %267 = vector.load %arg5[%c30, %c0_107, %c0_108] : memref<75x8x512xf32, #tpu.memory_space<vmem>>, vector<1x8x512xf32>
    %268 = vector.shape_cast %267 : vector<1x8x512xf32> to vector<8x512xf32>
    %c18_i32_109 = arith.constant 18 : i32
    %269 = tpu.dynamic_rotate %242 by %c18_i32_109 dim 1 : vector<8x512xf32>, i32 -> vector<8x512xf32>
    %270 = arith.mulf %268, %269 : vector<8x512xf32>
    %271 = arith.addf %266, %270 : vector<8x512xf32>
    %c31 = arith.constant 31 : index
    %c0_110 = arith.constant 0 : index
    %c0_111 = arith.constant 0 : index
    %272 = vector.load %arg5[%c31, %c0_110, %c0_111] : memref<75x8x512xf32, #tpu.memory_space<vmem>>, vector<1x8x512xf32>
    %273 = vector.shape_cast %272 : vector<1x8x512xf32> to vector<8x512xf32>
    %c17_i32_112 = arith.constant 17 : i32
    %274 = tpu.dynamic_rotate %242 by %c17_i32_112 dim 1 : vector<8x512xf32>, i32 -> vector<8x512xf32>
    %275 = arith.mulf %273, %274 : vector<8x512xf32>
    %276 = arith.addf %271, %275 : vector<8x512xf32>
    %c32_113 = arith.constant 32 : index
    %c0_114 = arith.constant 0 : index
    %c0_115 = arith.constant 0 : index
    %277 = vector.load %arg5[%c32_113, %c0_114, %c0_115] : memref<75x8x512xf32, #tpu.memory_space<vmem>>, vector<1x8x512xf32>
    %278 = vector.shape_cast %277 : vector<1x8x512xf32> to vector<8x512xf32>
    %c16_i32_116 = arith.constant 16 : i32
    %279 = tpu.dynamic_rotate %242 by %c16_i32_116 dim 1 : vector<8x512xf32>, i32 -> vector<8x512xf32>
    %280 = arith.mulf %278, %279 : vector<8x512xf32>
    %281 = arith.addf %276, %280 : vector<8x512xf32>
    %c33 = arith.constant 33 : index
    %c0_117 = arith.constant 0 : index
    %c0_118 = arith.constant 0 : index
    %282 = vector.load %arg5[%c33, %c0_117, %c0_118] : memref<75x8x512xf32, #tpu.memory_space<vmem>>, vector<1x8x512xf32>
    %283 = vector.shape_cast %282 : vector<1x8x512xf32> to vector<8x512xf32>
    %c15_i32_119 = arith.constant 15 : i32
    %284 = tpu.dynamic_rotate %242 by %c15_i32_119 dim 1 : vector<8x512xf32>, i32 -> vector<8x512xf32>
    %285 = arith.mulf %283, %284 : vector<8x512xf32>
    %286 = arith.addf %281, %285 : vector<8x512xf32>
    %c34 = arith.constant 34 : index
    %c0_120 = arith.constant 0 : index
    %c0_121 = arith.constant 0 : index
    %287 = vector.load %arg5[%c34, %c0_120, %c0_121] : memref<75x8x512xf32, #tpu.memory_space<vmem>>, vector<1x8x512xf32>
    %288 = vector.shape_cast %287 : vector<1x8x512xf32> to vector<8x512xf32>
    %c14_i32_122 = arith.constant 14 : i32
    %289 = tpu.dynamic_rotate %242 by %c14_i32_122 dim 1 : vector<8x512xf32>, i32 -> vector<8x512xf32>
    %290 = arith.mulf %288, %289 : vector<8x512xf32>
    %291 = arith.addf %286, %290 : vector<8x512xf32>
    %c35 = arith.constant 35 : index
    %c0_123 = arith.constant 0 : index
    %c0_124 = arith.constant 0 : index
    %292 = vector.load %arg5[%c35, %c0_123, %c0_124] : memref<75x8x512xf32, #tpu.memory_space<vmem>>, vector<1x8x512xf32>
    %293 = vector.shape_cast %292 : vector<1x8x512xf32> to vector<8x512xf32>
    %c2_i32_125 = arith.constant 2 : i32
    %294 = tpu.dynamic_rotate %242 by %c2_i32_125 dim 1 : vector<8x512xf32>, i32 -> vector<8x512xf32>
    %295 = arith.mulf %293, %294 : vector<8x512xf32>
    %296 = arith.addf %291, %295 : vector<8x512xf32>
    %c36 = arith.constant 36 : index
    %c0_126 = arith.constant 0 : index
    %c0_127 = arith.constant 0 : index
    %297 = vector.load %arg5[%c36, %c0_126, %c0_127] : memref<75x8x512xf32, #tpu.memory_space<vmem>>, vector<1x8x512xf32>
    %298 = vector.shape_cast %297 : vector<1x8x512xf32> to vector<8x512xf32>
    %c1_i32_128 = arith.constant 1 : i32
    %299 = tpu.dynamic_rotate %242 by %c1_i32_128 dim 1 : vector<8x512xf32>, i32 -> vector<8x512xf32>
    %300 = arith.mulf %298, %299 : vector<8x512xf32>
    %301 = arith.addf %296, %300 : vector<8x512xf32>
    %c37 = arith.constant 37 : index
    %c0_129 = arith.constant 0 : index
    %c0_130 = arith.constant 0 : index
    %302 = vector.load %arg5[%c37, %c0_129, %c0_130] : memref<75x8x512xf32, #tpu.memory_space<vmem>>, vector<1x8x512xf32>
    %303 = vector.shape_cast %302 : vector<1x8x512xf32> to vector<8x512xf32>
    %304 = arith.mulf %303, %242 : vector<8x512xf32>
    %305 = arith.addf %301, %304 : vector<8x512xf32>
    %c38 = arith.constant 38 : index
    %c0_131 = arith.constant 0 : index
    %c0_132 = arith.constant 0 : index
    %306 = vector.load %arg5[%c38, %c0_131, %c0_132] : memref<75x8x512xf32, #tpu.memory_space<vmem>>, vector<1x8x512xf32>
    %307 = vector.shape_cast %306 : vector<1x8x512xf32> to vector<8x512xf32>
    %c511_i32_133 = arith.constant 511 : i32
    %308 = tpu.dynamic_rotate %242 by %c511_i32_133 dim 1 : vector<8x512xf32>, i32 -> vector<8x512xf32>
    %309 = arith.mulf %307, %308 : vector<8x512xf32>
    %310 = arith.addf %305, %309 : vector<8x512xf32>
    %c39 = arith.constant 39 : index
    %c0_134 = arith.constant 0 : index
    %c0_135 = arith.constant 0 : index
    %311 = vector.load %arg5[%c39, %c0_134, %c0_135] : memref<75x8x512xf32, #tpu.memory_space<vmem>>, vector<1x8x512xf32>
    %312 = vector.shape_cast %311 : vector<1x8x512xf32> to vector<8x512xf32>
    %c510_i32_136 = arith.constant 510 : i32
    %313 = tpu.dynamic_rotate %242 by %c510_i32_136 dim 1 : vector<8x512xf32>, i32 -> vector<8x512xf32>
    %314 = arith.mulf %312, %313 : vector<8x512xf32>
    %315 = arith.addf %310, %314 : vector<8x512xf32>
    %c40 = arith.constant 40 : index
    %c0_137 = arith.constant 0 : index
    %c0_138 = arith.constant 0 : index
    %316 = vector.load %arg5[%c40, %c0_137, %c0_138] : memref<75x8x512xf32, #tpu.memory_space<vmem>>, vector<1x8x512xf32>
    %317 = vector.shape_cast %316 : vector<1x8x512xf32> to vector<8x512xf32>
    %c498_i32_139 = arith.constant 498 : i32
    %318 = tpu.dynamic_rotate %242 by %c498_i32_139 dim 1 : vector<8x512xf32>, i32 -> vector<8x512xf32>
    %319 = arith.mulf %317, %318 : vector<8x512xf32>
    %320 = arith.addf %315, %319 : vector<8x512xf32>
    %c41 = arith.constant 41 : index
    %c0_140 = arith.constant 0 : index
    %c0_141 = arith.constant 0 : index
    %321 = vector.load %arg5[%c41, %c0_140, %c0_141] : memref<75x8x512xf32, #tpu.memory_space<vmem>>, vector<1x8x512xf32>
    %322 = vector.shape_cast %321 : vector<1x8x512xf32> to vector<8x512xf32>
    %c497_i32_142 = arith.constant 497 : i32
    %323 = tpu.dynamic_rotate %242 by %c497_i32_142 dim 1 : vector<8x512xf32>, i32 -> vector<8x512xf32>
    %324 = arith.mulf %322, %323 : vector<8x512xf32>
    %325 = arith.addf %320, %324 : vector<8x512xf32>
    %c42 = arith.constant 42 : index
    %c0_143 = arith.constant 0 : index
    %c0_144 = arith.constant 0 : index
    %326 = vector.load %arg5[%c42, %c0_143, %c0_144] : memref<75x8x512xf32, #tpu.memory_space<vmem>>, vector<1x8x512xf32>
    %327 = vector.shape_cast %326 : vector<1x8x512xf32> to vector<8x512xf32>
    %c496_i32_145 = arith.constant 496 : i32
    %328 = tpu.dynamic_rotate %242 by %c496_i32_145 dim 1 : vector<8x512xf32>, i32 -> vector<8x512xf32>
    %329 = arith.mulf %327, %328 : vector<8x512xf32>
    %330 = arith.addf %325, %329 : vector<8x512xf32>
    %c43 = arith.constant 43 : index
    %c0_146 = arith.constant 0 : index
    %c0_147 = arith.constant 0 : index
    %331 = vector.load %arg5[%c43, %c0_146, %c0_147] : memref<75x8x512xf32, #tpu.memory_space<vmem>>, vector<1x8x512xf32>
    %332 = vector.shape_cast %331 : vector<1x8x512xf32> to vector<8x512xf32>
    %c495_i32_148 = arith.constant 495 : i32
    %333 = tpu.dynamic_rotate %242 by %c495_i32_148 dim 1 : vector<8x512xf32>, i32 -> vector<8x512xf32>
    %334 = arith.mulf %332, %333 : vector<8x512xf32>
    %335 = arith.addf %330, %334 : vector<8x512xf32>
    %c44 = arith.constant 44 : index
    %c0_149 = arith.constant 0 : index
    %c0_150 = arith.constant 0 : index
    %336 = vector.load %arg5[%c44, %c0_149, %c0_150] : memref<75x8x512xf32, #tpu.memory_space<vmem>>, vector<1x8x512xf32>
    %337 = vector.shape_cast %336 : vector<1x8x512xf32> to vector<8x512xf32>
    %c494_i32_151 = arith.constant 494 : i32
    %338 = tpu.dynamic_rotate %242 by %c494_i32_151 dim 1 : vector<8x512xf32>, i32 -> vector<8x512xf32>
    %339 = arith.mulf %337, %338 : vector<8x512xf32>
    %340 = arith.addf %335, %339 : vector<8x512xf32>
    %c45 = arith.constant 45 : index
    %c0_152 = arith.constant 0 : index
    %c0_153 = arith.constant 0 : index
    %341 = vector.load %arg5[%c45, %c0_152, %c0_153] : memref<75x8x512xf32, #tpu.memory_space<vmem>>, vector<1x8x512xf32>
    %342 = vector.shape_cast %341 : vector<1x8x512xf32> to vector<8x512xf32>
    %c482_i32_154 = arith.constant 482 : i32
    %343 = tpu.dynamic_rotate %242 by %c482_i32_154 dim 1 : vector<8x512xf32>, i32 -> vector<8x512xf32>
    %344 = arith.mulf %342, %343 : vector<8x512xf32>
    %345 = arith.addf %340, %344 : vector<8x512xf32>
    %c46 = arith.constant 46 : index
    %c0_155 = arith.constant 0 : index
    %c0_156 = arith.constant 0 : index
    %346 = vector.load %arg5[%c46, %c0_155, %c0_156] : memref<75x8x512xf32, #tpu.memory_space<vmem>>, vector<1x8x512xf32>
    %347 = vector.shape_cast %346 : vector<1x8x512xf32> to vector<8x512xf32>
    %c481_i32_157 = arith.constant 481 : i32
    %348 = tpu.dynamic_rotate %242 by %c481_i32_157 dim 1 : vector<8x512xf32>, i32 -> vector<8x512xf32>
    %349 = arith.mulf %347, %348 : vector<8x512xf32>
    %350 = arith.addf %345, %349 : vector<8x512xf32>
    %c47 = arith.constant 47 : index
    %c0_158 = arith.constant 0 : index
    %c0_159 = arith.constant 0 : index
    %351 = vector.load %arg5[%c47, %c0_158, %c0_159] : memref<75x8x512xf32, #tpu.memory_space<vmem>>, vector<1x8x512xf32>
    %352 = vector.shape_cast %351 : vector<1x8x512xf32> to vector<8x512xf32>
    %c480_i32_160 = arith.constant 480 : i32
    %353 = tpu.dynamic_rotate %242 by %c480_i32_160 dim 1 : vector<8x512xf32>, i32 -> vector<8x512xf32>
    %354 = arith.mulf %352, %353 : vector<8x512xf32>
    %355 = arith.addf %350, %354 : vector<8x512xf32>
    %c48 = arith.constant 48 : index
    %c0_161 = arith.constant 0 : index
    %c0_162 = arith.constant 0 : index
    %356 = vector.load %arg5[%c48, %c0_161, %c0_162] : memref<75x8x512xf32, #tpu.memory_space<vmem>>, vector<1x8x512xf32>
    %357 = vector.shape_cast %356 : vector<1x8x512xf32> to vector<8x512xf32>
    %c479_i32_163 = arith.constant 479 : i32
    %358 = tpu.dynamic_rotate %242 by %c479_i32_163 dim 1 : vector<8x512xf32>, i32 -> vector<8x512xf32>
    %359 = arith.mulf %357, %358 : vector<8x512xf32>
    %360 = arith.addf %355, %359 : vector<8x512xf32>
    %c49 = arith.constant 49 : index
    %c0_164 = arith.constant 0 : index
    %c0_165 = arith.constant 0 : index
    %361 = vector.load %arg5[%c49, %c0_164, %c0_165] : memref<75x8x512xf32, #tpu.memory_space<vmem>>, vector<1x8x512xf32>
    %362 = vector.shape_cast %361 : vector<1x8x512xf32> to vector<8x512xf32>
    %c478_i32_166 = arith.constant 478 : i32
    %363 = tpu.dynamic_rotate %242 by %c478_i32_166 dim 1 : vector<8x512xf32>, i32 -> vector<8x512xf32>
    %364 = arith.mulf %362, %363 : vector<8x512xf32>
    %365 = arith.addf %360, %364 : vector<8x512xf32>
    %c16_167 = arith.constant 16 : index
    %c0_168 = arith.constant 0 : index
    %366 = vector.load %arg4[%c16_167, %c0_168] : memref<64x1xf32, #tpu.memory_space<vmem>>, vector<8x1xf32>
    %367 = vector.broadcast %366 : vector<8x1xf32> to vector<8x512xf32>
    %368 = arith.addf %365, %367 : vector<8x512xf32>
    %cst_169 = arith.constant 0.000000e+00 : f32
    %369 = vector.broadcast %cst_169 : f32 to vector<8x512xf32>
    %370 = arith.maximumf %368, %369 : vector<8x512xf32>
    %c40_170 = arith.constant 40 : index
    %c0_171 = arith.constant 0 : index
    %371 = vector.load %arg3[%c40_170, %c0_171] : memref<80x128xf32, #tpu.memory_space<vmem>>, vector<8x8xf32>
    %372 = arith.truncf %371 : vector<8x8xf32> to vector<8x8xbf16>
    %373 = arith.truncf %370 : vector<8x512xf32> to vector<8x512xbf16>
    %cst_172 = arith.constant dense<0.000000e+00> : vector<8x512xf32>
    %374 = tpu.matmul %372, %373, %cst_172 {dimension_numbers = #tpu.dot_dimension_numbers<[1], [0], [0], [1], [0, 0, 1, 1], [], []>} : vector<8x8xbf16>, vector<8x512xbf16>, vector<8x512xf32> -> vector<8x512xf32>
    %c24_173 = arith.constant 24 : index
    %c0_174 = arith.constant 0 : index
    %375 = vector.load %arg4[%c24_173, %c0_174] : memref<64x1xf32, #tpu.memory_space<vmem>>, vector<8x1xf32>
    %376 = vector.broadcast %375 : vector<8x1xf32> to vector<8x512xf32>
    %377 = arith.addf %374, %376 : vector<8x512xf32>
    %cst_175 = arith.constant 0.000000e+00 : f32
    %378 = vector.broadcast %cst_175 : f32 to vector<8x512xf32>
    %379 = arith.maximumf %377, %378 : vector<8x512xf32>
    %380 = arith.addf %197, %379 : vector<8x512xf32>
    %c17_i32_176 = arith.constant 17 : i32
    %381 = tpu.dynamic_rotate %380 by %c17_i32_176 dim 1 : vector<8x512xf32>, i32 -> vector<8x512xf32>
    %382 = vector.extract_strided_slice %0 {offsets = [0, 0], sizes = [1, 512], strides = [1, 1]} : vector<9x512xf32> to vector<1x512xf32>
    %383 = vector.broadcast %382 : vector<1x512xf32> to vector<8x512xf32>
    %384 = arith.mulf %381, %383 : vector<8x512xf32>
    %c16_i32_177 = arith.constant 16 : i32
    %385 = tpu.dynamic_rotate %380 by %c16_i32_177 dim 1 : vector<8x512xf32>, i32 -> vector<8x512xf32>
    %386 = vector.extract_strided_slice %0 {offsets = [1, 0], sizes = [1, 512], strides = [1, 1]} : vector<9x512xf32> to vector<1x512xf32>
    %387 = vector.broadcast %386 : vector<1x512xf32> to vector<8x512xf32>
    %388 = arith.mulf %385, %387 : vector<8x512xf32>
    %c15_i32_178 = arith.constant 15 : i32
    %389 = tpu.dynamic_rotate %380 by %c15_i32_178 dim 1 : vector<8x512xf32>, i32 -> vector<8x512xf32>
    %390 = vector.extract_strided_slice %0 {offsets = [2, 0], sizes = [1, 512], strides = [1, 1]} : vector<9x512xf32> to vector<1x512xf32>
    %391 = vector.broadcast %390 : vector<1x512xf32> to vector<8x512xf32>
    %392 = arith.mulf %389, %391 : vector<8x512xf32>
    %c1_i32_179 = arith.constant 1 : i32
    %393 = tpu.dynamic_rotate %380 by %c1_i32_179 dim 1 : vector<8x512xf32>, i32 -> vector<8x512xf32>
    %394 = vector.extract_strided_slice %0 {offsets = [3, 0], sizes = [1, 512], strides = [1, 1]} : vector<9x512xf32> to vector<1x512xf32>
    %395 = vector.broadcast %394 : vector<1x512xf32> to vector<8x512xf32>
    %396 = arith.mulf %393, %395 : vector<8x512xf32>
    %c511_i32_180 = arith.constant 511 : i32
    %397 = tpu.dynamic_rotate %380 by %c511_i32_180 dim 1 : vector<8x512xf32>, i32 -> vector<8x512xf32>
    %398 = vector.extract_strided_slice %0 {offsets = [5, 0], sizes = [1, 512], strides = [1, 1]} : vector<9x512xf32> to vector<1x512xf32>
    %399 = vector.broadcast %398 : vector<1x512xf32> to vector<8x512xf32>
    %400 = arith.mulf %397, %399 : vector<8x512xf32>
    %c497_i32_181 = arith.constant 497 : i32
    %401 = tpu.dynamic_rotate %380 by %c497_i32_181 dim 1 : vector<8x512xf32>, i32 -> vector<8x512xf32>
    %402 = vector.extract_strided_slice %0 {offsets = [6, 0], sizes = [1, 512], strides = [1, 1]} : vector<9x512xf32> to vector<1x512xf32>
    %403 = vector.broadcast %402 : vector<1x512xf32> to vector<8x512xf32>
    %404 = arith.mulf %401, %403 : vector<8x512xf32>
    %c496_i32_182 = arith.constant 496 : i32
    %405 = tpu.dynamic_rotate %380 by %c496_i32_182 dim 1 : vector<8x512xf32>, i32 -> vector<8x512xf32>
    %406 = vector.extract_strided_slice %0 {offsets = [7, 0], sizes = [1, 512], strides = [1, 1]} : vector<9x512xf32> to vector<1x512xf32>
    %407 = vector.broadcast %406 : vector<1x512xf32> to vector<8x512xf32>
    %408 = arith.mulf %405, %407 : vector<8x512xf32>
    %c495_i32_183 = arith.constant 495 : i32
    %409 = tpu.dynamic_rotate %380 by %c495_i32_183 dim 1 : vector<8x512xf32>, i32 -> vector<8x512xf32>
    %410 = vector.extract_strided_slice %0 {offsets = [8, 0], sizes = [1, 512], strides = [1, 1]} : vector<9x512xf32> to vector<1x512xf32>
    %411 = vector.broadcast %410 : vector<1x512xf32> to vector<8x512xf32>
    %412 = arith.mulf %409, %411 : vector<8x512xf32>
    %413 = vector.extract_strided_slice %0 {offsets = [4, 0], sizes = [1, 512], strides = [1, 1]} : vector<9x512xf32> to vector<1x512xf32>
    %414 = tpu.concatenate %384, %388, %392, %396, %380, %400, %404, %408, %412, %413 in 0 : vector<8x512xf32>, vector<8x512xf32>, vector<8x512xf32>, vector<8x512xf32>, vector<8x512xf32>, vector<8x512xf32>, vector<8x512xf32>, vector<8x512xf32>, vector<8x512xf32>, vector<1x512xf32> -> vector<73x512xf32>
    %c48_184 = arith.constant 48 : index
    %c0_185 = arith.constant 0 : index
    %415 = vector.load %arg3[%c48_184, %c0_185] : memref<80x128xf32, #tpu.memory_space<vmem>>, vector<8x73xf32>
    %416 = arith.truncf %415 : vector<8x73xf32> to vector<8x73xbf16>
    %417 = arith.truncf %414 : vector<73x512xf32> to vector<73x512xbf16>
    %cst_186 = arith.constant dense<0.000000e+00> : vector<8x512xf32>
    %418 = tpu.matmul %416, %417, %cst_186 {dimension_numbers = #tpu.dot_dimension_numbers<[1], [0], [0], [1], [0, 0, 1, 1], [], []>} : vector<8x73xbf16>, vector<73x512xbf16>, vector<8x512xf32> -> vector<8x512xf32>
    %cst_187 = arith.constant 0.000000e+00 : f32
    %419 = vector.broadcast %cst_187 : f32 to vector<8x512xf32>
    %420 = arith.subf %419, %418 : vector<8x512xf32>
    %421 = math.exp %420 : vector<8x512xf32>
    %cst_188 = arith.constant 1.000000e+00 : f32
    %422 = vector.broadcast %cst_188 : f32 to vector<8x512xf32>
    %423 = arith.addf %422, %421 : vector<8x512xf32>
    %424 = tpu.reciprocal %423 {approx = true} : vector<8x512xf32> -> vector<8x512xf32>
    %425 = arith.mulf %418, %424 : vector<8x512xf32>
    %c50 = arith.constant 50 : index
    %c0_189 = arith.constant 0 : index
    %c0_190 = arith.constant 0 : index
    %426 = vector.load %arg5[%c50, %c0_189, %c0_190] : memref<75x8x512xf32, #tpu.memory_space<vmem>>, vector<1x8x512xf32>
    %427 = vector.shape_cast %426 : vector<1x8x512xf32> to vector<8x512xf32>
    %c34_i32_191 = arith.constant 34 : i32
    %428 = tpu.dynamic_rotate %425 by %c34_i32_191 dim 1 : vector<8x512xf32>, i32 -> vector<8x512xf32>
    %429 = arith.mulf %427, %428 : vector<8x512xf32>
    %c51 = arith.constant 51 : index
    %c0_192 = arith.constant 0 : index
    %c0_193 = arith.constant 0 : index
    %430 = vector.load %arg5[%c51, %c0_192, %c0_193] : memref<75x8x512xf32, #tpu.memory_space<vmem>>, vector<1x8x512xf32>
    %431 = vector.shape_cast %430 : vector<1x8x512xf32> to vector<8x512xf32>
    %c33_i32_194 = arith.constant 33 : i32
    %432 = tpu.dynamic_rotate %425 by %c33_i32_194 dim 1 : vector<8x512xf32>, i32 -> vector<8x512xf32>
    %433 = arith.mulf %431, %432 : vector<8x512xf32>
    %434 = arith.addf %429, %433 : vector<8x512xf32>
    %c52 = arith.constant 52 : index
    %c0_195 = arith.constant 0 : index
    %c0_196 = arith.constant 0 : index
    %435 = vector.load %arg5[%c52, %c0_195, %c0_196] : memref<75x8x512xf32, #tpu.memory_space<vmem>>, vector<1x8x512xf32>
    %436 = vector.shape_cast %435 : vector<1x8x512xf32> to vector<8x512xf32>
    %c32_i32_197 = arith.constant 32 : i32
    %437 = tpu.dynamic_rotate %425 by %c32_i32_197 dim 1 : vector<8x512xf32>, i32 -> vector<8x512xf32>
    %438 = arith.mulf %436, %437 : vector<8x512xf32>
    %439 = arith.addf %434, %438 : vector<8x512xf32>
    %c53 = arith.constant 53 : index
    %c0_198 = arith.constant 0 : index
    %c0_199 = arith.constant 0 : index
    %440 = vector.load %arg5[%c53, %c0_198, %c0_199] : memref<75x8x512xf32, #tpu.memory_space<vmem>>, vector<1x8x512xf32>
    %441 = vector.shape_cast %440 : vector<1x8x512xf32> to vector<8x512xf32>
    %c31_i32_200 = arith.constant 31 : i32
    %442 = tpu.dynamic_rotate %425 by %c31_i32_200 dim 1 : vector<8x512xf32>, i32 -> vector<8x512xf32>
    %443 = arith.mulf %441, %442 : vector<8x512xf32>
    %444 = arith.addf %439, %443 : vector<8x512xf32>
    %c54 = arith.constant 54 : index
    %c0_201 = arith.constant 0 : index
    %c0_202 = arith.constant 0 : index
    %445 = vector.load %arg5[%c54, %c0_201, %c0_202] : memref<75x8x512xf32, #tpu.memory_space<vmem>>, vector<1x8x512xf32>
    %446 = vector.shape_cast %445 : vector<1x8x512xf32> to vector<8x512xf32>
    %c30_i32_203 = arith.constant 30 : i32
    %447 = tpu.dynamic_rotate %425 by %c30_i32_203 dim 1 : vector<8x512xf32>, i32 -> vector<8x512xf32>
    %448 = arith.mulf %446, %447 : vector<8x512xf32>
    %449 = arith.addf %444, %448 : vector<8x512xf32>
    %c55 = arith.constant 55 : index
    %c0_204 = arith.constant 0 : index
    %c0_205 = arith.constant 0 : index
    %450 = vector.load %arg5[%c55, %c0_204, %c0_205] : memref<75x8x512xf32, #tpu.memory_space<vmem>>, vector<1x8x512xf32>
    %451 = vector.shape_cast %450 : vector<1x8x512xf32> to vector<8x512xf32>
    %c18_i32_206 = arith.constant 18 : i32
    %452 = tpu.dynamic_rotate %425 by %c18_i32_206 dim 1 : vector<8x512xf32>, i32 -> vector<8x512xf32>
    %453 = arith.mulf %451, %452 : vector<8x512xf32>
    %454 = arith.addf %449, %453 : vector<8x512xf32>
    %c56 = arith.constant 56 : index
    %c0_207 = arith.constant 0 : index
    %c0_208 = arith.constant 0 : index
    %455 = vector.load %arg5[%c56, %c0_207, %c0_208] : memref<75x8x512xf32, #tpu.memory_space<vmem>>, vector<1x8x512xf32>
    %456 = vector.shape_cast %455 : vector<1x8x512xf32> to vector<8x512xf32>
    %c17_i32_209 = arith.constant 17 : i32
    %457 = tpu.dynamic_rotate %425 by %c17_i32_209 dim 1 : vector<8x512xf32>, i32 -> vector<8x512xf32>
    %458 = arith.mulf %456, %457 : vector<8x512xf32>
    %459 = arith.addf %454, %458 : vector<8x512xf32>
    %c57 = arith.constant 57 : index
    %c0_210 = arith.constant 0 : index
    %c0_211 = arith.constant 0 : index
    %460 = vector.load %arg5[%c57, %c0_210, %c0_211] : memref<75x8x512xf32, #tpu.memory_space<vmem>>, vector<1x8x512xf32>
    %461 = vector.shape_cast %460 : vector<1x8x512xf32> to vector<8x512xf32>
    %c16_i32_212 = arith.constant 16 : i32
    %462 = tpu.dynamic_rotate %425 by %c16_i32_212 dim 1 : vector<8x512xf32>, i32 -> vector<8x512xf32>
    %463 = arith.mulf %461, %462 : vector<8x512xf32>
    %464 = arith.addf %459, %463 : vector<8x512xf32>
    %c58 = arith.constant 58 : index
    %c0_213 = arith.constant 0 : index
    %c0_214 = arith.constant 0 : index
    %465 = vector.load %arg5[%c58, %c0_213, %c0_214] : memref<75x8x512xf32, #tpu.memory_space<vmem>>, vector<1x8x512xf32>
    %466 = vector.shape_cast %465 : vector<1x8x512xf32> to vector<8x512xf32>
    %c15_i32_215 = arith.constant 15 : i32
    %467 = tpu.dynamic_rotate %425 by %c15_i32_215 dim 1 : vector<8x512xf32>, i32 -> vector<8x512xf32>
    %468 = arith.mulf %466, %467 : vector<8x512xf32>
    %469 = arith.addf %464, %468 : vector<8x512xf32>
    %c59 = arith.constant 59 : index
    %c0_216 = arith.constant 0 : index
    %c0_217 = arith.constant 0 : index
    %470 = vector.load %arg5[%c59, %c0_216, %c0_217] : memref<75x8x512xf32, #tpu.memory_space<vmem>>, vector<1x8x512xf32>
    %471 = vector.shape_cast %470 : vector<1x8x512xf32> to vector<8x512xf32>
    %c14_i32_218 = arith.constant 14 : i32
    %472 = tpu.dynamic_rotate %425 by %c14_i32_218 dim 1 : vector<8x512xf32>, i32 -> vector<8x512xf32>
    %473 = arith.mulf %471, %472 : vector<8x512xf32>
    %474 = arith.addf %469, %473 : vector<8x512xf32>
    %c60 = arith.constant 60 : index
    %c0_219 = arith.constant 0 : index
    %c0_220 = arith.constant 0 : index
    %475 = vector.load %arg5[%c60, %c0_219, %c0_220] : memref<75x8x512xf32, #tpu.memory_space<vmem>>, vector<1x8x512xf32>
    %476 = vector.shape_cast %475 : vector<1x8x512xf32> to vector<8x512xf32>
    %c2_i32_221 = arith.constant 2 : i32
    %477 = tpu.dynamic_rotate %425 by %c2_i32_221 dim 1 : vector<8x512xf32>, i32 -> vector<8x512xf32>
    %478 = arith.mulf %476, %477 : vector<8x512xf32>
    %479 = arith.addf %474, %478 : vector<8x512xf32>
    %c61 = arith.constant 61 : index
    %c0_222 = arith.constant 0 : index
    %c0_223 = arith.constant 0 : index
    %480 = vector.load %arg5[%c61, %c0_222, %c0_223] : memref<75x8x512xf32, #tpu.memory_space<vmem>>, vector<1x8x512xf32>
    %481 = vector.shape_cast %480 : vector<1x8x512xf32> to vector<8x512xf32>
    %c1_i32_224 = arith.constant 1 : i32
    %482 = tpu.dynamic_rotate %425 by %c1_i32_224 dim 1 : vector<8x512xf32>, i32 -> vector<8x512xf32>
    %483 = arith.mulf %481, %482 : vector<8x512xf32>
    %484 = arith.addf %479, %483 : vector<8x512xf32>
    %c62 = arith.constant 62 : index
    %c0_225 = arith.constant 0 : index
    %c0_226 = arith.constant 0 : index
    %485 = vector.load %arg5[%c62, %c0_225, %c0_226] : memref<75x8x512xf32, #tpu.memory_space<vmem>>, vector<1x8x512xf32>
    %486 = vector.shape_cast %485 : vector<1x8x512xf32> to vector<8x512xf32>
    %487 = arith.mulf %486, %425 : vector<8x512xf32>
    %488 = arith.addf %484, %487 : vector<8x512xf32>
    %c63 = arith.constant 63 : index
    %c0_227 = arith.constant 0 : index
    %c0_228 = arith.constant 0 : index
    %489 = vector.load %arg5[%c63, %c0_227, %c0_228] : memref<75x8x512xf32, #tpu.memory_space<vmem>>, vector<1x8x512xf32>
    %490 = vector.shape_cast %489 : vector<1x8x512xf32> to vector<8x512xf32>
    %c511_i32_229 = arith.constant 511 : i32
    %491 = tpu.dynamic_rotate %425 by %c511_i32_229 dim 1 : vector<8x512xf32>, i32 -> vector<8x512xf32>
    %492 = arith.mulf %490, %491 : vector<8x512xf32>
    %493 = arith.addf %488, %492 : vector<8x512xf32>
    %c64 = arith.constant 64 : index
    %c0_230 = arith.constant 0 : index
    %c0_231 = arith.constant 0 : index
    %494 = vector.load %arg5[%c64, %c0_230, %c0_231] : memref<75x8x512xf32, #tpu.memory_space<vmem>>, vector<1x8x512xf32>
    %495 = vector.shape_cast %494 : vector<1x8x512xf32> to vector<8x512xf32>
    %c510_i32_232 = arith.constant 510 : i32
    %496 = tpu.dynamic_rotate %425 by %c510_i32_232 dim 1 : vector<8x512xf32>, i32 -> vector<8x512xf32>
    %497 = arith.mulf %495, %496 : vector<8x512xf32>
    %498 = arith.addf %493, %497 : vector<8x512xf32>
    %c65 = arith.constant 65 : index
    %c0_233 = arith.constant 0 : index
    %c0_234 = arith.constant 0 : index
    %499 = vector.load %arg5[%c65, %c0_233, %c0_234] : memref<75x8x512xf32, #tpu.memory_space<vmem>>, vector<1x8x512xf32>
    %500 = vector.shape_cast %499 : vector<1x8x512xf32> to vector<8x512xf32>
    %c498_i32_235 = arith.constant 498 : i32
    %501 = tpu.dynamic_rotate %425 by %c498_i32_235 dim 1 : vector<8x512xf32>, i32 -> vector<8x512xf32>
    %502 = arith.mulf %500, %501 : vector<8x512xf32>
    %503 = arith.addf %498, %502 : vector<8x512xf32>
    %c66 = arith.constant 66 : index
    %c0_236 = arith.constant 0 : index
    %c0_237 = arith.constant 0 : index
    %504 = vector.load %arg5[%c66, %c0_236, %c0_237] : memref<75x8x512xf32, #tpu.memory_space<vmem>>, vector<1x8x512xf32>
    %505 = vector.shape_cast %504 : vector<1x8x512xf32> to vector<8x512xf32>
    %c497_i32_238 = arith.constant 497 : i32
    %506 = tpu.dynamic_rotate %425 by %c497_i32_238 dim 1 : vector<8x512xf32>, i32 -> vector<8x512xf32>
    %507 = arith.mulf %505, %506 : vector<8x512xf32>
    %508 = arith.addf %503, %507 : vector<8x512xf32>
    %c67 = arith.constant 67 : index
    %c0_239 = arith.constant 0 : index
    %c0_240 = arith.constant 0 : index
    %509 = vector.load %arg5[%c67, %c0_239, %c0_240] : memref<75x8x512xf32, #tpu.memory_space<vmem>>, vector<1x8x512xf32>
    %510 = vector.shape_cast %509 : vector<1x8x512xf32> to vector<8x512xf32>
    %c496_i32_241 = arith.constant 496 : i32
    %511 = tpu.dynamic_rotate %425 by %c496_i32_241 dim 1 : vector<8x512xf32>, i32 -> vector<8x512xf32>
    %512 = arith.mulf %510, %511 : vector<8x512xf32>
    %513 = arith.addf %508, %512 : vector<8x512xf32>
    %c68 = arith.constant 68 : index
    %c0_242 = arith.constant 0 : index
    %c0_243 = arith.constant 0 : index
    %514 = vector.load %arg5[%c68, %c0_242, %c0_243] : memref<75x8x512xf32, #tpu.memory_space<vmem>>, vector<1x8x512xf32>
    %515 = vector.shape_cast %514 : vector<1x8x512xf32> to vector<8x512xf32>
    %c495_i32_244 = arith.constant 495 : i32
    %516 = tpu.dynamic_rotate %425 by %c495_i32_244 dim 1 : vector<8x512xf32>, i32 -> vector<8x512xf32>
    %517 = arith.mulf %515, %516 : vector<8x512xf32>
    %518 = arith.addf %513, %517 : vector<8x512xf32>
    %c69 = arith.constant 69 : index
    %c0_245 = arith.constant 0 : index
    %c0_246 = arith.constant 0 : index
    %519 = vector.load %arg5[%c69, %c0_245, %c0_246] : memref<75x8x512xf32, #tpu.memory_space<vmem>>, vector<1x8x512xf32>
    %520 = vector.shape_cast %519 : vector<1x8x512xf32> to vector<8x512xf32>
    %c494_i32_247 = arith.constant 494 : i32
    %521 = tpu.dynamic_rotate %425 by %c494_i32_247 dim 1 : vector<8x512xf32>, i32 -> vector<8x512xf32>
    %522 = arith.mulf %520, %521 : vector<8x512xf32>
    %523 = arith.addf %518, %522 : vector<8x512xf32>
    %c70 = arith.constant 70 : index
    %c0_248 = arith.constant 0 : index
    %c0_249 = arith.constant 0 : index
    %524 = vector.load %arg5[%c70, %c0_248, %c0_249] : memref<75x8x512xf32, #tpu.memory_space<vmem>>, vector<1x8x512xf32>
    %525 = vector.shape_cast %524 : vector<1x8x512xf32> to vector<8x512xf32>
    %c482_i32_250 = arith.constant 482 : i32
    %526 = tpu.dynamic_rotate %425 by %c482_i32_250 dim 1 : vector<8x512xf32>, i32 -> vector<8x512xf32>
    %527 = arith.mulf %525, %526 : vector<8x512xf32>
    %528 = arith.addf %523, %527 : vector<8x512xf32>
    %c71 = arith.constant 71 : index
    %c0_251 = arith.constant 0 : index
    %c0_252 = arith.constant 0 : index
    %529 = vector.load %arg5[%c71, %c0_251, %c0_252] : memref<75x8x512xf32, #tpu.memory_space<vmem>>, vector<1x8x512xf32>
    %530 = vector.shape_cast %529 : vector<1x8x512xf32> to vector<8x512xf32>
    %c481_i32_253 = arith.constant 481 : i32
    %531 = tpu.dynamic_rotate %425 by %c481_i32_253 dim 1 : vector<8x512xf32>, i32 -> vector<8x512xf32>
    %532 = arith.mulf %530, %531 : vector<8x512xf32>
    %533 = arith.addf %528, %532 : vector<8x512xf32>
    %c72 = arith.constant 72 : index
    %c0_254 = arith.constant 0 : index
    %c0_255 = arith.constant 0 : index
    %534 = vector.load %arg5[%c72, %c0_254, %c0_255] : memref<75x8x512xf32, #tpu.memory_space<vmem>>, vector<1x8x512xf32>
    %535 = vector.shape_cast %534 : vector<1x8x512xf32> to vector<8x512xf32>
    %c480_i32_256 = arith.constant 480 : i32
    %536 = tpu.dynamic_rotate %425 by %c480_i32_256 dim 1 : vector<8x512xf32>, i32 -> vector<8x512xf32>
    %537 = arith.mulf %535, %536 : vector<8x512xf32>
    %538 = arith.addf %533, %537 : vector<8x512xf32>
    %c73 = arith.constant 73 : index
    %c0_257 = arith.constant 0 : index
    %c0_258 = arith.constant 0 : index
    %539 = vector.load %arg5[%c73, %c0_257, %c0_258] : memref<75x8x512xf32, #tpu.memory_space<vmem>>, vector<1x8x512xf32>
    %540 = vector.shape_cast %539 : vector<1x8x512xf32> to vector<8x512xf32>
    %c479_i32_259 = arith.constant 479 : i32
    %541 = tpu.dynamic_rotate %425 by %c479_i32_259 dim 1 : vector<8x512xf32>, i32 -> vector<8x512xf32>
    %542 = arith.mulf %540, %541 : vector<8x512xf32>
    %543 = arith.addf %538, %542 : vector<8x512xf32>
    %c74 = arith.constant 74 : index
    %c0_260 = arith.constant 0 : index
    %c0_261 = arith.constant 0 : index
    %544 = vector.load %arg5[%c74, %c0_260, %c0_261] : memref<75x8x512xf32, #tpu.memory_space<vmem>>, vector<1x8x512xf32>
    %545 = vector.shape_cast %544 : vector<1x8x512xf32> to vector<8x512xf32>
    %c478_i32_262 = arith.constant 478 : i32
    %546 = tpu.dynamic_rotate %425 by %c478_i32_262 dim 1 : vector<8x512xf32>, i32 -> vector<8x512xf32>
    %547 = arith.mulf %545, %546 : vector<8x512xf32>
    %548 = arith.addf %543, %547 : vector<8x512xf32>
    %c32_263 = arith.constant 32 : index
    %c0_264 = arith.constant 0 : index
    %549 = vector.load %arg4[%c32_263, %c0_264] : memref<64x1xf32, #tpu.memory_space<vmem>>, vector<8x1xf32>
    %550 = vector.broadcast %549 : vector<8x1xf32> to vector<8x512xf32>
    %551 = arith.addf %548, %550 : vector<8x512xf32>
    %cst_265 = arith.constant 0.000000e+00 : f32
    %552 = vector.broadcast %cst_265 : f32 to vector<8x512xf32>
    %553 = arith.maximumf %551, %552 : vector<8x512xf32>
    %c56_266 = arith.constant 56 : index
    %c0_267 = arith.constant 0 : index
    %554 = vector.load %arg3[%c56_266, %c0_267] : memref<80x128xf32, #tpu.memory_space<vmem>>, vector<8x8xf32>
    %555 = arith.truncf %554 : vector<8x8xf32> to vector<8x8xbf16>
    %556 = arith.truncf %553 : vector<8x512xf32> to vector<8x512xbf16>
    %cst_268 = arith.constant dense<0.000000e+00> : vector<8x512xf32>
    %557 = tpu.matmul %555, %556, %cst_268 {dimension_numbers = #tpu.dot_dimension_numbers<[1], [0], [0], [1], [0, 0, 1, 1], [], []>} : vector<8x8xbf16>, vector<8x512xbf16>, vector<8x512xf32> -> vector<8x512xf32>
    %c40_269 = arith.constant 40 : index
    %c0_270 = arith.constant 0 : index
    %558 = vector.load %arg4[%c40_269, %c0_270] : memref<64x1xf32, #tpu.memory_space<vmem>>, vector<8x1xf32>
    %559 = vector.broadcast %558 : vector<8x1xf32> to vector<8x512xf32>
    %560 = arith.addf %557, %559 : vector<8x512xf32>
    %cst_271 = arith.constant 0.000000e+00 : f32
    %561 = vector.broadcast %cst_271 : f32 to vector<8x512xf32>
    %562 = arith.maximumf %560, %561 : vector<8x512xf32>
    %563 = arith.addf %380, %562 : vector<8x512xf32>
    %564 = tpu.concatenate %13, %197, %380, %563 in 0 : vector<8x512xf32>, vector<8x512xf32>, vector<8x512xf32>, vector<8x512xf32> -> vector<32x512xf32>
    %c64_272 = arith.constant 64 : index
    %c0_273 = arith.constant 0 : index
    %565 = vector.load %arg3[%c64_272, %c0_273] : memref<80x128xf32, #tpu.memory_space<vmem>>, vector<16x32xf32>
    %566 = arith.truncf %565 : vector<16x32xf32> to vector<16x32xbf16>
    %567 = arith.truncf %564 : vector<32x512xf32> to vector<32x512xbf16>
    %cst_274 = arith.constant dense<0.000000e+00> : vector<16x512xf32>
    %568 = tpu.matmul %566, %567, %cst_274 {dimension_numbers = #tpu.dot_dimension_numbers<[1], [0], [0], [1], [0, 0, 1, 1], [], []>} : vector<16x32xbf16>, vector<32x512xbf16>, vector<16x512xf32> -> vector<16x512xf32>
    %c48_275 = arith.constant 48 : index
    %c0_276 = arith.constant 0 : index
    %569 = vector.load %arg4[%c48_275, %c0_276] : memref<64x1xf32, #tpu.memory_space<vmem>>, vector<16x1xf32>
    %570 = vector.broadcast %569 : vector<16x1xf32> to vector<16x512xf32>
    %571 = arith.addf %568, %570 : vector<16x512xf32>
    %cst_277 = arith.constant 0.000000e+00 : f32
    %572 = vector.broadcast %cst_277 : f32 to vector<16x512xf32>
    %573 = arith.subf %572, %571 : vector<16x512xf32>
    %574 = math.exp %573 : vector<16x512xf32>
    %cst_278 = arith.constant 1.000000e+00 : f32
    %575 = vector.broadcast %cst_278 : f32 to vector<16x512xf32>
    %576 = arith.addf %575, %574 : vector<16x512xf32>
    %577 = tpu.reciprocal %576 {approx = true} : vector<16x512xf32> -> vector<16x512xf32>
    %578 = arith.mulf %571, %577 : vector<16x512xf32>
    %c0_279 = arith.constant 0 : index
    %c0_280 = arith.constant 0 : index
    %579 = vector.load %arg6[%c0_279, %c0_280] : memref<16x512xf32, #tpu.memory_space<vmem>>, vector<16x512xf32>
    tpu.vector_store %arg6[%c0_279, %c0_280], %578 {strides = array<i32>} : memref<16x512xf32, #tpu.memory_space<vmem>>, vector<16x512xf32>,
    return
  }
  func.func @transform_0(%arg0: i32) -> (i32, i32) {
    %c0_i32 = arith.constant 0 : i32
    %c0_i32_0 = arith.constant 0 : i32
    return %c0_i32, %arg0 : i32, i32
  }
  func.func @transform_1(%arg0: i32) -> (i32, i32) {
    %c0_i32 = arith.constant 0 : i32
    %c0_i32_0 = arith.constant 0 : i32
    %c0_i32_1 = arith.constant 0 : i32
    return %c0_i32, %c0_i32_0 : i32, i32
  }
  func.func @transform_2(%arg0: i32) -> (i32, i32) {
    %c0_i32 = arith.constant 0 : i32
    %c0_i32_0 = arith.constant 0 : i32
    %c0_i32_1 = arith.constant 0 : i32
    return %c0_i32, %c0_i32_0 : i32, i32
  }
  func.func @transform_3(%arg0: i32) -> (i32, i32) {
    %c0_i32 = arith.constant 0 : i32
    %c0_i32_0 = arith.constant 0 : i32
    %c0_i32_1 = arith.constant 0 : i32
    return %c0_i32, %c0_i32_0 : i32, i32
  }
  func.func @transform_4(%arg0: i32) -> (i32, i32, i32) {
    %c0_i32 = arith.constant 0 : i32
    %c0_i32_0 = arith.constant 0 : i32
    %c0_i32_1 = arith.constant 0 : i32
    %c0_i32_2 = arith.constant 0 : i32
    return %c0_i32, %c0_i32_0, %c0_i32_1 : i32, i32, i32
  }
  func.func @transform_5(%arg0: i32) -> (i32, i32) {
    %c0_i32 = arith.constant 0 : i32
    %c0_i32_0 = arith.constant 0 : i32
    return %c0_i32, %arg0 : i32, i32
  }
}

</mosaic_0001>

<llo_original>
// kernel: tpu_custom_call.1
$region0: #{tpu_custom_call.1}
  #allocation0 [shape = 'u32[]', space=smem, size = 0x4, offset = 0x4, fixed_abs, tag = 'smem constant byte address 0x4 - core index']
  #allocation1 [shape = 'u32[72,128]{1,0:T(1,128)}', space=vmem, size = 0x9000, scoped, tag = 'internal scratch']
  %s0 = inlined_call_operand.hbm [shape: f32[17,512], index: 0, kind: input, shape index: {}]
  %s1 = inlined_call_operand.hbm [shape: f32[9,512], index: 1, kind: input, shape index: {}]
  %s2 = inlined_call_operand.hbm [shape: f32[80,128], index: 2, kind: input, shape index: {}]
  %s3 = inlined_call_operand.vmem [shape: f32[64,1], index: 3, kind: input, shape index: {}]
  %s4 = inlined_call_operand.hbm [shape: f32[75,8,512], index: 4, kind: input, shape index: {}]
  %s5 = inlined_call_operand.hbm [shape: f32[16,512], index: 5, kind: output, shape index: {}]
  %s6 = sld [smem:[#allocation0]]
  $region46: #{tpu_custom_call.1} parent=0
    _
  %s8 = ssub.s32 1, %s6
  %s9 = scalar_select 0, %s8, %s6
  $region1: #{tpu_custom_call.1} parent=0
    #allocation2 [shape = 'u8[49152]{0}', space=vmem, size = 0xc000, scoped, tag = 'input window, operand 0, single buffered']
    #allocation3 [shape = 's32[1]{0}', space=sflag, size = 0x4, scoped, tag = 'scoped memory for tpu_custom_call.1']
    #allocation4 [shape = 's32[1]{0}', space=sflag, size = 0x4, scoped, tag = 'scoped memory for tpu_custom_call.1']
    #allocation5 [shape = 'u8[32768]{0}', space=vmem, size = 0x8000, scoped, tag = 'input window, operand 1, single buffered']
    #allocation6 [shape = 's32[1]{0}', space=sflag, size = 0x4, scoped, tag = 'scoped memory for tpu_custom_call.1']
    #allocation7 [shape = 'u8[40960]{0}', space=vmem, size = 0xa000, scoped, tag = 'input window, operand 2, single buffered']
    #allocation8 [shape = 'u8[1228800]{0}', space=vmem, size = 0x12c000, scoped, tag = 'input window, operand 4, single buffered']
    #allocation9 [shape = 's32[1]{0}', space=sflag, size = 0x4, scoped, tag = 'scoped memory for tpu_custom_call.1']
    #allocation10 [shape = 'u8[32768]{0}', space=vmem, size = 0x8000, scoped, tag = 'output window, operand 0, single buffered']
    %10 = vsyncpa [#allocation3], 0
    %11 = vsyncpa [#allocation6], 0
    %12 = vsyncpa [#allocation9], 0
    %13 = vsyncpa [#allocation4], 0
    // Predicated region
    $region2: #{tpu_custom_call.1} parent=1 // pred_check
      _
    $region3: #{tpu_custom_call.1} parent=1 // pred_check_branch
      %15 = sbr.rel (0) target = $region5
    $region4: #{tpu_custom_call.1} parent=1 // pred_region
      %17 = vsyncadd [#allocation3], 0
      %s18 = sshll.u32 %s0, 4
      %s19 = int_to_ptr.hbm [resolvable:$true] %s18
      %s20 = sshll.u32 [#allocation2], 4
      %s21 = int_to_ptr.vmem [resolvable:$true] %s20
      %26 = dma.hbm_to_vmem [thread:$0]  %s19, 1536, %s21, [#allocation3], 512, 512, 32
    $region5: #{tpu_custom_call.1} parent=1 // pred_fallthru
      _
    // Predicated region
    $region6: #{tpu_custom_call.1} parent=1 // pred_check
      _
    $region7: #{tpu_custom_call.1} parent=1 // pred_check_branch
      %28 = sbr.rel (0) target = $region9
    $region8: #{tpu_custom_call.1} parent=1 // pred_region
      %30 = vsyncadd [#allocation6], 0
      %s31 = sshll.u32 %s1, 4
      %s32 = int_to_ptr.hbm [resolvable:$true] %s31
      %s33 = sshll.u32 [#allocation5], 4
      %s34 = int_to_ptr.vmem [resolvable:$true] %s33
      %39 = dma.hbm_to_vmem [thread:$0]  %s32, 1024, %s34, [#allocation6], 512, 512, 32
    $region9: #{tpu_custom_call.1} parent=1 // pred_fallthru
      _
    // Predicated region
    $region10: #{tpu_custom_call.1} parent=1 // pred_check
      _
    $region11: #{tpu_custom_call.1} parent=1 // pred_check_branch
      %41 = sbr.rel (0) target = $region13
    $region12: #{tpu_custom_call.1} parent=1 // pred_region
      %43 = vsyncadd [#allocation6], 0
      %s44 = sshll.u32 %s2, 4
      %s45 = int_to_ptr.hbm [resolvable:$true] %s44
      %s46 = sshll.u32 [#allocation7], 4
      %s47 = int_to_ptr.vmem [resolvable:$true] %s46
      %52 = dma.hbm_to_vmem [thread:$0]  %s45, 1280, %s47, [#allocation6], 128, 128, 8
    $region13: #{tpu_custom_call.1} parent=1 // pred_fallthru
      _
    // Predicated region
    $region14: #{tpu_custom_call.1} parent=1 // pred_check
      _
    $region15: #{tpu_custom_call.1} parent=1 // pred_check_branch
      %54 = sbr.rel (0) target = $region17
    $region16: #{tpu_custom_call.1} parent=1 // pred_region
      _
    $region17: #{tpu_custom_call.1} parent=1 // pred_fallthru
      _
    // Predicated region
    $region18: #{tpu_custom_call.1} parent=1 // pred_check
      _
    $region19: #{tpu_custom_call.1} parent=1 // pred_check_branch
      %56 = sbr.rel (0) target = $region21
    $region20: #{tpu_custom_call.1} parent=1 // pred_region
      %58 = vsyncadd [#allocation9], 0
      %s59 = sshll.u32 %s4, 4
      %s60 = int_to_ptr.hbm [resolvable:$true] %s59
      %s61 = sshll.u32 [#allocation8], 4
      %s62 = int_to_ptr.vmem [resolvable:$true] %s61
      %67 = dma.hbm_to_vmem [thread:$0]  %s60, 38400, %s62, [#allocation9], 512, 512, 32
    $region21: #{tpu_custom_call.1} parent=1 // pred_fallthru
      _
    // Predicated region
    $region22: #{tpu_custom_call.1} parent=1 // pred_check
      _
    $region23: #{tpu_custom_call.1} parent=1 // pred_check_branch
      %69 = sbr.rel (0) target = $region25
    $region24: #{tpu_custom_call.1} parent=1 // pred_region
      %71 = dma.done [#allocation3], 1536
    $region25: #{tpu_custom_call.1} parent=1 // pred_fallthru
      _
    // Predicated region
    $region26: #{tpu_custom_call.1} parent=1 // pred_check
      _
    $region27: #{tpu_custom_call.1} parent=1 // pred_check_branch
      %73 = sbr.rel (0) target = $region29
    $region28: #{tpu_custom_call.1} parent=1 // pred_region
      %75 = dma.done [#allocation6], 1024
    $region29: #{tpu_custom_call.1} parent=1 // pred_fallthru
      _
    // Predicated region
    $region30: #{tpu_custom_call.1} parent=1 // pred_check
      _
    $region31: #{tpu_custom_call.1} parent=1 // pred_check_branch
      %77 = sbr.rel (0) target = $region33
    $region32: #{tpu_custom_call.1} parent=1 // pred_region
      %79 = dma.done [#allocation6], 1280
    $region33: #{tpu_custom_call.1} parent=1 // pred_fallthru
      _
    // Predicated region
    $region34: #{tpu_custom_call.1} parent=1 // pred_check
      _
    $region35: #{tpu_custom_call.1} parent=1 // pred_check_branch
      %81 = sbr.rel (0) target = $region37
    $region36: #{tpu_custom_call.1} parent=1 // pred_region
      %83 = dma.done [#allocation9], 38400
    $region37: #{tpu_custom_call.1} parent=1 // pred_fallthru
      _
    %v85 = vld [vmem:[#allocation5] sm:$0xff]
    %v86 = vld [vmem:[#allocation5 + $0x8] sm:$0xff]
    %v87 = vld [vmem:[#allocation5 + $0x10] sm:$0xff]
    %v88 = vld [vmem:[#allocation5 + $0x18] sm:$0xff]
    %v89 = vld [vmem:[#allocation5 + $0x20] sm:$0x1]
    %v90 = vld [vmem:[#allocation5 + $0x28] sm:$0x1]
    %v91 = vld [vmem:[#allocation5 + $0x30] sm:$0x1]
    %v92 = vld [vmem:[#allocation5 + $0x38] sm:$0x1]
    %v93 = vld [vmem:[#allocation2] sm:$0xff]
    %v94 = vld [vmem:[#allocation2 + $0x8] sm:$0xff]
    %v95 = vld [vmem:[#allocation2 + $0x10] sm:$0xff]
    %v96 = vld [vmem:[#allocation2 + $0x18] sm:$0xff]
    %v97 = vld [vmem:[#allocation2 + $0x20] sm:$0xff]
    %v98 = vld [vmem:[#allocation2 + $0x28] sm:$0xff]
    %v99 = vld [vmem:[#allocation2 + $0x30] sm:$0xff]
    %v100 = vld [vmem:[#allocation2 + $0x38] sm:$0xff]
    %v101 = vld [vmem:[#allocation2 + $0x40] sm:$0x1]
    %v102 = vld [vmem:[#allocation2 + $0x48] sm:$0x1]
    %v103 = vld [vmem:[#allocation2 + $0x50] sm:$0x1]
    %v104 = vld [vmem:[#allocation2 + $0x58] sm:$0x1]
    %v105 = vld [vmem:[#allocation7] sm:$0xff]
    %v106 = vld [vmem:[#allocation7 + $0x8] sm:$0xff]
    %v107 = vpack.c.bf16 %v106, %v105
    %v108 = vpack.c.bf16 %v97, %v93
    %v109 = vpack.c.bf16 %v98, %v94
    %v110 = vpack.c.bf16 %v99, %v95
    %v111 = vpack.c.bf16 %v100, %v96
    %v112 = vpack.c.bf16 %v101, %v101
    %v113 = vpack.c.bf16 %v102, %v102
    %v114 = vpack.c.bf16 %v103, %v103
    %v115 = vpack.c.bf16 %v104, %v104
    %vm116 = vcmask 138240
    %v118 = vsel %vm116, %v107, 0
    %vm120 = vcmask 1040384
    %v121 = vsel 0, 4294967295, 65535
    %v122 = vsel %vm120, %v121, 0
    %v124 = vand.u32 %v112, %v122
    %v127 = vand.u32 %v113, %v122
    %v130 = vand.u32 %v114, %v122
    %v133 = vand.u32 %v115, %v122
    %135 = vmatpush.bf16.msra.mxu0 0
    %136 = vmatpush.bf16.msra.mxu0 0
    %137 = vmatpush.bf16.msra.mxu0 0
    %138 = vmatpush.bf16.msra.mxu0 0
    %139 = vmatpush.bf16.msra.mxu0 0
    %140 = vmatpush.bf16.msra.mxu0 0
    %141 = vmatpush.bf16.msra.mxu0 %v124
    %142 = vmatpush.bf16.msra.mxu0 %v108
    %143 = vmatmul.bf16.gmra.mxu0 %v118
    %v144 = vpop.f32.mrf.mxu0
    %v145 = vadd.f32 0.0, %v144
    %v146 = vpop.f32.mrf.mxu0
    %v147 = vadd.f32 0.0, %v146
    %148 = vdwg.mxu0
    %149 = vmatpush.bf16.msra.mxu0 0
    %150 = vmatpush.bf16.msra.mxu0 0
    %151 = vmatpush.bf16.msra.mxu0 0
    %152 = vmatpush.bf16.msra.mxu0 0
    %153 = vmatpush.bf16.msra.mxu0 0
    %154 = vmatpush.bf16.msra.mxu0 0
    %155 = vmatpush.bf16.msra.mxu0 %v127
    %156 = vmatpush.bf16.msra.mxu0 %v109
    %157 = vmatmul.bf16.gmra.mxu0 %v118
    %v158 = vpop.f32.mrf.mxu0
    %v159 = vadd.f32 0.0, %v158
    %v160 = vpop.f32.mrf.mxu0
    %v161 = vadd.f32 0.0, %v160
    %162 = vdwg.mxu0
    %163 = vmatpush.bf16.msra.mxu0 0
    %164 = vmatpush.bf16.msra.mxu0 0
    %165 = vmatpush.bf16.msra.mxu0 0
    %166 = vmatpush.bf16.msra.mxu0 0
    %167 = vmatpush.bf16.msra.mxu0 0
    %168 = vmatpush.bf16.msra.mxu0 0
    %169 = vmatpush.bf16.msra.mxu0 %v130
    %170 = vmatpush.bf16.msra.mxu0 %v110
    %171 = vmatmul.bf16.gmra.mxu0 %v118
    %v172 = vpop.f32.mrf.mxu0
    %v173 = vadd.f32 0.0, %v172
    %v174 = vpop.f32.mrf.mxu0
    %v175 = vadd.f32 0.0, %v174
    %176 = vdwg.mxu0
    %177 = vmatpush.bf16.msra.mxu0 0
    %178 = vmatpush.bf16.msra.mxu0 0
    %179 = vmatpush.bf16.msra.mxu0 0
    %180 = vmatpush.bf16.msra.mxu0 0
    %181 = vmatpush.bf16.msra.mxu0 0
    %182 = vmatpush.bf16.msra.mxu0 0
    %183 = vmatpush.bf16.msra.mxu0 %v133
    %184 = vmatpush.bf16.msra.mxu0 %v111
    %185 = vmatmul.bf16.gmra.mxu0 %v118
    %v186 = vpop.f32.mrf.mxu0
    %v187 = vadd.f32 0.0, %v186
    %v188 = vpop.f32.mrf.mxu0
    %v189 = vadd.f32 0.0, %v188
    %190 = vdwg.mxu0
    %v191 = vsub.f32 0.0, %v145
    %v192 = vsub.f32 0.0, %v159
    %v193 = vsub.f32 0.0, %v173
    %v194 = vsub.f32 0.0, %v187
    %v195 = vsub.f32 0.0, %v147
    %v196 = vsub.f32 0.0, %v161
    %v197 = vsub.f32 0.0, %v175
    %v198 = vsub.f32 0.0, %v189
    %v199 = vmul.f32 %v191, 1.442695
    %v200 = vpow.pop %v199
    %v201 = vmul.f32 %v192, 1.442695
    %v202 = vpow.pop %v201
    %v203 = vmul.f32 %v193, 1.442695
    %v204 = vpow.pop %v203
    %v205 = vmul.f32 %v194, 1.442695
    %v206 = vpow.pop %v205
    %v207 = vmul.f32 %v195, 1.442695
    %v208 = vpow.pop %v207
    %v209 = vmul.f32 %v196, 1.442695
    %v210 = vpow.pop %v209
    %v211 = vmul.f32 %v197, 1.442695
    %v212 = vpow.pop %v211
    %v213 = vmul.f32 %v198, 1.442695
    %v214 = vpow.pop %v213
    %v215 = vadd.f32 %v200, 1.0
    %v216 = vadd.f32 %v202, 1.0
    %v217 = vadd.f32 %v204, 1.0
    %v218 = vadd.f32 %v206, 1.0
    %v219 = vadd.f32 %v208, 1.0
    %v220 = vadd.f32 %v210, 1.0
    %v221 = vadd.f32 %v212, 1.0
    %v222 = vadd.f32 %v214, 1.0
    %v223 = vrcp.pop %v215
    %v224 = vrcp.pop %v216
    %v225 = vrcp.pop %v217
    %v226 = vrcp.pop %v218
    %v227 = vrcp.pop %v219
    %v228 = vrcp.pop %v220
    %v229 = vrcp.pop %v221
    %v230 = vrcp.pop %v222
    %v231 = vmul.f32 %v145, %v223
    %v232 = vmul.f32 %v159, %v224
    %v233 = vmul.f32 %v173, %v225
    %v234 = vmul.f32 %v187, %v226
    %v235 = vmul.f32 %v147, %v227
    %v236 = vmul.f32 %v161, %v228
    %v237 = vmul.f32 %v175, %v229
    %v238 = vmul.f32 %v189, %v230
    %239 = vrot.lane.b32.xlu0 %v235, 17
    %v240 = vpop.permute.xlu0 %239
    %241 = vrot.lane.b32.xlu0 %v236, 17
    %v242 = vpop.permute.xlu0 %241
    %243 = vrot.lane.b32.xlu0 %v237, 17
    %v244 = vpop.permute.xlu0 %243
    %245 = vrot.lane.b32.xlu0 %v238, 17
    %v246 = vpop.permute.xlu0 %245
    %v247 = vlaneseq
    %v248 = vand.u32 %v247, 127
    %vm249 = vcmp.lt.s32.totalorder %v248, 17
    %v250 = vsel %vm249, %v244, %v246
    %v251 = vsel %vm249, %v242, %v244
    %v252 = vsel %vm249, %v240, %v242
    %v253 = vsel %vm249, %v246, %v240
    %v254 = vperm.slane %v85, 0
    %v255 = vperm.slane %v86, 0
    %v256 = vperm.slane %v87, 0
    %v257 = vperm.slane %v88, 0
    %v258 = vmul.f32 %v253, %v254
    %v259 = vmul.f32 %v252, %v255
    %v260 = vmul.f32 %v251, %v256
    %v261 = vmul.f32 %v250, %v257
    %262 = vrot.lane.b32.xlu0 %v235, 16
    %v263 = vpop.permute.xlu0 %262
    %264 = vrot.lane.b32.xlu0 %v236, 16
    %v265 = vpop.permute.xlu0 %264
    %266 = vrot.lane.b32.xlu0 %v237, 16
    %v267 = vpop.permute.xlu0 %266
    %268 = vrot.lane.b32.xlu0 %v238, 16
    %v269 = vpop.permute.xlu0 %268
    %vm270 = vcmp.lt.s32.totalorder %v248, 16
    %v271 = vsel %vm270, %v267, %v269
    %v272 = vsel %vm270, %v265, %v267
    %v273 = vsel %vm270, %v263, %v265
    %v274 = vsel %vm270, %v269, %v263
    %v275 = vperm.slane %v85, 1
    %v276 = vperm.slane %v86, 1
    %v277 = vperm.slane %v87, 1
    %v278 = vperm.slane %v88, 1
    %v279 = vmul.f32 %v274, %v275
    %v280 = vmul.f32 %v273, %v276
    %v281 = vmul.f32 %v272, %v277
    %v282 = vmul.f32 %v271, %v278
    %283 = vrot.lane.b32.xlu0 %v235, 15
    %v284 = vpop.permute.xlu0 %283
    %285 = vrot.lane.b32.xlu0 %v236, 15
    %v286 = vpop.permute.xlu0 %285
    %287 = vrot.lane.b32.xlu0 %v237, 15
    %v288 = vpop.permute.xlu0 %287
    %289 = vrot.lane.b32.xlu0 %v238, 15
    %v290 = vpop.permute.xlu0 %289
    %vm291 = vcmp.lt.s32.totalorder %v248, 15
    %v292 = vsel %vm291, %v288, %v290
    %v293 = vsel %vm291, %v286, %v288
    %v294 = vsel %vm291, %v284, %v286
    %v295 = vsel %vm291, %v290, %v284
    %v296 = vperm.slane %v85, 2
    %v297 = vperm.slane %v86, 2
    %v298 = vperm.slane %v87, 2
    %v299 = vperm.slane %v88, 2
    %v300 = vmul.f32 %v295, %v296
    %v301 = vmul.f32 %v294, %v297
    %v302 = vmul.f32 %v293, %v298
    %v303 = vmul.f32 %v292, %v299
    %304 = vrot.lane.b32.xlu0 %v235, 1
    %v305 = vpop.permute.xlu0 %304
    %306 = vrot.lane.b32.xlu0 %v236, 1
    %v307 = vpop.permute.xlu0 %306
    %308 = vrot.lane.b32.xlu0 %v237, 1
    %v309 = vpop.permute.xlu0 %308
    %310 = vrot.lane.b32.xlu0 %v238, 1
    %v311 = vpop.permute.xlu0 %310
    %vm312 = vcmp.lt.s32.totalorder %v248, 1
    %v313 = vsel %vm312, %v309, %v311
    %v314 = vsel %vm312, %v307, %v309
    %v315 = vsel %vm312, %v305, %v307
    %v316 = vsel %vm312, %v311, %v305
    %v317 = vperm.slane %v85, 3
    %v318 = vperm.slane %v86, 3
    %v319 = vperm.slane %v87, 3
    %v320 = vperm.slane %v88, 3
    %v321 = vmul.f32 %v316, %v317
    %v322 = vmul.f32 %v315, %v318
    %v323 = vmul.f32 %v314, %v319
    %v324 = vmul.f32 %v313, %v320
    %325 = vrot.lane.b32.xlu0 %v235, 127
    %v326 = vpop.permute.xlu0 %325
    %327 = vrot.lane.b32.xlu0 %v236, 127
    %v328 = vpop.permute.xlu0 %327
    %329 = vrot.lane.b32.xlu0 %v237, 127
    %v330 = vpop.permute.xlu0 %329
    %331 = vrot.lane.b32.xlu0 %v238, 127
    %v332 = vpop.permute.xlu0 %331
    %vm333 = vcmp.lt.s32.totalorder %v248, 127
    %v334 = vsel %vm333, %v330, %v332
    %v335 = vsel %vm333, %v328, %v330
    %v336 = vsel %vm333, %v326, %v328
    %v337 = vsel %vm333, %v332, %v326
    %v338 = vperm.slane %v85, 5
    %v339 = vperm.slane %v86, 5
    %v340 = vperm.slane %v87, 5
    %v341 = vperm.slane %v88, 5
    %v342 = vmul.f32 %v336, %v338
    %v343 = vmul.f32 %v335, %v339
    %v344 = vmul.f32 %v334, %v340
    %v345 = vmul.f32 %v337, %v341
    %346 = vrot.lane.b32.xlu0 %v235, 113
    %v347 = vpop.permute.xlu0 %346
    %348 = vrot.lane.b32.xlu0 %v236, 113
    %v349 = vpop.permute.xlu0 %348
    %350 = vrot.lane.b32.xlu0 %v237, 113
    %v351 = vpop.permute.xlu0 %350
    %352 = vrot.lane.b32.xlu0 %v238, 113
    %v353 = vpop.permute.xlu0 %352
    %vm354 = vcmp.lt.s32.totalorder %v248, 113
    %v355 = vsel %vm354, %v351, %v353
    %v356 = vsel %vm354, %v349, %v351
    %v357 = vsel %vm354, %v347, %v349
    %v358 = vsel %vm354, %v353, %v347
    %v359 = vperm.slane %v85, 6
    %v360 = vperm.slane %v86, 6
    %v361 = vperm.slane %v87, 6
    %v362 = vperm.slane %v88, 6
    %v363 = vmul.f32 %v357, %v359
    %v364 = vmul.f32 %v356, %v360
    %v365 = vmul.f32 %v355, %v361
    %v366 = vmul.f32 %v358, %v362
    %367 = vrot.lane.b32.xlu0 %v235, 112
    %v368 = vpop.permute.xlu0 %367
    %369 = vrot.lane.b32.xlu0 %v236, 112
    %v370 = vpop.permute.xlu0 %369
    %371 = vrot.lane.b32.xlu0 %v237, 112
    %v372 = vpop.permute.xlu0 %371
    %373 = vrot.lane.b32.xlu0 %v238, 112
    %v374 = vpop.permute.xlu0 %373
    %vm375 = vcmp.lt.s32.totalorder %v248, 112
    %v376 = vsel %vm375, %v372, %v374
    %v377 = vsel %vm375, %v370, %v372
    %v378 = vsel %vm375, %v368, %v370
    %v379 = vsel %vm375, %v374, %v368
    %v380 = vperm.slane %v85, 7
    %v381 = vperm.slane %v86, 7
    %v382 = vperm.slane %v87, 7
    %v383 = vperm.slane %v88, 7
    %v384 = vmul.f32 %v378, %v380
    %v385 = vmul.f32 %v377, %v381
    %v386 = vmul.f32 %v376, %v382
    %v387 = vmul.f32 %v379, %v383
    %388 = vrot.lane.b32.xlu0 %v235, 111
    %v389 = vpop.permute.xlu0 %388
    %390 = vrot.lane.b32.xlu0 %v236, 111
    %v391 = vpop.permute.xlu0 %390
    %392 = vrot.lane.b32.xlu0 %v237, 111
    %v393 = vpop.permute.xlu0 %392
    %394 = vrot.lane.b32.xlu0 %v238, 111
    %v395 = vpop.permute.xlu0 %394
    %vm396 = vcmp.lt.s32.totalorder %v248, 111
    %v397 = vsel %vm396, %v393, %v395
    %v398 = vsel %vm396, %v391, %v393
    %v399 = vsel %vm396, %v389, %v391
    %v400 = vsel %vm396, %v395, %v389
    %v401 = vperm.slane %v89, 0
    %v402 = vperm.slane %v90, 0
    %v403 = vperm.slane %v91, 0
    %v404 = vperm.slane %v92, 0
    %v405 = vmul.f32 %v399, %v401
    %v406 = vmul.f32 %v398, %v402
    %v407 = vmul.f32 %v397, %v403
    %v408 = vmul.f32 %v400, %v404
    %v413 = vrot.slane %v85, 4
    %v414 = vrot.slane %v86, 4
    %v415 = vrot.slane %v87, 4
    %v416 = vrot.slane %v88, 4
    %v421 = vld [vmem:[#allocation7 + $0x10] sm:$0xff]
    %v422 = vpack.c.bf16 %v421, %v421
    %v423 = vpack.c.bf16 %v279, %v258
    %v424 = vpack.c.bf16 %v280, %v259
    %v425 = vpack.c.bf16 %v281, %v260
    %v426 = vpack.c.bf16 %v282, %v261
    %v427 = vpack.c.bf16 %v321, %v300
    %v428 = vpack.c.bf16 %v322, %v301
    %v429 = vpack.c.bf16 %v323, %v302
    %v430 = vpack.c.bf16 %v324, %v303
    %v431 = vpack.c.bf16 %v342, %v235
    %v432 = vpack.c.bf16 %v343, %v236
    %v433 = vpack.c.bf16 %v344, %v237
    %v434 = vpack.c.bf16 %v345, %v238
    %v435 = vpack.c.bf16 %v384, %v363
    %v436 = vpack.c.bf16 %v385, %v364
    %v437 = vpack.c.bf16 %v386, %v365
    %v438 = vpack.c.bf16 %v387, %v366
    %v439 = vpack.c.bf16 %v413, %v405
    %v440 = vpack.c.bf16 %v414, %v406
    %v441 = vpack.c.bf16 %v415, %v407
    %v442 = vpack.c.bf16 %v416, %v408
    %vm443 = vcmask 596992
    %v445 = vsel %vm443, %v422, 0
    %vm447 = vcmask 1043456
    %vm448 = vcmask 1044480
    %v449 = vsel %vm447, 4294967295, 65535
    %v450 = vsel %vm448, %v449, 0
    %v452 = vand.u32 %v439, %v450
    %v455 = vand.u32 %v440, %v450
    %v458 = vand.u32 %v441, %v450
    %v461 = vand.u32 %v442, %v450
    %463 = vmatpush.bf16.msra.mxu0 0
    %464 = vmatpush.bf16.msra.mxu0 0
    %465 = vmatpush.bf16.msra.mxu0 0
    %466 = vmatpush.bf16.msra.mxu0 %v452
    %467 = vmatpush.bf16.msra.mxu0 %v435
    %468 = vmatpush.bf16.msra.mxu0 %v431
    %469 = vmatpush.bf16.msra.mxu0 %v427
    %470 = vmatpush.bf16.msra.mxu0 %v423
    %471 = vmatmul.bf16.gmra.mxu0 %v445
    %v472 = vpop.f32.mrf.mxu0
    %v473 = vadd.f32 0.0, %v472
    %v474 = vpop.f32.mrf.mxu0
    %475 = vdwg.mxu0
    %476 = vmatpush.bf16.msra.mxu0 0
    %477 = vmatpush.bf16.msra.mxu0 0
    %478 = vmatpush.bf16.msra.mxu0 0
    %479 = vmatpush.bf16.msra.mxu0 %v455
    %480 = vmatpush.bf16.msra.mxu0 %v436
    %481 = vmatpush.bf16.msra.mxu0 %v432
    %482 = vmatpush.bf16.msra.mxu0 %v428
    %483 = vmatpush.bf16.msra.mxu0 %v424
    %484 = vmatmul.bf16.gmra.mxu0 %v445
    %v485 = vpop.f32.mrf.mxu0
    %v486 = vadd.f32 0.0, %v485
    %v487 = vpop.f32.mrf.mxu0
    %488 = vdwg.mxu0
    %489 = vmatpush.bf16.msra.mxu0 0
    %490 = vmatpush.bf16.msra.mxu0 0
    %491 = vmatpush.bf16.msra.mxu0 0
    %492 = vmatpush.bf16.msra.mxu0 %v458
    %493 = vmatpush.bf16.msra.mxu0 %v437
    %494 = vmatpush.bf16.msra.mxu0 %v433
    %495 = vmatpush.bf16.msra.mxu0 %v429
    %496 = vmatpush.bf16.msra.mxu0 %v425
    %497 = vmatmul.bf16.gmra.mxu0 %v445
    %v498 = vpop.f32.mrf.mxu0
    %v499 = vadd.f32 0.0, %v498
    %v500 = vpop.f32.mrf.mxu0
    %501 = vdwg.mxu0
    %502 = vmatpush.bf16.msra.mxu0 0
    %503 = vmatpush.bf16.msra.mxu0 0
    %504 = vmatpush.bf16.msra.mxu0 0
    %505 = vmatpush.bf16.msra.mxu0 %v461
    %506 = vmatpush.bf16.msra.mxu0 %v438
    %507 = vmatpush.bf16.msra.mxu0 %v434
    %508 = vmatpush.bf16.msra.mxu0 %v430
    %509 = vmatpush.bf16.msra.mxu0 %v426
    %510 = vmatmul.bf16.gmra.mxu0 %v445
    %v511 = vpop.f32.mrf.mxu0
    %v512 = vadd.f32 0.0, %v511
    %v513 = vpop.f32.mrf.mxu0
    %514 = vdwg.mxu0
    %v515 = vsub.f32 0.0, %v473
    %v516 = vsub.f32 0.0, %v486
    %v517 = vsub.f32 0.0, %v499
    %v518 = vsub.f32 0.0, %v512
    %v519 = vmul.f32 %v515, 1.442695
    %v520 = vpow.pop %v519
    %v521 = vmul.f32 %v516, 1.442695
    %v522 = vpow.pop %v521
    %v523 = vmul.f32 %v517, 1.442695
    %v524 = vpow.pop %v523
    %v525 = vmul.f32 %v518, 1.442695
    %v526 = vpow.pop %v525
    %v527 = vadd.f32 %v520, 1.0
    %v528 = vadd.f32 %v522, 1.0
    %v529 = vadd.f32 %v524, 1.0
    %v530 = vadd.f32 %v526, 1.0
    %v531 = vrcp.pop %v527
    %v532 = vrcp.pop %v528
    %v533 = vrcp.pop %v529
    %v534 = vrcp.pop %v530
    %v535 = vmul.f32 %v473, %v531
    %v536 = vmul.f32 %v486, %v532
    %v537 = vmul.f32 %v499, %v533
    %v538 = vmul.f32 %v512, %v534
    %v539 = vld [vmem:[#allocation8] sm:$0xff]
    %v540 = vld [vmem:[#allocation8 + $0x8] sm:$0xff]
    %v541 = vld [vmem:[#allocation8 + $0x10] sm:$0xff]
    %v542 = vld [vmem:[#allocation8 + $0x18] sm:$0xff]
    %543 = vrot.lane.b32.xlu0 %v535, 34
    %v544 = vpop.permute.xlu0 %543
    %545 = vrot.lane.b32.xlu0 %v536, 34
    %v546 = vpop.permute.xlu0 %545
    %547 = vrot.lane.b32.xlu0 %v537, 34
    %v548 = vpop.permute.xlu0 %547
    %549 = vrot.lane.b32.xlu0 %v538, 34
    %v550 = vpop.permute.xlu0 %549
    %vm551 = vcmp.lt.s32.totalorder %v248, 34
    %v552 = vsel %vm551, %v548, %v550
    %v553 = vsel %vm551, %v546, %v548
    %v554 = vsel %vm551, %v544, %v546
    %v555 = vsel %vm551, %v550, %v544
    %v556 = vmul.f32 %v539, %v555
    %v557 = vmul.f32 %v540, %v554
    %v558 = vmul.f32 %v541, %v553
    %v559 = vmul.f32 %v542, %v552
    %s560 = scalar_lea.vmem [#allocation8], 32
    %v561 = vld [vmem:[%s560] sm:$0xff]
    %v562 = vld [vmem:[%s560 + $0x8] sm:$0xff]
    %v563 = vld [vmem:[%s560 + $0x10] sm:$0xff]
    %v564 = vld [vmem:[%s560 + $0x18] sm:$0xff]
    %565 = vrot.lane.b32.xlu0 %v535, 33
    %v566 = vpop.permute.xlu0 %565
    %567 = vrot.lane.b32.xlu0 %v536, 33
    %v568 = vpop.permute.xlu0 %567
    %569 = vrot.lane.b32.xlu0 %v537, 33
    %v570 = vpop.permute.xlu0 %569
    %571 = vrot.lane.b32.xlu0 %v538, 33
    %v572 = vpop.permute.xlu0 %571
    %vm573 = vcmp.lt.s32.totalorder %v248, 33
    %v574 = vsel %vm573, %v570, %v572
    %v575 = vsel %vm573, %v568, %v570
    %v576 = vsel %vm573, %v566, %v568
    %v577 = vsel %vm573, %v572, %v566
    %v578 = vmul.f32 %v561, %v577
    %v579 = vmul.f32 %v562, %v576
    %v580 = vmul.f32 %v563, %v575
    %v581 = vmul.f32 %v564, %v574
    %v582 = vadd.f32 %v556, %v578
    %v583 = vadd.f32 %v557, %v579
    %v584 = vadd.f32 %v558, %v580
    %v585 = vadd.f32 %v559, %v581
    %s586 = scalar_lea.vmem [#allocation8], 64
    %v587 = vld [vmem:[%s586] sm:$0xff]
    %v588 = vld [vmem:[%s586 + $0x8] sm:$0xff]
    %v589 = vld [vmem:[%s586 + $0x10] sm:$0xff]
    %v590 = vld [vmem:[%s586 + $0x18] sm:$0xff]
    %591 = vrot.lane.b32.xlu0 %v535, 32
    %v592 = vpop.permute.xlu0 %591
    %593 = vrot.lane.b32.xlu0 %v536, 32
    %v594 = vpop.permute.xlu0 %593
    %595 = vrot.lane.b32.xlu0 %v537, 32
    %v596 = vpop.permute.xlu0 %595
    %597 = vrot.lane.b32.xlu0 %v538, 32
    %v598 = vpop.permute.xlu0 %597
    %vm599 = vcmp.lt.s32.totalorder %v248, 32
    %v600 = vsel %vm599, %v596, %v598
    %v601 = vsel %vm599, %v594, %v596
    %v602 = vsel %vm599, %v592, %v594
    %v603 = vsel %vm599, %v598, %v592
    %v604 = vmul.f32 %v587, %v603
    %v605 = vmul.f32 %v588, %v602
    %v606 = vmul.f32 %v589, %v601
    %v607 = vmul.f32 %v590, %v600
    %v608 = vadd.f32 %v582, %v604
    %v609 = vadd.f32 %v583, %v605
    %v610 = vadd.f32 %v584, %v606
    %v611 = vadd.f32 %v585, %v607
    %s612 = scalar_lea.vmem [#allocation8], 96
    %v613 = vld [vmem:[%s612] sm:$0xff]
    %v614 = vld [vmem:[%s612 + $0x8] sm:$0xff]
    %v615 = vld [vmem:[%s612 + $0x10] sm:$0xff]
    %v616 = vld [vmem:[%s612 + $0x18] sm:$0xff]
    %617 = vrot.lane.b32.xlu0 %v535, 31
    %v618 = vpop.permute.xlu0 %617
    %619 = vrot.lane.b32.xlu0 %v536, 31
    %v620 = vpop.permute.xlu0 %619
    %621 = vrot.lane.b32.xlu0 %v537, 31
    %v622 = vpop.permute.xlu0 %621
    %623 = vrot.lane.b32.xlu0 %v538, 31
    %v624 = vpop.permute.xlu0 %623
    %vm625 = vcmp.lt.s32.totalorder %v248, 31
    %v626 = vsel %vm625, %v622, %v624
    %v627 = vsel %vm625, %v620, %v622
    %v628 = vsel %vm625, %v618, %v620
    %v629 = vsel %vm625, %v624, %v618
    %v630 = vmul.f32 %v613, %v629
    %v631 = vmul.f32 %v614, %v628
    %v632 = vmul.f32 %v615, %v627
    %v633 = vmul.f32 %v616, %v626
    %v634 = vadd.f32 %v608, %v630
    %v635 = vadd.f32 %v609, %v631
    %v636 = vadd.f32 %v610, %v632
    %v637 = vadd.f32 %v611, %v633
    %s638 = scalar_lea.vmem [#allocation8], 128
    %v639 = vld [vmem:[%s638] sm:$0xff]
    %v640 = vld [vmem:[%s638 + $0x8] sm:$0xff]
    %v641 = vld [vmem:[%s638 + $0x10] sm:$0xff]
    %v642 = vld [vmem:[%s638 + $0x18] sm:$0xff]
    %643 = vrot.lane.b32.xlu0 %v535, 30
    %v644 = vpop.permute.xlu0 %643
    %645 = vrot.lane.b32.xlu0 %v536, 30
    %v646 = vpop.permute.xlu0 %645
    %647 = vrot.lane.b32.xlu0 %v537, 30
    %v648 = vpop.permute.xlu0 %647
    %649 = vrot.lane.b32.xlu0 %v538, 30
    %v650 = vpop.permute.xlu0 %649
    %vm651 = vcmp.lt.s32.totalorder %v248, 30
    %v652 = vsel %vm651, %v648, %v650
    %v653 = vsel %vm651, %v646, %v648
    %v654 = vsel %vm651, %v644, %v646
    %v655 = vsel %vm651, %v650, %v644
    %v656 = vmul.f32 %v639, %v655
    %v657 = vmul.f32 %v640, %v654
    %v658 = vmul.f32 %v641, %v653
    %v659 = vmul.f32 %v642, %v652
    %v660 = vadd.f32 %v634, %v656
    %v661 = vadd.f32 %v635, %v657
    %v662 = vadd.f32 %v636, %v658
    %v663 = vadd.f32 %v637, %v659
    %s664 = scalar_lea.vmem [#allocation8], 160
    %v665 = vld [vmem:[%s664] sm:$0xff]
    %v666 = vld [vmem:[%s664 + $0x8] sm:$0xff]
    %v667 = vld [vmem:[%s664 + $0x10] sm:$0xff]
    %v668 = vld [vmem:[%s664 + $0x18] sm:$0xff]
    %669 = vrot.lane.b32.xlu0 %v535, 18
    %v670 = vpop.permute.xlu0 %669
    %671 = vrot.lane.b32.xlu0 %v536, 18
    %v672 = vpop.permute.xlu0 %671
    %673 = vrot.lane.b32.xlu0 %v537, 18
    %v674 = vpop.permute.xlu0 %673
    %675 = vrot.lane.b32.xlu0 %v538, 18
    %v676 = vpop.permute.xlu0 %675
    %vm677 = vcmp.lt.s32.totalorder %v248, 18
    %v678 = vsel %vm677, %v674, %v676
    %v679 = vsel %vm677, %v672, %v674
    %v680 = vsel %vm677, %v670, %v672
    %v681 = vsel %vm677, %v676, %v670
    %v682 = vmul.f32 %v665, %v681
    %v683 = vmul.f32 %v666, %v680
    %v684 = vmul.f32 %v667, %v679
    %v685 = vmul.f32 %v668, %v678
    %v686 = vadd.f32 %v660, %v682
    %v687 = vadd.f32 %v661, %v683
    %v688 = vadd.f32 %v662, %v684
    %v689 = vadd.f32 %v663, %v685
    %s690 = scalar_lea.vmem [#allocation8], 192
    %v691 = vld [vmem:[%s690] sm:$0xff]
    %v692 = vld [vmem:[%s690 + $0x8] sm:$0xff]
    %v693 = vld [vmem:[%s690 + $0x10] sm:$0xff]
    %v694 = vld [vmem:[%s690 + $0x18] sm:$0xff]
    %695 = vrot.lane.b32.xlu0 %v535, 17
    %v696 = vpop.permute.xlu0 %695
    %697 = vrot.lane.b32.xlu0 %v536, 17
    %v698 = vpop.permute.xlu0 %697
    %699 = vrot.lane.b32.xlu0 %v537, 17
    %v700 = vpop.permute.xlu0 %699
    %701 = vrot.lane.b32.xlu0 %v538, 17
    %v702 = vpop.permute.xlu0 %701
    %v703 = vsel %vm249, %v700, %v702
    %v704 = vsel %vm249, %v698, %v700
    %v705 = vsel %vm249, %v696, %v698
    %v706 = vsel %vm249, %v702, %v696
    %v707 = vmul.f32 %v691, %v706
    %v708 = vmul.f32 %v692, %v705
    %v709 = vmul.f32 %v693, %v704
    %v710 = vmul.f32 %v694, %v703
    %v711 = vadd.f32 %v686, %v707
    %v712 = vadd.f32 %v687, %v708
    %v713 = vadd.f32 %v688, %v709
    %v714 = vadd.f32 %v689, %v710
    %s715 = scalar_lea.vmem [#allocation8], 224
    %v716 = vld [vmem:[%s715] sm:$0xff]
    %v717 = vld [vmem:[%s715 + $0x8] sm:$0xff]
    %v718 = vld [vmem:[%s715 + $0x10] sm:$0xff]
    %v719 = vld [vmem:[%s715 + $0x18] sm:$0xff]
    %720 = vrot.lane.b32.xlu0 %v535, 16
    %v721 = vpop.permute.xlu0 %720
    %722 = vrot.lane.b32.xlu0 %v536, 16
    %v723 = vpop.permute.xlu0 %722
    %724 = vrot.lane.b32.xlu0 %v537, 16
    %v725 = vpop.permute.xlu0 %724
    %726 = vrot.lane.b32.xlu0 %v538, 16
    %v727 = vpop.permute.xlu0 %726
    %v728 = vsel %vm270, %v725, %v727
    %v729 = vsel %vm270, %v723, %v725
    %v730 = vsel %vm270, %v721, %v723
    %v731 = vsel %vm270, %v727, %v721
    %v732 = vmul.f32 %v716, %v731
    %v733 = vmul.f32 %v717, %v730
    %v734 = vmul.f32 %v718, %v729
    %v735 = vmul.f32 %v719, %v728
    %v736 = vadd.f32 %v711, %v732
    %v737 = vadd.f32 %v712, %v733
    %v738 = vadd.f32 %v713, %v734
    %v739 = vadd.f32 %v714, %v735
    %s740 = scalar_lea.vmem [#allocation8], 256
    %v741 = vld [vmem:[%s740] sm:$0xff]
    %v742 = vld [vmem:[%s740 + $0x8] sm:$0xff]
    %v743 = vld [vmem:[%s740 + $0x10] sm:$0xff]
    %v744 = vld [vmem:[%s740 + $0x18] sm:$0xff]
    %745 = vrot.lane.b32.xlu0 %v535, 15
    %v746 = vpop.permute.xlu0 %745
    %747 = vrot.lane.b32.xlu0 %v536, 15
    %v748 = vpop.permute.xlu0 %747
    %749 = vrot.lane.b32.xlu0 %v537, 15
    %v750 = vpop.permute.xlu0 %749
    %751 = vrot.lane.b32.xlu0 %v538, 15
    %v752 = vpop.permute.xlu0 %751
    %v753 = vsel %vm291, %v750, %v752
    %v754 = vsel %vm291, %v748, %v750
    %v755 = vsel %vm291, %v746, %v748
    %v756 = vsel %vm291, %v752, %v746
    %v757 = vmul.f32 %v741, %v756
    %v758 = vmul.f32 %v742, %v755
    %v759 = vmul.f32 %v743, %v754
    %v760 = vmul.f32 %v744, %v753
    %v761 = vadd.f32 %v736, %v757
    %v762 = vadd.f32 %v737, %v758
    %v763 = vadd.f32 %v738, %v759
    %v764 = vadd.f32 %v739, %v760
    %s765 = scalar_lea.vmem [#allocation8], 288
    %v766 = vld [vmem:[%s765] sm:$0xff]
    %v767 = vld [vmem:[%s765 + $0x8] sm:$0xff]
    %v768 = vld [vmem:[%s765 + $0x10] sm:$0xff]
    %v769 = vld [vmem:[%s765 + $0x18] sm:$0xff]
    %770 = vrot.lane.b32.xlu0 %v535, 14
    %v771 = vpop.permute.xlu0 %770
    %772 = vrot.lane.b32.xlu0 %v536, 14
    %v773 = vpop.permute.xlu0 %772
    %774 = vrot.lane.b32.xlu0 %v537, 14
    %v775 = vpop.permute.xlu0 %774
    %776 = vrot.lane.b32.xlu0 %v538, 14
    %v777 = vpop.permute.xlu0 %776
    %vm778 = vcmp.lt.s32.totalorder %v248, 14
    %v779 = vsel %vm778, %v775, %v777
    %v780 = vsel %vm778, %v773, %v775
    %v781 = vsel %vm778, %v771, %v773
    %v782 = vsel %vm778, %v777, %v771
    %v783 = vmul.f32 %v766, %v782
    %v784 = vmul.f32 %v767, %v781
    %v785 = vmul.f32 %v768, %v780
    %v786 = vmul.f32 %v769, %v779
    %v787 = vadd.f32 %v761, %v783
    %v788 = vadd.f32 %v762, %v784
    %v789 = vadd.f32 %v763, %v785
    %v790 = vadd.f32 %v764, %v786
    %s791 = scalar_lea.vmem [#allocation8], 320
    %v792 = vld [vmem:[%s791] sm:$0xff]
    %v793 = vld [vmem:[%s791 + $0x8] sm:$0xff]
    %v794 = vld [vmem:[%s791 + $0x10] sm:$0xff]
    %v795 = vld [vmem:[%s791 + $0x18] sm:$0xff]
    %796 = vrot.lane.b32.xlu0 %v535, 2
    %v797 = vpop.permute.xlu0 %796
    %798 = vrot.lane.b32.xlu0 %v536, 2
    %v799 = vpop.permute.xlu0 %798
    %800 = vrot.lane.b32.xlu0 %v537, 2
    %v801 = vpop.permute.xlu0 %800
    %802 = vrot.lane.b32.xlu0 %v538, 2
    %v803 = vpop.permute.xlu0 %802
    %vm804 = vcmp.lt.s32.totalorder %v248, 2
    %v805 = vsel %vm804, %v801, %v803
    %v806 = vsel %vm804, %v799, %v801
    %v807 = vsel %vm804, %v797, %v799
    %v808 = vsel %vm804, %v803, %v797
    %v809 = vmul.f32 %v792, %v808
    %v810 = vmul.f32 %v793, %v807
    %v811 = vmul.f32 %v794, %v806
    %v812 = vmul.f32 %v795, %v805
    %v813 = vadd.f32 %v787, %v809
    %v814 = vadd.f32 %v788, %v810
    %v815 = vadd.f32 %v789, %v811
    %v816 = vadd.f32 %v790, %v812
    %s817 = scalar_lea.vmem [#allocation8], 352
    %v818 = vld [vmem:[%s817] sm:$0xff]
    %v819 = vld [vmem:[%s817 + $0x8] sm:$0xff]
    %v820 = vld [vmem:[%s817 + $0x10] sm:$0xff]
    %v821 = vld [vmem:[%s817 + $0x18] sm:$0xff]
    %822 = vrot.lane.b32.xlu0 %v535, 1
    %v823 = vpop.permute.xlu0 %822
    %824 = vrot.lane.b32.xlu0 %v536, 1
    %v825 = vpop.permute.xlu0 %824
    %826 = vrot.lane.b32.xlu0 %v537, 1
    %v827 = vpop.permute.xlu0 %826
    %828 = vrot.lane.b32.xlu0 %v538, 1
    %v829 = vpop.permute.xlu0 %828
    %v830 = vsel %vm312, %v827, %v829
    %v831 = vsel %vm312, %v825, %v827
    %v832 = vsel %vm312, %v823, %v825
    %v833 = vsel %vm312, %v829, %v823
    %v834 = vmul.f32 %v818, %v833
    %v835 = vmul.f32 %v819, %v832
    %v836 = vmul.f32 %v820, %v831
    %v837 = vmul.f32 %v821, %v830
    %v838 = vadd.f32 %v813, %v834
    %v839 = vadd.f32 %v814, %v835
    %v840 = vadd.f32 %v815, %v836
    %v841 = vadd.f32 %v816, %v837
    %s842 = scalar_lea.vmem [#allocation8], 384
    %v843 = vld [vmem:[%s842] sm:$0xff]
    %v844 = vld [vmem:[%s842 + $0x8] sm:$0xff]
    %v845 = vld [vmem:[%s842 + $0x10] sm:$0xff]
    %v846 = vld [vmem:[%s842 + $0x18] sm:$0xff]
    %v847 = vmul.f32 %v843, %v535
    %v848 = vmul.f32 %v844, %v536
    %v849 = vmul.f32 %v845, %v537
    %v850 = vmul.f32 %v846, %v538
    %v851 = vadd.f32 %v838, %v847
    %v852 = vadd.f32 %v839, %v848
    %v853 = vadd.f32 %v840, %v849
    %v854 = vadd.f32 %v841, %v850
    %s855 = scalar_lea.vmem [#allocation8], 416
    %v856 = vld [vmem:[%s855] sm:$0xff]
    %v857 = vld [vmem:[%s855 + $0x8] sm:$0xff]
    %v858 = vld [vmem:[%s855 + $0x10] sm:$0xff]
    %v859 = vld [vmem:[%s855 + $0x18] sm:$0xff]
    %860 = vrot.lane.b32.xlu0 %v535, 127
    %v861 = vpop.permute.xlu0 %860
    %862 = vrot.lane.b32.xlu0 %v536, 127
    %v863 = vpop.permute.xlu0 %862
    %864 = vrot.lane.b32.xlu0 %v537, 127
    %v865 = vpop.permute.xlu0 %864
    %866 = vrot.lane.b32.xlu0 %v538, 127
    %v867 = vpop.permute.xlu0 %866
    %v868 = vsel %vm333, %v865, %v867
    %v869 = vsel %vm333, %v863, %v865
    %v870 = vsel %vm333, %v861, %v863
    %v871 = vsel %vm333, %v867, %v861
    %v872 = vmul.f32 %v856, %v870
    %v873 = vmul.f32 %v857, %v869
    %v874 = vmul.f32 %v858, %v868
    %v875 = vmul.f32 %v859, %v871
    %v876 = vadd.f32 %v851, %v872
    %v877 = vadd.f32 %v852, %v873
    %v878 = vadd.f32 %v853, %v874
    %v879 = vadd.f32 %v854, %v875
    %s880 = scalar_lea.vmem [#allocation8], 448
    %v881 = vld [vmem:[%s880] sm:$0xff]
    %v882 = vld [vmem:[%s880 + $0x8] sm:$0xff]
    %v883 = vld [vmem:[%s880 + $0x10] sm:$0xff]
    %v884 = vld [vmem:[%s880 + $0x18] sm:$0xff]
    %885 = vrot.lane.b32.xlu0 %v535, 126
    %v886 = vpop.permute.xlu0 %885
    %887 = vrot.lane.b32.xlu0 %v536, 126
    %v888 = vpop.permute.xlu0 %887
    %889 = vrot.lane.b32.xlu0 %v537, 126
    %v890 = vpop.permute.xlu0 %889
    %891 = vrot.lane.b32.xlu0 %v538, 126
    %v892 = vpop.permute.xlu0 %891
    %vm893 = vcmp.lt.s32.totalorder %v248, 126
    %v894 = vsel %vm893, %v890, %v892
    %v895 = vsel %vm893, %v888, %v890
    %v896 = vsel %vm893, %v886, %v888
    %v897 = vsel %vm893, %v892, %v886
    %v898 = vmul.f32 %v881, %v896
    %v899 = vmul.f32 %v882, %v895
    %v900 = vmul.f32 %v883, %v894
    %v901 = vmul.f32 %v884, %v897
    %v902 = vadd.f32 %v876, %v898
    %v903 = vadd.f32 %v877, %v899
    %v904 = vadd.f32 %v878, %v900
    %v905 = vadd.f32 %v879, %v901
    %s906 = scalar_lea.vmem [#allocation8], 480
    %v907 = vld [vmem:[%s906] sm:$0xff]
    %v908 = vld [vmem:[%s906 + $0x8] sm:$0xff]
    %v909 = vld [vmem:[%s906 + $0x10] sm:$0xff]
    %v910 = vld [vmem:[%s906 + $0x18] sm:$0xff]
    %911 = vrot.lane.b32.xlu0 %v535, 114
    %v912 = vpop.permute.xlu0 %911
    %913 = vrot.lane.b32.xlu0 %v536, 114
    %v914 = vpop.permute.xlu0 %913
    %915 = vrot.lane.b32.xlu0 %v537, 114
    %v916 = vpop.permute.xlu0 %915
    %917 = vrot.lane.b32.xlu0 %v538, 114
    %v918 = vpop.permute.xlu0 %917
    %vm919 = vcmp.lt.s32.totalorder %v248, 114
    %v920 = vsel %vm919, %v916, %v918
    %v921 = vsel %vm919, %v914, %v916
    %v922 = vsel %vm919, %v912, %v914
    %v923 = vsel %vm919, %v918, %v912
    %v924 = vmul.f32 %v907, %v922
    %v925 = vmul.f32 %v908, %v921
    %v926 = vmul.f32 %v909, %v920
    %v927 = vmul.f32 %v910, %v923
    %v928 = vadd.f32 %v902, %v924
    %v929 = vadd.f32 %v903, %v925
    %v930 = vadd.f32 %v904, %v926
    %v931 = vadd.f32 %v905, %v927
    %s932 = scalar_lea.vmem [#allocation8], 512
    %v933 = vld [vmem:[%s932] sm:$0xff]
    %v934 = vld [vmem:[%s932 + $0x8] sm:$0xff]
    %v935 = vld [vmem:[%s932 + $0x10] sm:$0xff]
    %v936 = vld [vmem:[%s932 + $0x18] sm:$0xff]
    %937 = vrot.lane.b32.xlu0 %v535, 113
    %v938 = vpop.permute.xlu0 %937
    %939 = vrot.lane.b32.xlu0 %v536, 113
    %v940 = vpop.permute.xlu0 %939
    %941 = vrot.lane.b32.xlu0 %v537, 113
    %v942 = vpop.permute.xlu0 %941
    %943 = vrot.lane.b32.xlu0 %v538, 113
    %v944 = vpop.permute.xlu0 %943
    %v945 = vsel %vm354, %v942, %v944
    %v946 = vsel %vm354, %v940, %v942
    %v947 = vsel %vm354, %v938, %v940
    %v948 = vsel %vm354, %v944, %v938
    %v949 = vmul.f32 %v933, %v947
    %v950 = vmul.f32 %v934, %v946
    %v951 = vmul.f32 %v935, %v945
    %v952 = vmul.f32 %v936, %v948
    %v953 = vadd.f32 %v928, %v949
    %v954 = vadd.f32 %v929, %v950
    %v955 = vadd.f32 %v930, %v951
    %v956 = vadd.f32 %v931, %v952
    %s957 = scalar_lea.vmem [#allocation8], 544
    %v958 = vld [vmem:[%s957] sm:$0xff]
    %v959 = vld [vmem:[%s957 + $0x8] sm:$0xff]
    %v960 = vld [vmem:[%s957 + $0x10] sm:$0xff]
    %v961 = vld [vmem:[%s957 + $0x18] sm:$0xff]
    %962 = vrot.lane.b32.xlu0 %v535, 112
    %v963 = vpop.permute.xlu0 %962
    %964 = vrot.lane.b32.xlu0 %v536, 112
    %v965 = vpop.permute.xlu0 %964
    %966 = vrot.lane.b32.xlu0 %v537, 112
    %v967 = vpop.permute.xlu0 %966
    %968 = vrot.lane.b32.xlu0 %v538, 112
    %v969 = vpop.permute.xlu0 %968
    %v970 = vsel %vm375, %v967, %v969
    %v971 = vsel %vm375, %v965, %v967
    %v972 = vsel %vm375, %v963, %v965
    %v973 = vsel %vm375, %v969, %v963
    %v974 = vmul.f32 %v958, %v972
    %v975 = vmul.f32 %v959, %v971
    %v976 = vmul.f32 %v960, %v970
    %v977 = vmul.f32 %v961, %v973
    %v978 = vadd.f32 %v953, %v974
    %v979 = vadd.f32 %v954, %v975
    %v980 = vadd.f32 %v955, %v976
    %v981 = vadd.f32 %v956, %v977
    %s982 = scalar_lea.vmem [#allocation8], 576
    %v983 = vld [vmem:[%s982] sm:$0xff]
    %v984 = vld [vmem:[%s982 + $0x8] sm:$0xff]
    %v985 = vld [vmem:[%s982 + $0x10] sm:$0xff]
    %v986 = vld [vmem:[%s982 + $0x18] sm:$0xff]
    %987 = vrot.lane.b32.xlu0 %v535, 111
    %v988 = vpop.permute.xlu0 %987
    %989 = vrot.lane.b32.xlu0 %v536, 111
    %v990 = vpop.permute.xlu0 %989
    %991 = vrot.lane.b32.xlu0 %v537, 111
    %v992 = vpop.permute.xlu0 %991
    %993 = vrot.lane.b32.xlu0 %v538, 111
    %v994 = vpop.permute.xlu0 %993
    %v995 = vsel %vm396, %v992, %v994
    %v996 = vsel %vm396, %v990, %v992
    %v997 = vsel %vm396, %v988, %v990
    %v998 = vsel %vm396, %v994, %v988
    %v999 = vmul.f32 %v983, %v997
    %v1000 = vmul.f32 %v984, %v996
    %v1001 = vmul.f32 %v985, %v995
    %v1002 = vmul.f32 %v986, %v998
    %v1003 = vadd.f32 %v978, %v999
    %v1004 = vadd.f32 %v979, %v1000
    %v1005 = vadd.f32 %v980, %v1001
    %v1006 = vadd.f32 %v981, %v1002
    %s1007 = scalar_lea.vmem [#allocation8], 608
    %v1008 = vld [vmem:[%s1007] sm:$0xff]
    %v1009 = vld [vmem:[%s1007 + $0x8] sm:$0xff]
    %v1010 = vld [vmem:[%s1007 + $0x10] sm:$0xff]
    %v1011 = vld [vmem:[%s1007 + $0x18] sm:$0xff]
    %1012 = vrot.lane.b32.xlu0 %v535, 110
    %v1013 = vpop.permute.xlu0 %1012
    %1014 = vrot.lane.b32.xlu0 %v536, 110
    %v1015 = vpop.permute.xlu0 %1014
    %1016 = vrot.lane.b32.xlu0 %v537, 110
    %v1017 = vpop.permute.xlu0 %1016
    %1018 = vrot.lane.b32.xlu0 %v538, 110
    %v1019 = vpop.permute.xlu0 %1018
    %vm1020 = vcmp.lt.s32.totalorder %v248, 110
    %v1021 = vsel %vm1020, %v1017, %v1019
    %v1022 = vsel %vm1020, %v1015, %v1017
    %v1023 = vsel %vm1020, %v1013, %v1015
    %v1024 = vsel %vm1020, %v1019, %v1013
    %v1025 = vmul.f32 %v1008, %v1023
    %v1026 = vmul.f32 %v1009, %v1022
    %v1027 = vmul.f32 %v1010, %v1021
    %v1028 = vmul.f32 %v1011, %v1024
    %v1029 = vadd.f32 %v1003, %v1025
    %v1030 = vadd.f32 %v1004, %v1026
    %v1031 = vadd.f32 %v1005, %v1027
    %v1032 = vadd.f32 %v1006, %v1028
    %s1033 = scalar_lea.vmem [#allocation8], 640
    %v1034 = vld [vmem:[%s1033] sm:$0xff]
    %v1035 = vld [vmem:[%s1033 + $0x8] sm:$0xff]
    %v1036 = vld [vmem:[%s1033 + $0x10] sm:$0xff]
    %v1037 = vld [vmem:[%s1033 + $0x18] sm:$0xff]
    %1038 = vrot.lane.b32.xlu0 %v535, 98
    %v1039 = vpop.permute.xlu0 %1038
    %1040 = vrot.lane.b32.xlu0 %v536, 98
    %v1041 = vpop.permute.xlu0 %1040
    %1042 = vrot.lane.b32.xlu0 %v537, 98
    %v1043 = vpop.permute.xlu0 %1042
    %1044 = vrot.lane.b32.xlu0 %v538, 98
    %v1045 = vpop.permute.xlu0 %1044
    %vm1046 = vcmp.lt.s32.totalorder %v248, 98
    %v1047 = vsel %vm1046, %v1043, %v1045
    %v1048 = vsel %vm1046, %v1041, %v1043
    %v1049 = vsel %vm1046, %v1039, %v1041
    %v1050 = vsel %vm1046, %v1045, %v1039
    %v1051 = vmul.f32 %v1034, %v1049
    %v1052 = vmul.f32 %v1035, %v1048
    %v1053 = vmul.f32 %v1036, %v1047
    %v1054 = vmul.f32 %v1037, %v1050
    %v1055 = vadd.f32 %v1029, %v1051
    %v1056 = vadd.f32 %v1030, %v1052
    %v1057 = vadd.f32 %v1031, %v1053
    %v1058 = vadd.f32 %v1032, %v1054
    %s1059 = scalar_lea.vmem [#allocation8], 672
    %v1060 = vld [vmem:[%s1059] sm:$0xff]
    %v1061 = vld [vmem:[%s1059 + $0x8] sm:$0xff]
    %v1062 = vld [vmem:[%s1059 + $0x10] sm:$0xff]
    %v1063 = vld [vmem:[%s1059 + $0x18] sm:$0xff]
    %1064 = vrot.lane.b32.xlu0 %v535, 97
    %v1065 = vpop.permute.xlu0 %1064
    %1066 = vrot.lane.b32.xlu0 %v536, 97
    %v1067 = vpop.permute.xlu0 %1066
    %1068 = vrot.lane.b32.xlu0 %v537, 97
    %v1069 = vpop.permute.xlu0 %1068
    %1070 = vrot.lane.b32.xlu0 %v538, 97
    %v1071 = vpop.permute.xlu0 %1070
    %vm1072 = vcmp.lt.s32.totalorder %v248, 97
    %v1073 = vsel %vm1072, %v1069, %v1071
    %v1074 = vsel %vm1072, %v1067, %v1069
    %v1075 = vsel %vm1072, %v1065, %v1067
    %v1076 = vsel %vm1072, %v1071, %v1065
    %v1077 = vmul.f32 %v1060, %v1075
    %v1078 = vmul.f32 %v1061, %v1074
    %v1079 = vmul.f32 %v1062, %v1073
    %v1080 = vmul.f32 %v1063, %v1076
    %v1081 = vadd.f32 %v1055, %v1077
    %v1082 = vadd.f32 %v1056, %v1078
    %v1083 = vadd.f32 %v1057, %v1079
    %v1084 = vadd.f32 %v1058, %v1080
    %s1085 = scalar_lea.vmem [#allocation8], 704
    %v1086 = vld [vmem:[%s1085] sm:$0xff]
    %v1087 = vld [vmem:[%s1085 + $0x8] sm:$0xff]
    %v1088 = vld [vmem:[%s1085 + $0x10] sm:$0xff]
    %v1089 = vld [vmem:[%s1085 + $0x18] sm:$0xff]
    %1090 = vrot.lane.b32.xlu0 %v535, 96
    %v1091 = vpop.permute.xlu0 %1090
    %1092 = vrot.lane.b32.xlu0 %v536, 96
    %v1093 = vpop.permute.xlu0 %1092
    %1094 = vrot.lane.b32.xlu0 %v537, 96
    %v1095 = vpop.permute.xlu0 %1094
    %1096 = vrot.lane.b32.xlu0 %v538, 96
    %v1097 = vpop.permute.xlu0 %1096
    %vm1098 = vcmp.lt.s32.totalorder %v248, 96
    %v1099 = vsel %vm1098, %v1095, %v1097
    %v1100 = vsel %vm1098, %v1093, %v1095
    %v1101 = vsel %vm1098, %v1091, %v1093
    %v1102 = vsel %vm1098, %v1097, %v1091
    %v1103 = vmul.f32 %v1086, %v1101
    %v1104 = vmul.f32 %v1087, %v1100
    %v1105 = vmul.f32 %v1088, %v1099
    %v1106 = vmul.f32 %v1089, %v1102
    %v1107 = vadd.f32 %v1081, %v1103
    %v1108 = vadd.f32 %v1082, %v1104
    %v1109 = vadd.f32 %v1083, %v1105
    %v1110 = vadd.f32 %v1084, %v1106
    %s1111 = scalar_lea.vmem [#allocation8], 736
    %v1112 = vld [vmem:[%s1111] sm:$0xff]
    %v1113 = vld [vmem:[%s1111 + $0x8] sm:$0xff]
    %v1114 = vld [vmem:[%s1111 + $0x10] sm:$0xff]
    %v1115 = vld [vmem:[%s1111 + $0x18] sm:$0xff]
    %1116 = vrot.lane.b32.xlu0 %v535, 95
    %v1117 = vpop.permute.xlu0 %1116
    %1118 = vrot.lane.b32.xlu0 %v536, 95
    %v1119 = vpop.permute.xlu0 %1118
    %1120 = vrot.lane.b32.xlu0 %v537, 95
    %v1121 = vpop.permute.xlu0 %1120
    %1122 = vrot.lane.b32.xlu0 %v538, 95
    %v1123 = vpop.permute.xlu0 %1122
    %vm1124 = vcmp.lt.s32.totalorder %v248, 95
    %v1125 = vsel %vm1124, %v1121, %v1123
    %v1126 = vsel %vm1124, %v1119, %v1121
    %v1127 = vsel %vm1124, %v1117, %v1119
    %v1128 = vsel %vm1124, %v1123, %v1117
    %v1129 = vmul.f32 %v1112, %v1127
    %v1130 = vmul.f32 %v1113, %v1126
    %v1131 = vmul.f32 %v1114, %v1125
    %v1132 = vmul.f32 %v1115, %v1128
    %v1133 = vadd.f32 %v1107, %v1129
    %v1134 = vadd.f32 %v1108, %v1130
    %v1135 = vadd.f32 %v1109, %v1131
    %v1136 = vadd.f32 %v1110, %v1132
    %s1137 = scalar_lea.vmem [#allocation8], 768
    %v1138 = vld [vmem:[%s1137] sm:$0xff]
    %v1139 = vld [vmem:[%s1137 + $0x8] sm:$0xff]
    %v1140 = vld [vmem:[%s1137 + $0x10] sm:$0xff]
    %v1141 = vld [vmem:[%s1137 + $0x18] sm:$0xff]
    %1142 = vrot.lane.b32.xlu0 %v535, 94
    %v1143 = vpop.permute.xlu0 %1142
    %1144 = vrot.lane.b32.xlu0 %v536, 94
    %v1145 = vpop.permute.xlu0 %1144
    %1146 = vrot.lane.b32.xlu0 %v537, 94
    %v1147 = vpop.permute.xlu0 %1146
    %1148 = vrot.lane.b32.xlu0 %v538, 94
    %v1149 = vpop.permute.xlu0 %1148
    %vm1150 = vcmp.lt.s32.totalorder %v248, 94
    %v1151 = vsel %vm1150, %v1147, %v1149
    %v1152 = vsel %vm1150, %v1145, %v1147
    %v1153 = vsel %vm1150, %v1143, %v1145
    %v1154 = vsel %vm1150, %v1149, %v1143
    %v1155 = vmul.f32 %v1138, %v1153
    %v1156 = vmul.f32 %v1139, %v1152
    %v1157 = vmul.f32 %v1140, %v1151
    %v1158 = vmul.f32 %v1141, %v1154
    %v1159 = vadd.f32 %v1133, %v1155
    %v1160 = vadd.f32 %v1134, %v1156
    %v1161 = vadd.f32 %v1135, %v1157
    %v1162 = vadd.f32 %v1136, %v1158
    %v1163 = vld [vmem:[%s3] sm:$0xff]
    %1165 = vset.pattern.permute.xlu0 0
    %1166 = vperm.xlu0 %1165, %v1163
    %v1167 = vpop.permute.xlu0 %1166
    %v1169 = vadd.f32 %v1159, %v1167
    %v1170 = vadd.f32 %v1160, %v1167
    %v1171 = vadd.f32 %v1161, %v1167
    %v1172 = vadd.f32 %v1162, %v1167
    %v1173 = vmax.f32 %v1169, 0.0
    %v1174 = vmax.f32 %v1170, 0.0
    %v1175 = vmax.f32 %v1171, 0.0
    %v1176 = vmax.f32 %v1172, 0.0
    %v1177 = vld [vmem:[#allocation7 + $0x18] sm:$0xff]
    %v1178 = vpack.c.bf16 %v1177, %v1177
    %v1179 = vpack.c.bf16 %v1173, %v1173
    %v1180 = vpack.c.bf16 %v1174, %v1174
    %v1181 = vpack.c.bf16 %v1175, %v1175
    %v1182 = vpack.c.bf16 %v1176, %v1176
    %v1183 = vld [vmem:[%s3 + $0x8] sm:$0xff]
    %1185 = vset.pattern.permute.xlu0 0
    %1186 = vperm.xlu0 %1185, %v1183
    %v1187 = vpop.permute.xlu0 %1186
    %vm1189 = vcmask 64512
    %v1191 = vsel %vm1189, %v1178, 0
    %v1194 = vsel %vm447, %v1179, 0
    %v1197 = vsel %vm447, %v1180, 0
    %v1200 = vsel %vm447, %v1181, 0
    %v1203 = vsel %vm447, %v1182, 0
    %1205 = vmatpush.bf16.msra.mxu0 0
    %1206 = vmatpush.bf16.msra.mxu0 0
    %1207 = vmatpush.bf16.msra.mxu0 0
    %1208 = vmatpush.bf16.msra.mxu0 0
    %1209 = vmatpush.bf16.msra.mxu0 0
    %1210 = vmatpush.bf16.msra.mxu0 0
    %1211 = vmatpush.bf16.msra.mxu0 0
    %1212 = vmatpush.bf16.msra.mxu0 %v1194
    %1213 = vmatmul.bf16.gmra.mxu0 %v1191
    %v1214 = vpop.f32.mrf.mxu0
    %v1215 = vadd.f32 %v1187, %v1214
    %v1216 = vpop.f32.mrf.mxu0
    %1217 = vdwg.mxu0
    %1218 = vmatpush.bf16.msra.mxu0 0
    %1219 = vmatpush.bf16.msra.mxu0 0
    %1220 = vmatpush.bf16.msra.mxu0 0
    %1221 = vmatpush.bf16.msra.mxu0 0
    %1222 = vmatpush.bf16.msra.mxu0 0
    %1223 = vmatpush.bf16.msra.mxu0 0
    %1224 = vmatpush.bf16.msra.mxu0 0
    %1225 = vmatpush.bf16.msra.mxu0 %v1197
    %1226 = vmatmul.bf16.gmra.mxu0 %v1191
    %v1227 = vpop.f32.mrf.mxu0
    %v1228 = vadd.f32 %v1187, %v1227
    %v1229 = vpop.f32.mrf.mxu0
    %1230 = vdwg.mxu0
    %1231 = vmatpush.bf16.msra.mxu0 0
    %1232 = vmatpush.bf16.msra.mxu0 0
    %1233 = vmatpush.bf16.msra.mxu0 0
    %1234 = vmatpush.bf16.msra.mxu0 0
    %1235 = vmatpush.bf16.msra.mxu0 0
    %1236 = vmatpush.bf16.msra.mxu0 0
    %1237 = vmatpush.bf16.msra.mxu0 0
    %1238 = vmatpush.bf16.msra.mxu0 %v1200
    %1239 = vmatmul.bf16.gmra.mxu0 %v1191
    %v1240 = vpop.f32.mrf.mxu0
    %v1241 = vadd.f32 %v1187, %v1240
    %v1242 = vpop.f32.mrf.mxu0
    %1243 = vdwg.mxu0
    %1244 = vmatpush.bf16.msra.mxu0 0
    %1245 = vmatpush.bf16.msra.mxu0 0
    %1246 = vmatpush.bf16.msra.mxu0 0
    %1247 = vmatpush.bf16.msra.mxu0 0
    %1248 = vmatpush.bf16.msra.mxu0 0
    %1249 = vmatpush.bf16.msra.mxu0 0
    %1250 = vmatpush.bf16.msra.mxu0 0
    %1251 = vmatpush.bf16.msra.mxu0 %v1203
    %1252 = vmatmul.bf16.gmra.mxu0 %v1191
    %v1253 = vpop.f32.mrf.mxu0
    %v1254 = vadd.f32 %v1187, %v1253
    %v1255 = vpop.f32.mrf.mxu0
    %1256 = vdwg.mxu0
    %v1257 = vmax.f32 %v1215, 0.0
    %v1258 = vmax.f32 %v1228, 0.0
    %v1259 = vmax.f32 %v1241, 0.0
    %v1260 = vmax.f32 %v1254, 0.0
    %v1261 = vadd.f32 %v235, %v1257
    %v1262 = vadd.f32 %v236, %v1258
    %v1263 = vadd.f32 %v237, %v1259
    %v1264 = vadd.f32 %v238, %v1260
    %1265 = vrot.lane.b32.xlu0 %v1261, 17
    %v1266 = vpop.permute.xlu0 %1265
    %1267 = vrot.lane.b32.xlu0 %v1262, 17
    %v1268 = vpop.permute.xlu0 %1267
    %1269 = vrot.lane.b32.xlu0 %v1263, 17
    %v1270 = vpop.permute.xlu0 %1269
    %1271 = vrot.lane.b32.xlu0 %v1264, 17
    %v1272 = vpop.permute.xlu0 %1271
    %v1273 = vsel %vm249, %v1270, %v1272
    %v1274 = vsel %vm249, %v1268, %v1270
    %v1275 = vsel %vm249, %v1266, %v1268
    %v1276 = vsel %vm249, %v1272, %v1266
    %v1277 = vmul.f32 %v1276, %v254
    %v1278 = vmul.f32 %v1275, %v255
    %v1279 = vmul.f32 %v1274, %v256
    %v1280 = vmul.f32 %v1273, %v257
    %1281 = vrot.lane.b32.xlu0 %v1261, 16
    %v1282 = vpop.permute.xlu0 %1281
    %1283 = vrot.lane.b32.xlu0 %v1262, 16
    %v1284 = vpop.permute.xlu0 %1283
    %1285 = vrot.lane.b32.xlu0 %v1263, 16
    %v1286 = vpop.permute.xlu0 %1285
    %1287 = vrot.lane.b32.xlu0 %v1264, 16
    %v1288 = vpop.permute.xlu0 %1287
    %v1289 = vsel %vm270, %v1286, %v1288
    %v1290 = vsel %vm270, %v1284, %v1286
    %v1291 = vsel %vm270, %v1282, %v1284
    %v1292 = vsel %vm270, %v1288, %v1282
    %v1293 = vmul.f32 %v1292, %v275
    %v1294 = vmul.f32 %v1291, %v276
    %v1295 = vmul.f32 %v1290, %v277
    %v1296 = vmul.f32 %v1289, %v278
    %1297 = vrot.lane.b32.xlu0 %v1261, 15
    %v1298 = vpop.permute.xlu0 %1297
    %1299 = vrot.lane.b32.xlu0 %v1262, 15
    %v1300 = vpop.permute.xlu0 %1299
    %1301 = vrot.lane.b32.xlu0 %v1263, 15
    %v1302 = vpop.permute.xlu0 %1301
    %1303 = vrot.lane.b32.xlu0 %v1264, 15
    %v1304 = vpop.permute.xlu0 %1303
    %v1305 = vsel %vm291, %v1302, %v1304
    %v1306 = vsel %vm291, %v1300, %v1302
    %v1307 = vsel %vm291, %v1298, %v1300
    %v1308 = vsel %vm291, %v1304, %v1298
    %v1309 = vmul.f32 %v1308, %v296
    %v1310 = vmul.f32 %v1307, %v297
    %v1311 = vmul.f32 %v1306, %v298
    %v1312 = vmul.f32 %v1305, %v299
    %1313 = vrot.lane.b32.xlu0 %v1261, 1
    %v1314 = vpop.permute.xlu0 %1313
    %1315 = vrot.lane.b32.xlu0 %v1262, 1
    %v1316 = vpop.permute.xlu0 %1315
    %1317 = vrot.lane.b32.xlu0 %v1263, 1
    %v1318 = vpop.permute.xlu0 %1317
    %1319 = vrot.lane.b32.xlu0 %v1264, 1
    %v1320 = vpop.permute.xlu0 %1319
    %v1321 = vsel %vm312, %v1318, %v1320
    %v1322 = vsel %vm312, %v1316, %v1318
    %v1323 = vsel %vm312, %v1314, %v1316
    %v1324 = vsel %vm312, %v1320, %v1314
    %v1325 = vmul.f32 %v1324, %v317
    %v1326 = vmul.f32 %v1323, %v318
    %v1327 = vmul.f32 %v1322, %v319
    %v1328 = vmul.f32 %v1321, %v320
    %1329 = vrot.lane.b32.xlu0 %v1261, 127
    %v1330 = vpop.permute.xlu0 %1329
    %1331 = vrot.lane.b32.xlu0 %v1262, 127
    %v1332 = vpop.permute.xlu0 %1331
    %1333 = vrot.lane.b32.xlu0 %v1263, 127
    %v1334 = vpop.permute.xlu0 %1333
    %1335 = vrot.lane.b32.xlu0 %v1264, 127
    %v1336 = vpop.permute.xlu0 %1335
    %v1337 = vsel %vm333, %v1334, %v1336
    %v1338 = vsel %vm333, %v1332, %v1334
    %v1339 = vsel %vm333, %v1330, %v1332
    %v1340 = vsel %vm333, %v1336, %v1330
    %v1341 = vmul.f32 %v1339, %v338
    %v1342 = vmul.f32 %v1338, %v339
    %v1343 = vmul.f32 %v1337, %v340
    %v1344 = vmul.f32 %v1340, %v341
    %1345 = vrot.lane.b32.xlu0 %v1261, 113
    %v1346 = vpop.permute.xlu0 %1345
    %1347 = vrot.lane.b32.xlu0 %v1262, 113
    %v1348 = vpop.permute.xlu0 %1347
    %1349 = vrot.lane.b32.xlu0 %v1263, 113
    %v1350 = vpop.permute.xlu0 %1349
    %1351 = vrot.lane.b32.xlu0 %v1264, 113
    %v1352 = vpop.permute.xlu0 %1351
    %v1353 = vsel %vm354, %v1350, %v1352
    %v1354 = vsel %vm354, %v1348, %v1350
    %v1355 = vsel %vm354, %v1346, %v1348
    %v1356 = vsel %vm354, %v1352, %v1346
    %v1357 = vmul.f32 %v1355, %v359
    %v1358 = vmul.f32 %v1354, %v360
    %v1359 = vmul.f32 %v1353, %v361
    %v1360 = vmul.f32 %v1356, %v362
    %1361 = vrot.lane.b32.xlu0 %v1261, 112
    %v1362 = vpop.permute.xlu0 %1361
    %1363 = vrot.lane.b32.xlu0 %v1262, 112
    %v1364 = vpop.permute.xlu0 %1363
    %1365 = vrot.lane.b32.xlu0 %v1263, 112
    %v1366 = vpop.permute.xlu0 %1365
    %1367 = vrot.lane.b32.xlu0 %v1264, 112
    %v1368 = vpop.permute.xlu0 %1367
    %v1369 = vsel %vm375, %v1366, %v1368
    %v1370 = vsel %vm375, %v1364, %v1366
    %v1371 = vsel %vm375, %v1362, %v1364
    %v1372 = vsel %vm375, %v1368, %v1362
    %v1373 = vmul.f32 %v1371, %v380
    %v1374 = vmul.f32 %v1370, %v381
    %v1375 = vmul.f32 %v1369, %v382
    %v1376 = vmul.f32 %v1372, %v383
    %1377 = vrot.lane.b32.xlu0 %v1261, 111
    %v1378 = vpop.permute.xlu0 %1377
    %1379 = vrot.lane.b32.xlu0 %v1262, 111
    %v1380 = vpop.permute.xlu0 %1379
    %1381 = vrot.lane.b32.xlu0 %v1263, 111
    %v1382 = vpop.permute.xlu0 %1381
    %1383 = vrot.lane.b32.xlu0 %v1264, 111
    %v1384 = vpop.permute.xlu0 %1383
    %v1385 = vsel %vm396, %v1382, %v1384
    %v1386 = vsel %vm396, %v1380, %v1382
    %v1387 = vsel %vm396, %v1378, %v1380
    %v1388 = vsel %vm396, %v1384, %v1378
    %v1389 = vmul.f32 %v1387, %v401
    %v1390 = vmul.f32 %v1386, %v402
    %v1391 = vmul.f32 %v1385, %v403
    %v1392 = vmul.f32 %v1388, %v404
    %v1393 = vld [vmem:[#allocation7 + $0x20] sm:$0xff]
    %v1394 = vpack.c.bf16 %v1393, %v1393
    %v1395 = vpack.c.bf16 %v1293, %v1277
    %v1396 = vpack.c.bf16 %v1294, %v1278
    %v1397 = vpack.c.bf16 %v1295, %v1279
    %v1398 = vpack.c.bf16 %v1296, %v1280
    %v1399 = vpack.c.bf16 %v1325, %v1309
    %v1400 = vpack.c.bf16 %v1326, %v1310
    %v1401 = vpack.c.bf16 %v1327, %v1311
    %v1402 = vpack.c.bf16 %v1328, %v1312
    %v1403 = vpack.c.bf16 %v1341, %v1261
    %v1404 = vpack.c.bf16 %v1342, %v1262
    %v1405 = vpack.c.bf16 %v1343, %v1263
    %v1406 = vpack.c.bf16 %v1344, %v1264
    %v1407 = vpack.c.bf16 %v1373, %v1357
    %v1408 = vpack.c.bf16 %v1374, %v1358
    %v1409 = vpack.c.bf16 %v1375, %v1359
    %v1410 = vpack.c.bf16 %v1376, %v1360
    %v1411 = vpack.c.bf16 %v413, %v1389
    %v1412 = vpack.c.bf16 %v414, %v1390
    %v1413 = vpack.c.bf16 %v415, %v1391
    %v1414 = vpack.c.bf16 %v416, %v1392
    %v1416 = vsel %vm443, %v1394, 0
    %v1419 = vand.u32 %v1411, %v450
    %v1422 = vand.u32 %v1412, %v450
    %v1425 = vand.u32 %v1413, %v450
    %v1428 = vand.u32 %v1414, %v450
    %1430 = vmatpush.bf16.msra.mxu0 0
    %1431 = vmatpush.bf16.msra.mxu0 0
    %1432 = vmatpush.bf16.msra.mxu0 0
    %1433 = vmatpush.bf16.msra.mxu0 %v1419
    %1434 = vmatpush.bf16.msra.mxu0 %v1407
    %1435 = vmatpush.bf16.msra.mxu0 %v1403
    %1436 = vmatpush.bf16.msra.mxu0 %v1399
    %1437 = vmatpush.bf16.msra.mxu0 %v1395
    %1438 = vmatmul.bf16.gmra.mxu0 %v1416
    %v1439 = vpop.f32.mrf.mxu0
    %v1440 = vadd.f32 0.0, %v1439
    %v1441 = vpop.f32.mrf.mxu0
    %1442 = vdwg.mxu0
    %1443 = vmatpush.bf16.msra.mxu0 0
    %1444 = vmatpush.bf16.msra.mxu0 0
    %1445 = vmatpush.bf16.msra.mxu0 0
    %1446 = vmatpush.bf16.msra.mxu0 %v1422
    %1447 = vmatpush.bf16.msra.mxu0 %v1408
    %1448 = vmatpush.bf16.msra.mxu0 %v1404
    %1449 = vmatpush.bf16.msra.mxu0 %v1400
    %1450 = vmatpush.bf16.msra.mxu0 %v1396
    %1451 = vmatmul.bf16.gmra.mxu0 %v1416
    %v1452 = vpop.f32.mrf.mxu0
    %v1453 = vadd.f32 0.0, %v1452
    %v1454 = vpop.f32.mrf.mxu0
    %1455 = vdwg.mxu0
    %1456 = vmatpush.bf16.msra.mxu0 0
    %1457 = vmatpush.bf16.msra.mxu0 0
    %1458 = vmatpush.bf16.msra.mxu0 0
    %1459 = vmatpush.bf16.msra.mxu0 %v1425
    %1460 = vmatpush.bf16.msra.mxu0 %v1409
    %1461 = vmatpush.bf16.msra.mxu0 %v1405
    %1462 = vmatpush.bf16.msra.mxu0 %v1401
    %1463 = vmatpush.bf16.msra.mxu0 %v1397
    %1464 = vmatmul.bf16.gmra.mxu0 %v1416
    %v1465 = vpop.f32.mrf.mxu0
    %v1466 = vadd.f32 0.0, %v1465
    %v1467 = vpop.f32.mrf.mxu0
    %1468 = vdwg.mxu0
    %1469 = vmatpush.bf16.msra.mxu0 0
    %1470 = vmatpush.bf16.msra.mxu0 0
    %1471 = vmatpush.bf16.msra.mxu0 0
    %1472 = vmatpush.bf16.msra.mxu0 %v1428
    %1473 = vmatpush.bf16.msra.mxu0 %v1410
    %1474 = vmatpush.bf16.msra.mxu0 %v1406
    %1475 = vmatpush.bf16.msra.mxu0 %v1402
    %1476 = vmatpush.bf16.msra.mxu0 %v1398
    %1477 = vmatmul.bf16.gmra.mxu0 %v1416
    %v1478 = vpop.f32.mrf.mxu0
    %v1479 = vadd.f32 0.0, %v1478
    %v1480 = vpop.f32.mrf.mxu0
    %1481 = vdwg.mxu0
    %v1482 = vsub.f32 0.0, %v1440
    %v1483 = vsub.f32 0.0, %v1453
    %v1484 = vsub.f32 0.0, %v1466
    %v1485 = vsub.f32 0.0, %v1479
    %v1486 = vmul.f32 %v1482, 1.442695
    %v1487 = vpow.pop %v1486
    %v1488 = vmul.f32 %v1483, 1.442695
    %v1489 = vpow.pop %v1488
    %v1490 = vmul.f32 %v1484, 1.442695
    %v1491 = vpow.pop %v1490
    %v1492 = vmul.f32 %v1485, 1.442695
    %v1493 = vpow.pop %v1492
    %v1494 = vadd.f32 %v1487, 1.0
    %v1495 = vadd.f32 %v1489, 1.0
    %v1496 = vadd.f32 %v1491, 1.0
    %v1497 = vadd.f32 %v1493, 1.0
    %v1498 = vrcp.pop %v1494
    %v1499 = vrcp.pop %v1495
    %v1500 = vrcp.pop %v1496
    %v1501 = vrcp.pop %v1497
    %v1502 = vmul.f32 %v1440, %v1498
    %v1503 = vmul.f32 %v1453, %v1499
    %v1504 = vmul.f32 %v1466, %v1500
    %v1505 = vmul.f32 %v1479, %v1501
    %s1506 = scalar_lea.vmem [#allocation8], 800
    %v1507 = vld [vmem:[%s1506] sm:$0xff]
    %v1508 = vld [vmem:[%s1506 + $0x8] sm:$0xff]
    %v1509 = vld [vmem:[%s1506 + $0x10] sm:$0xff]
    %v1510 = vld [vmem:[%s1506 + $0x18] sm:$0xff]
    %1511 = vrot.lane.b32.xlu0 %v1502, 34
    %v1512 = vpop.permute.xlu0 %1511
    %1513 = vrot.lane.b32.xlu0 %v1503, 34
    %v1514 = vpop.permute.xlu0 %1513
    %1515 = vrot.lane.b32.xlu0 %v1504, 34
    %v1516 = vpop.permute.xlu0 %1515
    %1517 = vrot.lane.b32.xlu0 %v1505, 34
    %v1518 = vpop.permute.xlu0 %1517
    %v1519 = vsel %vm551, %v1516, %v1518
    %v1520 = vsel %vm551, %v1514, %v1516
    %v1521 = vsel %vm551, %v1512, %v1514
    %v1522 = vsel %vm551, %v1518, %v1512
    %v1523 = vmul.f32 %v1507, %v1522
    %v1524 = vmul.f32 %v1508, %v1521
    %v1525 = vmul.f32 %v1509, %v1520
    %v1526 = vmul.f32 %v1510, %v1519
    %s1527 = scalar_lea.vmem [#allocation8], 832
    %v1528 = vld [vmem:[%s1527] sm:$0xff]
    %v1529 = vld [vmem:[%s1527 + $0x8] sm:$0xff]
    %v1530 = vld [vmem:[%s1527 + $0x10] sm:$0xff]
    %v1531 = vld [vmem:[%s1527 + $0x18] sm:$0xff]
    %1532 = vrot.lane.b32.xlu0 %v1502, 33
    %v1533 = vpop.permute.xlu0 %1532
    %1534 = vrot.lane.b32.xlu0 %v1503, 33
    %v1535 = vpop.permute.xlu0 %1534
    %1536 = vrot.lane.b32.xlu0 %v1504, 33
    %v1537 = vpop.permute.xlu0 %1536
    %1538 = vrot.lane.b32.xlu0 %v1505, 33
    %v1539 = vpop.permute.xlu0 %1538
    %v1540 = vsel %vm573, %v1537, %v1539
    %v1541 = vsel %vm573, %v1535, %v1537
    %v1542 = vsel %vm573, %v1533, %v1535
    %v1543 = vsel %vm573, %v1539, %v1533
    %v1544 = vmul.f32 %v1528, %v1543
    %v1545 = vmul.f32 %v1529, %v1542
    %v1546 = vmul.f32 %v1530, %v1541
    %v1547 = vmul.f32 %v1531, %v1540
    %v1548 = vadd.f32 %v1523, %v1544
    %v1549 = vadd.f32 %v1524, %v1545
    %v1550 = vadd.f32 %v1525, %v1546
    %v1551 = vadd.f32 %v1526, %v1547
    %s1552 = scalar_lea.vmem [#allocation8], 864
    %v1553 = vld [vmem:[%s1552] sm:$0xff]
    %v1554 = vld [vmem:[%s1552 + $0x8] sm:$0xff]
    %v1555 = vld [vmem:[%s1552 + $0x10] sm:$0xff]
    %v1556 = vld [vmem:[%s1552 + $0x18] sm:$0xff]
    %1557 = vrot.lane.b32.xlu0 %v1502, 32
    %v1558 = vpop.permute.xlu0 %1557
    %1559 = vrot.lane.b32.xlu0 %v1503, 32
    %v1560 = vpop.permute.xlu0 %1559
    %1561 = vrot.lane.b32.xlu0 %v1504, 32
    %v1562 = vpop.permute.xlu0 %1561
    %1563 = vrot.lane.b32.xlu0 %v1505, 32
    %v1564 = vpop.permute.xlu0 %1563
    %v1565 = vsel %vm599, %v1562, %v1564
    %v1566 = vsel %vm599, %v1560, %v1562
    %v1567 = vsel %vm599, %v1558, %v1560
    %v1568 = vsel %vm599, %v1564, %v1558
    %v1569 = vmul.f32 %v1553, %v1568
    %v1570 = vmul.f32 %v1554, %v1567
    %v1571 = vmul.f32 %v1555, %v1566
    %v1572 = vmul.f32 %v1556, %v1565
    %v1573 = vadd.f32 %v1548, %v1569
    %v1574 = vadd.f32 %v1549, %v1570
    %v1575 = vadd.f32 %v1550, %v1571
    %v1576 = vadd.f32 %v1551, %v1572
    %s1577 = scalar_lea.vmem [#allocation8], 896
    %v1578 = vld [vmem:[%s1577] sm:$0xff]
    %v1579 = vld [vmem:[%s1577 + $0x8] sm:$0xff]
    %v1580 = vld [vmem:[%s1577 + $0x10] sm:$0xff]
    %v1581 = vld [vmem:[%s1577 + $0x18] sm:$0xff]
    %1582 = vrot.lane.b32.xlu0 %v1502, 31
    %v1583 = vpop.permute.xlu0 %1582
    %1584 = vrot.lane.b32.xlu0 %v1503, 31
    %v1585 = vpop.permute.xlu0 %1584
    %1586 = vrot.lane.b32.xlu0 %v1504, 31
    %v1587 = vpop.permute.xlu0 %1586
    %1588 = vrot.lane.b32.xlu0 %v1505, 31
    %v1589 = vpop.permute.xlu0 %1588
    %v1590 = vsel %vm625, %v1587, %v1589
    %v1591 = vsel %vm625, %v1585, %v1587
    %v1592 = vsel %vm625, %v1583, %v1585
    %v1593 = vsel %vm625, %v1589, %v1583
    %v1594 = vmul.f32 %v1578, %v1593
    %v1595 = vmul.f32 %v1579, %v1592
    %v1596 = vmul.f32 %v1580, %v1591
    %v1597 = vmul.f32 %v1581, %v1590
    %v1598 = vadd.f32 %v1573, %v1594
    %v1599 = vadd.f32 %v1574, %v1595
    %v1600 = vadd.f32 %v1575, %v1596
    %v1601 = vadd.f32 %v1576, %v1597
    %s1602 = scalar_lea.vmem [#allocation8], 928
    %v1603 = vld [vmem:[%s1602] sm:$0xff]
    %v1604 = vld [vmem:[%s1602 + $0x8] sm:$0xff]
    %v1605 = vld [vmem:[%s1602 + $0x10] sm:$0xff]
    %v1606 = vld [vmem:[%s1602 + $0x18] sm:$0xff]
    %1607 = vrot.lane.b32.xlu0 %v1502, 30
    %v1608 = vpop.permute.xlu0 %1607
    %1609 = vrot.lane.b32.xlu0 %v1503, 30
    %v1610 = vpop.permute.xlu0 %1609
    %1611 = vrot.lane.b32.xlu0 %v1504, 30
    %v1612 = vpop.permute.xlu0 %1611
    %1613 = vrot.lane.b32.xlu0 %v1505, 30
    %v1614 = vpop.permute.xlu0 %1613
    %v1615 = vsel %vm651, %v1612, %v1614
    %v1616 = vsel %vm651, %v1610, %v1612
    %v1617 = vsel %vm651, %v1608, %v1610
    %v1618 = vsel %vm651, %v1614, %v1608
    %v1619 = vmul.f32 %v1603, %v1618
    %v1620 = vmul.f32 %v1604, %v1617
    %v1621 = vmul.f32 %v1605, %v1616
    %v1622 = vmul.f32 %v1606, %v1615
    %v1623 = vadd.f32 %v1598, %v1619
    %v1624 = vadd.f32 %v1599, %v1620
    %v1625 = vadd.f32 %v1600, %v1621
    %v1626 = vadd.f32 %v1601, %v1622
    %s1627 = scalar_lea.vmem [#allocation8], 960
    %v1628 = vld [vmem:[%s1627] sm:$0xff]
    %v1629 = vld [vmem:[%s1627 + $0x8] sm:$0xff]
    %v1630 = vld [vmem:[%s1627 + $0x10] sm:$0xff]
    %v1631 = vld [vmem:[%s1627 + $0x18] sm:$0xff]
    %1632 = vrot.lane.b32.xlu0 %v1502, 18
    %v1633 = vpop.permute.xlu0 %1632
    %1634 = vrot.lane.b32.xlu0 %v1503, 18
    %v1635 = vpop.permute.xlu0 %1634
    %1636 = vrot.lane.b32.xlu0 %v1504, 18
    %v1637 = vpop.permute.xlu0 %1636
    %1638 = vrot.lane.b32.xlu0 %v1505, 18
    %v1639 = vpop.permute.xlu0 %1638
    %v1640 = vsel %vm677, %v1637, %v1639
    %v1641 = vsel %vm677, %v1635, %v1637
    %v1642 = vsel %vm677, %v1633, %v1635
    %v1643 = vsel %vm677, %v1639, %v1633
    %v1644 = vmul.f32 %v1628, %v1643
    %v1645 = vmul.f32 %v1629, %v1642
    %v1646 = vmul.f32 %v1630, %v1641
    %v1647 = vmul.f32 %v1631, %v1640
    %v1648 = vadd.f32 %v1623, %v1644
    %v1649 = vadd.f32 %v1624, %v1645
    %v1650 = vadd.f32 %v1625, %v1646
    %v1651 = vadd.f32 %v1626, %v1647
    %s1652 = scalar_lea.vmem [#allocation8], 992
    %v1653 = vld [vmem:[%s1652] sm:$0xff]
    %v1654 = vld [vmem:[%s1652 + $0x8] sm:$0xff]
    %v1655 = vld [vmem:[%s1652 + $0x10] sm:$0xff]
    %v1656 = vld [vmem:[%s1652 + $0x18] sm:$0xff]
    %1657 = vrot.lane.b32.xlu0 %v1502, 17
    %v1658 = vpop.permute.xlu0 %1657
    %1659 = vrot.lane.b32.xlu0 %v1503, 17
    %v1660 = vpop.permute.xlu0 %1659
    %1661 = vrot.lane.b32.xlu0 %v1504, 17
    %v1662 = vpop.permute.xlu0 %1661
    %1663 = vrot.lane.b32.xlu0 %v1505, 17
    %v1664 = vpop.permute.xlu0 %1663
    %v1665 = vsel %vm249, %v1662, %v1664
    %v1666 = vsel %vm249, %v1660, %v1662
    %v1667 = vsel %vm249, %v1658, %v1660
    %v1668 = vsel %vm249, %v1664, %v1658
    %v1669 = vmul.f32 %v1653, %v1668
    %v1670 = vmul.f32 %v1654, %v1667
    %v1671 = vmul.f32 %v1655, %v1666
    %v1672 = vmul.f32 %v1656, %v1665
    %v1673 = vadd.f32 %v1648, %v1669
    %v1674 = vadd.f32 %v1649, %v1670
    %v1675 = vadd.f32 %v1650, %v1671
    %v1676 = vadd.f32 %v1651, %v1672
    %s1677 = scalar_lea.vmem [#allocation8], 1024
    %v1678 = vld [vmem:[%s1677] sm:$0xff]
    %v1679 = vld [vmem:[%s1677 + $0x8] sm:$0xff]
    %v1680 = vld [vmem:[%s1677 + $0x10] sm:$0xff]
    %v1681 = vld [vmem:[%s1677 + $0x18] sm:$0xff]
    %1682 = vrot.lane.b32.xlu0 %v1502, 16
    %v1683 = vpop.permute.xlu0 %1682
    %1684 = vrot.lane.b32.xlu0 %v1503, 16
    %v1685 = vpop.permute.xlu0 %1684
    %1686 = vrot.lane.b32.xlu0 %v1504, 16
    %v1687 = vpop.permute.xlu0 %1686
    %1688 = vrot.lane.b32.xlu0 %v1505, 16
    %v1689 = vpop.permute.xlu0 %1688
    %v1690 = vsel %vm270, %v1687, %v1689
    %v1691 = vsel %vm270, %v1685, %v1687
    %v1692 = vsel %vm270, %v1683, %v1685
    %v1693 = vsel %vm270, %v1689, %v1683
    %v1694 = vmul.f32 %v1678, %v1693
    %v1695 = vmul.f32 %v1679, %v1692
    %v1696 = vmul.f32 %v1680, %v1691
    %v1697 = vmul.f32 %v1681, %v1690
    %v1698 = vadd.f32 %v1673, %v1694
    %v1699 = vadd.f32 %v1674, %v1695
    %v1700 = vadd.f32 %v1675, %v1696
    %v1701 = vadd.f32 %v1676, %v1697
    %s1702 = scalar_lea.vmem [#allocation8], 1056
    %v1703 = vld [vmem:[%s1702] sm:$0xff]
    %v1704 = vld [vmem:[%s1702 + $0x8] sm:$0xff]
    %v1705 = vld [vmem:[%s1702 + $0x10] sm:$0xff]
    %v1706 = vld [vmem:[%s1702 + $0x18] sm:$0xff]
    %1707 = vrot.lane.b32.xlu0 %v1502, 15
    %v1708 = vpop.permute.xlu0 %1707
    %1709 = vrot.lane.b32.xlu0 %v1503, 15
    %v1710 = vpop.permute.xlu0 %1709
    %1711 = vrot.lane.b32.xlu0 %v1504, 15
    %v1712 = vpop.permute.xlu0 %1711
    %1713 = vrot.lane.b32.xlu0 %v1505, 15
    %v1714 = vpop.permute.xlu0 %1713
    %v1715 = vsel %vm291, %v1712, %v1714
    %v1716 = vsel %vm291, %v1710, %v1712
    %v1717 = vsel %vm291, %v1708, %v1710
    %v1718 = vsel %vm291, %v1714, %v1708
    %v1719 = vmul.f32 %v1703, %v1718
    %v1720 = vmul.f32 %v1704, %v1717
    %v1721 = vmul.f32 %v1705, %v1716
    %v1722 = vmul.f32 %v1706, %v1715
    %v1723 = vadd.f32 %v1698, %v1719
    %v1724 = vadd.f32 %v1699, %v1720
    %v1725 = vadd.f32 %v1700, %v1721
    %v1726 = vadd.f32 %v1701, %v1722
    %s1727 = scalar_lea.vmem [#allocation8], 1088
    %v1728 = vld [vmem:[%s1727] sm:$0xff]
    %v1729 = vld [vmem:[%s1727 + $0x8] sm:$0xff]
    %v1730 = vld [vmem:[%s1727 + $0x10] sm:$0xff]
    %v1731 = vld [vmem:[%s1727 + $0x18] sm:$0xff]
    %1732 = vrot.lane.b32.xlu0 %v1502, 14
    %v1733 = vpop.permute.xlu0 %1732
    %1734 = vrot.lane.b32.xlu0 %v1503, 14
    %v1735 = vpop.permute.xlu0 %1734
    %1736 = vrot.lane.b32.xlu0 %v1504, 14
    %v1737 = vpop.permute.xlu0 %1736
    %1738 = vrot.lane.b32.xlu0 %v1505, 14
    %v1739 = vpop.permute.xlu0 %1738
    %v1740 = vsel %vm778, %v1737, %v1739
    %v1741 = vsel %vm778, %v1735, %v1737
    %v1742 = vsel %vm778, %v1733, %v1735
    %v1743 = vsel %vm778, %v1739, %v1733
    %v1744 = vmul.f32 %v1728, %v1743
    %v1745 = vmul.f32 %v1729, %v1742
    %v1746 = vmul.f32 %v1730, %v1741
    %v1747 = vmul.f32 %v1731, %v1740
    %v1748 = vadd.f32 %v1723, %v1744
    %v1749 = vadd.f32 %v1724, %v1745
    %v1750 = vadd.f32 %v1725, %v1746
    %v1751 = vadd.f32 %v1726, %v1747
    %s1752 = scalar_lea.vmem [#allocation8], 1120
    %v1753 = vld [vmem:[%s1752] sm:$0xff]
    %v1754 = vld [vmem:[%s1752 + $0x8] sm:$0xff]
    %v1755 = vld [vmem:[%s1752 + $0x10] sm:$0xff]
    %v1756 = vld [vmem:[%s1752 + $0x18] sm:$0xff]
    %1757 = vrot.lane.b32.xlu0 %v1502, 2
    %v1758 = vpop.permute.xlu0 %1757
    %1759 = vrot.lane.b32.xlu0 %v1503, 2
    %v1760 = vpop.permute.xlu0 %1759
    %1761 = vrot.lane.b32.xlu0 %v1504, 2
    %v1762 = vpop.permute.xlu0 %1761
    %1763 = vrot.lane.b32.xlu0 %v1505, 2
    %v1764 = vpop.permute.xlu0 %1763
    %v1765 = vsel %vm804, %v1762, %v1764
    %v1766 = vsel %vm804, %v1760, %v1762
    %v1767 = vsel %vm804, %v1758, %v1760
    %v1768 = vsel %vm804, %v1764, %v1758
    %v1769 = vmul.f32 %v1753, %v1768
    %v1770 = vmul.f32 %v1754, %v1767
    %v1771 = vmul.f32 %v1755, %v1766
    %v1772 = vmul.f32 %v1756, %v1765
    %v1773 = vadd.f32 %v1748, %v1769
    %v1774 = vadd.f32 %v1749, %v1770
    %v1775 = vadd.f32 %v1750, %v1771
    %v1776 = vadd.f32 %v1751, %v1772
    %s1777 = scalar_lea.vmem [#allocation8], 1152
    %v1778 = vld [vmem:[%s1777] sm:$0xff]
    %v1779 = vld [vmem:[%s1777 + $0x8] sm:$0xff]
    %v1780 = vld [vmem:[%s1777 + $0x10] sm:$0xff]
    %v1781 = vld [vmem:[%s1777 + $0x18] sm:$0xff]
    %1782 = vrot.lane.b32.xlu0 %v1502, 1
    %v1783 = vpop.permute.xlu0 %1782
    %1784 = vrot.lane.b32.xlu0 %v1503, 1
    %v1785 = vpop.permute.xlu0 %1784
    %1786 = vrot.lane.b32.xlu0 %v1504, 1
    %v1787 = vpop.permute.xlu0 %1786
    %1788 = vrot.lane.b32.xlu0 %v1505, 1
    %v1789 = vpop.permute.xlu0 %1788
    %v1790 = vsel %vm312, %v1787, %v1789
    %v1791 = vsel %vm312, %v1785, %v1787
    %v1792 = vsel %vm312, %v1783, %v1785
    %v1793 = vsel %vm312, %v1789, %v1783
    %v1794 = vmul.f32 %v1778, %v1793
    %v1795 = vmul.f32 %v1779, %v1792
    %v1796 = vmul.f32 %v1780, %v1791
    %v1797 = vmul.f32 %v1781, %v1790
    %v1798 = vadd.f32 %v1773, %v1794
    %v1799 = vadd.f32 %v1774, %v1795
    %v1800 = vadd.f32 %v1775, %v1796
    %v1801 = vadd.f32 %v1776, %v1797
    %s1802 = scalar_lea.vmem [#allocation8], 1184
    %v1803 = vld [vmem:[%s1802] sm:$0xff]
    %v1804 = vld [vmem:[%s1802 + $0x8] sm:$0xff]
    %v1805 = vld [vmem:[%s1802 + $0x10] sm:$0xff]
    %v1806 = vld [vmem:[%s1802 + $0x18] sm:$0xff]
    %v1807 = vmul.f32 %v1803, %v1502
    %v1808 = vmul.f32 %v1804, %v1503
    %v1809 = vmul.f32 %v1805, %v1504
    %v1810 = vmul.f32 %v1806, %v1505
    %v1811 = vadd.f32 %v1798, %v1807
    %v1812 = vadd.f32 %v1799, %v1808
    %v1813 = vadd.f32 %v1800, %v1809
    %v1814 = vadd.f32 %v1801, %v1810
    %s1815 = scalar_lea.vmem [#allocation8], 1216
    %v1816 = vld [vmem:[%s1815] sm:$0xff]
    %v1817 = vld [vmem:[%s1815 + $0x8] sm:$0xff]
    %v1818 = vld [vmem:[%s1815 + $0x10] sm:$0xff]
    %v1819 = vld [vmem:[%s1815 + $0x18] sm:$0xff]
    %1820 = vrot.lane.b32.xlu0 %v1502, 127
    %v1821 = vpop.permute.xlu0 %1820
    %1822 = vrot.lane.b32.xlu0 %v1503, 127
    %v1823 = vpop.permute.xlu0 %1822
    %1824 = vrot.lane.b32.xlu0 %v1504, 127
    %v1825 = vpop.permute.xlu0 %1824
    %1826 = vrot.lane.b32.xlu0 %v1505, 127
    %v1827 = vpop.permute.xlu0 %1826
    %v1828 = vsel %vm333, %v1825, %v1827
    %v1829 = vsel %vm333, %v1823, %v1825
    %v1830 = vsel %vm333, %v1821, %v1823
    %v1831 = vsel %vm333, %v1827, %v1821
    %v1832 = vmul.f32 %v1816, %v1830
    %v1833 = vmul.f32 %v1817, %v1829
    %v1834 = vmul.f32 %v1818, %v1828
    %v1835 = vmul.f32 %v1819, %v1831
    %v1836 = vadd.f32 %v1811, %v1832
    %v1837 = vadd.f32 %v1812, %v1833
    %v1838 = vadd.f32 %v1813, %v1834
    %v1839 = vadd.f32 %v1814, %v1835
    %s1840 = scalar_lea.vmem [#allocation8], 1248
    %v1841 = vld [vmem:[%s1840] sm:$0xff]
    %v1842 = vld [vmem:[%s1840 + $0x8] sm:$0xff]
    %v1843 = vld [vmem:[%s1840 + $0x10] sm:$0xff]
    %v1844 = vld [vmem:[%s1840 + $0x18] sm:$0xff]
    %1845 = vrot.lane.b32.xlu0 %v1502, 126
    %v1846 = vpop.permute.xlu0 %1845
    %1847 = vrot.lane.b32.xlu0 %v1503, 126
    %v1848 = vpop.permute.xlu0 %1847
    %1849 = vrot.lane.b32.xlu0 %v1504, 126
    %v1850 = vpop.permute.xlu0 %1849
    %1851 = vrot.lane.b32.xlu0 %v1505, 126
    %v1852 = vpop.permute.xlu0 %1851
    %v1853 = vsel %vm893, %v1850, %v1852
    %v1854 = vsel %vm893, %v1848, %v1850
    %v1855 = vsel %vm893, %v1846, %v1848
    %v1856 = vsel %vm893, %v1852, %v1846
    %v1857 = vmul.f32 %v1841, %v1855
    %v1858 = vmul.f32 %v1842, %v1854
    %v1859 = vmul.f32 %v1843, %v1853
    %v1860 = vmul.f32 %v1844, %v1856
    %v1861 = vadd.f32 %v1836, %v1857
    %v1862 = vadd.f32 %v1837, %v1858
    %v1863 = vadd.f32 %v1838, %v1859
    %v1864 = vadd.f32 %v1839, %v1860
    %s1865 = scalar_lea.vmem [#allocation8], 1280
    %v1866 = vld [vmem:[%s1865] sm:$0xff]
    %v1867 = vld [vmem:[%s1865 + $0x8] sm:$0xff]
    %v1868 = vld [vmem:[%s1865 + $0x10] sm:$0xff]
    %v1869 = vld [vmem:[%s1865 + $0x18] sm:$0xff]
    %1870 = vrot.lane.b32.xlu0 %v1502, 114
    %v1871 = vpop.permute.xlu0 %1870
    %1872 = vrot.lane.b32.xlu0 %v1503, 114
    %v1873 = vpop.permute.xlu0 %1872
    %1874 = vrot.lane.b32.xlu0 %v1504, 114
    %v1875 = vpop.permute.xlu0 %1874
    %1876 = vrot.lane.b32.xlu0 %v1505, 114
    %v1877 = vpop.permute.xlu0 %1876
    %v1878 = vsel %vm919, %v1875, %v1877
    %v1879 = vsel %vm919, %v1873, %v1875
    %v1880 = vsel %vm919, %v1871, %v1873
    %v1881 = vsel %vm919, %v1877, %v1871
    %v1882 = vmul.f32 %v1866, %v1880
    %v1883 = vmul.f32 %v1867, %v1879
    %v1884 = vmul.f32 %v1868, %v1878
    %v1885 = vmul.f32 %v1869, %v1881
    %v1886 = vadd.f32 %v1861, %v1882
    %v1887 = vadd.f32 %v1862, %v1883
    %v1888 = vadd.f32 %v1863, %v1884
    %v1889 = vadd.f32 %v1864, %v1885
    %s1890 = scalar_lea.vmem [#allocation8], 1312
    %v1891 = vld [vmem:[%s1890] sm:$0xff]
    %v1892 = vld [vmem:[%s1890 + $0x8] sm:$0xff]
    %v1893 = vld [vmem:[%s1890 + $0x10] sm:$0xff]
    %v1894 = vld [vmem:[%s1890 + $0x18] sm:$0xff]
    %1895 = vrot.lane.b32.xlu0 %v1502, 113
    %v1896 = vpop.permute.xlu0 %1895
    %1897 = vrot.lane.b32.xlu0 %v1503, 113
    %v1898 = vpop.permute.xlu0 %1897
    %1899 = vrot.lane.b32.xlu0 %v1504, 113
    %v1900 = vpop.permute.xlu0 %1899
    %1901 = vrot.lane.b32.xlu0 %v1505, 113
    %v1902 = vpop.permute.xlu0 %1901
    %v1903 = vsel %vm354, %v1900, %v1902
    %v1904 = vsel %vm354, %v1898, %v1900
    %v1905 = vsel %vm354, %v1896, %v1898
    %v1906 = vsel %vm354, %v1902, %v1896
    %v1907 = vmul.f32 %v1891, %v1905
    %v1908 = vmul.f32 %v1892, %v1904
    %v1909 = vmul.f32 %v1893, %v1903
    %v1910 = vmul.f32 %v1894, %v1906
    %v1911 = vadd.f32 %v1886, %v1907
    %v1912 = vadd.f32 %v1887, %v1908
    %v1913 = vadd.f32 %v1888, %v1909
    %v1914 = vadd.f32 %v1889, %v1910
    %s1915 = scalar_lea.vmem [#allocation8], 1344
    %v1916 = vld [vmem:[%s1915] sm:$0xff]
    %v1917 = vld [vmem:[%s1915 + $0x8] sm:$0xff]
    %v1918 = vld [vmem:[%s1915 + $0x10] sm:$0xff]
    %v1919 = vld [vmem:[%s1915 + $0x18] sm:$0xff]
    %1920 = vrot.lane.b32.xlu0 %v1502, 112
    %v1921 = vpop.permute.xlu0 %1920
    %1922 = vrot.lane.b32.xlu0 %v1503, 112
    %v1923 = vpop.permute.xlu0 %1922
    %1924 = vrot.lane.b32.xlu0 %v1504, 112
    %v1925 = vpop.permute.xlu0 %1924
    %1926 = vrot.lane.b32.xlu0 %v1505, 112
    %v1927 = vpop.permute.xlu0 %1926
    %v1928 = vsel %vm375, %v1925, %v1927
    %v1929 = vsel %vm375, %v1923, %v1925
    %v1930 = vsel %vm375, %v1921, %v1923
    %v1931 = vsel %vm375, %v1927, %v1921
    %v1932 = vmul.f32 %v1916, %v1930
    %v1933 = vmul.f32 %v1917, %v1929
    %v1934 = vmul.f32 %v1918, %v1928
    %v1935 = vmul.f32 %v1919, %v1931
    %v1936 = vadd.f32 %v1911, %v1932
    %v1937 = vadd.f32 %v1912, %v1933
    %v1938 = vadd.f32 %v1913, %v1934
    %v1939 = vadd.f32 %v1914, %v1935
    %s1940 = scalar_lea.vmem [#allocation8], 1376
    %v1941 = vld [vmem:[%s1940] sm:$0xff]
    %v1942 = vld [vmem:[%s1940 + $0x8] sm:$0xff]
    %v1943 = vld [vmem:[%s1940 + $0x10] sm:$0xff]
    %v1944 = vld [vmem:[%s1940 + $0x18] sm:$0xff]
    %1945 = vrot.lane.b32.xlu0 %v1502, 111
    %v1946 = vpop.permute.xlu0 %1945
    %1947 = vrot.lane.b32.xlu0 %v1503, 111
    %v1948 = vpop.permute.xlu0 %1947
    %1949 = vrot.lane.b32.xlu0 %v1504, 111
    %v1950 = vpop.permute.xlu0 %1949
    %1951 = vrot.lane.b32.xlu0 %v1505, 111
    %v1952 = vpop.permute.xlu0 %1951
    %v1953 = vsel %vm396, %v1950, %v1952
    %v1954 = vsel %vm396, %v1948, %v1950
    %v1955 = vsel %vm396, %v1946, %v1948
    %v1956 = vsel %vm396, %v1952, %v1946
    %v1957 = vmul.f32 %v1941, %v1955
    %v1958 = vmul.f32 %v1942, %v1954
    %v1959 = vmul.f32 %v1943, %v1953
    %v1960 = vmul.f32 %v1944, %v1956
    %v1961 = vadd.f32 %v1936, %v1957
    %v1962 = vadd.f32 %v1937, %v1958
    %v1963 = vadd.f32 %v1938, %v1959
    %v1964 = vadd.f32 %v1939, %v1960
    %s1965 = scalar_lea.vmem [#allocation8], 1408
    %v1966 = vld [vmem:[%s1965] sm:$0xff]
    %v1967 = vld [vmem:[%s1965 + $0x8] sm:$0xff]
    %v1968 = vld [vmem:[%s1965 + $0x10] sm:$0xff]
    %v1969 = vld [vmem:[%s1965 + $0x18] sm:$0xff]
    %1970 = vrot.lane.b32.xlu0 %v1502, 110
    %v1971 = vpop.permute.xlu0 %1970
    %1972 = vrot.lane.b32.xlu0 %v1503, 110
    %v1973 = vpop.permute.xlu0 %1972
    %1974 = vrot.lane.b32.xlu0 %v1504, 110
    %v1975 = vpop.permute.xlu0 %1974
    %1976 = vrot.lane.b32.xlu0 %v1505, 110
    %v1977 = vpop.permute.xlu0 %1976
    %v1978 = vsel %vm1020, %v1975, %v1977
    %v1979 = vsel %vm1020, %v1973, %v1975
    %v1980 = vsel %vm1020, %v1971, %v1973
    %v1981 = vsel %vm1020, %v1977, %v1971
    %v1982 = vmul.f32 %v1966, %v1980
    %v1983 = vmul.f32 %v1967, %v1979
    %v1984 = vmul.f32 %v1968, %v1978
    %v1985 = vmul.f32 %v1969, %v1981
    %v1986 = vadd.f32 %v1961, %v1982
    %v1987 = vadd.f32 %v1962, %v1983
    %v1988 = vadd.f32 %v1963, %v1984
    %v1989 = vadd.f32 %v1964, %v1985
    %s1990 = scalar_lea.vmem [#allocation8], 1440
    %v1991 = vld [vmem:[%s1990] sm:$0xff]
    %v1992 = vld [vmem:[%s1990 + $0x8] sm:$0xff]
    %v1993 = vld [vmem:[%s1990 + $0x10] sm:$0xff]
    %v1994 = vld [vmem:[%s1990 + $0x18] sm:$0xff]
    %1995 = vrot.lane.b32.xlu0 %v1502, 98
    %v1996 = vpop.permute.xlu0 %1995
    %1997 = vrot.lane.b32.xlu0 %v1503, 98
    %v1998 = vpop.permute.xlu0 %1997
    %1999 = vrot.lane.b32.xlu0 %v1504, 98
    %v2000 = vpop.permute.xlu0 %1999
    %2001 = vrot.lane.b32.xlu0 %v1505, 98
    %v2002 = vpop.permute.xlu0 %2001
    %v2003 = vsel %vm1046, %v2000, %v2002
    %v2004 = vsel %vm1046, %v1998, %v2000
    %v2005 = vsel %vm1046, %v1996, %v1998
    %v2006 = vsel %vm1046, %v2002, %v1996
    %v2007 = vmul.f32 %v1991, %v2005
    %v2008 = vmul.f32 %v1992, %v2004
    %v2009 = vmul.f32 %v1993, %v2003
    %v2010 = vmul.f32 %v1994, %v2006
    %v2011 = vadd.f32 %v1986, %v2007
    %v2012 = vadd.f32 %v1987, %v2008
    %v2013 = vadd.f32 %v1988, %v2009
    %v2014 = vadd.f32 %v1989, %v2010
    %s2015 = scalar_lea.vmem [#allocation8], 1472
    %v2016 = vld [vmem:[%s2015] sm:$0xff]
    %v2017 = vld [vmem:[%s2015 + $0x8] sm:$0xff]
    %v2018 = vld [vmem:[%s2015 + $0x10] sm:$0xff]
    %v2019 = vld [vmem:[%s2015 + $0x18] sm:$0xff]
    %2020 = vrot.lane.b32.xlu0 %v1502, 97
    %v2021 = vpop.permute.xlu0 %2020
    %2022 = vrot.lane.b32.xlu0 %v1503, 97
    %v2023 = vpop.permute.xlu0 %2022
    %2024 = vrot.lane.b32.xlu0 %v1504, 97
    %v2025 = vpop.permute.xlu0 %2024
    %2026 = vrot.lane.b32.xlu0 %v1505, 97
    %v2027 = vpop.permute.xlu0 %2026
    %v2028 = vsel %vm1072, %v2025, %v2027
    %v2029 = vsel %vm1072, %v2023, %v2025
    %v2030 = vsel %vm1072, %v2021, %v2023
    %v2031 = vsel %vm1072, %v2027, %v2021
    %v2032 = vmul.f32 %v2016, %v2030
    %v2033 = vmul.f32 %v2017, %v2029
    %v2034 = vmul.f32 %v2018, %v2028
    %v2035 = vmul.f32 %v2019, %v2031
    %v2036 = vadd.f32 %v2011, %v2032
    %v2037 = vadd.f32 %v2012, %v2033
    %v2038 = vadd.f32 %v2013, %v2034
    %v2039 = vadd.f32 %v2014, %v2035
    %s2040 = scalar_lea.vmem [#allocation8], 1504
    %v2041 = vld [vmem:[%s2040] sm:$0xff]
    %v2042 = vld [vmem:[%s2040 + $0x8] sm:$0xff]
    %v2043 = vld [vmem:[%s2040 + $0x10] sm:$0xff]
    %v2044 = vld [vmem:[%s2040 + $0x18] sm:$0xff]
    %2045 = vrot.lane.b32.xlu0 %v1502, 96
    %v2046 = vpop.permute.xlu0 %2045
    %2047 = vrot.lane.b32.xlu0 %v1503, 96
    %v2048 = vpop.permute.xlu0 %2047
    %2049 = vrot.lane.b32.xlu0 %v1504, 96
    %v2050 = vpop.permute.xlu0 %2049
    %2051 = vrot.lane.b32.xlu0 %v1505, 96
    %v2052 = vpop.permute.xlu0 %2051
    %v2053 = vsel %vm1098, %v2050, %v2052
    %v2054 = vsel %vm1098, %v2048, %v2050
    %v2055 = vsel %vm1098, %v2046, %v2048
    %v2056 = vsel %vm1098, %v2052, %v2046
    %v2057 = vmul.f32 %v2041, %v2055
    %v2058 = vmul.f32 %v2042, %v2054
    %v2059 = vmul.f32 %v2043, %v2053
    %v2060 = vmul.f32 %v2044, %v2056
    %v2061 = vadd.f32 %v2036, %v2057
    %v2062 = vadd.f32 %v2037, %v2058
    %v2063 = vadd.f32 %v2038, %v2059
    %v2064 = vadd.f32 %v2039, %v2060
    %s2065 = scalar_lea.vmem [#allocation8], 1536
    %v2066 = vld [vmem:[%s2065] sm:$0xff]
    %v2067 = vld [vmem:[%s2065 + $0x8] sm:$0xff]
    %v2068 = vld [vmem:[%s2065 + $0x10] sm:$0xff]
    %v2069 = vld [vmem:[%s2065 + $0x18] sm:$0xff]
    %2070 = vrot.lane.b32.xlu0 %v1502, 95
    %v2071 = vpop.permute.xlu0 %2070
    %2072 = vrot.lane.b32.xlu0 %v1503, 95
    %v2073 = vpop.permute.xlu0 %2072
    %2074 = vrot.lane.b32.xlu0 %v1504, 95
    %v2075 = vpop.permute.xlu0 %2074
    %2076 = vrot.lane.b32.xlu0 %v1505, 95
    %v2077 = vpop.permute.xlu0 %2076
    %v2078 = vsel %vm1124, %v2075, %v2077
    %v2079 = vsel %vm1124, %v2073, %v2075
    %v2080 = vsel %vm1124, %v2071, %v2073
    %v2081 = vsel %vm1124, %v2077, %v2071
    %v2082 = vmul.f32 %v2066, %v2080
    %v2083 = vmul.f32 %v2067, %v2079
    %v2084 = vmul.f32 %v2068, %v2078
    %v2085 = vmul.f32 %v2069, %v2081
    %v2086 = vadd.f32 %v2061, %v2082
    %v2087 = vadd.f32 %v2062, %v2083
    %v2088 = vadd.f32 %v2063, %v2084
    %v2089 = vadd.f32 %v2064, %v2085
    %s2090 = scalar_lea.vmem [#allocation8], 1568
    %v2091 = vld [vmem:[%s2090] sm:$0xff]
    %v2092 = vld [vmem:[%s2090 + $0x8] sm:$0xff]
    %v2093 = vld [vmem:[%s2090 + $0x10] sm:$0xff]
    %v2094 = vld [vmem:[%s2090 + $0x18] sm:$0xff]
    %2095 = vrot.lane.b32.xlu0 %v1502, 94
    %v2096 = vpop.permute.xlu0 %2095
    %2097 = vrot.lane.b32.xlu0 %v1503, 94
    %v2098 = vpop.permute.xlu0 %2097
    %2099 = vrot.lane.b32.xlu0 %v1504, 94
    %v2100 = vpop.permute.xlu0 %2099
    %2101 = vrot.lane.b32.xlu0 %v1505, 94
    %v2102 = vpop.permute.xlu0 %2101
    %v2103 = vsel %vm1150, %v2100, %v2102
    %v2104 = vsel %vm1150, %v2098, %v2100
    %v2105 = vsel %vm1150, %v2096, %v2098
    %v2106 = vsel %vm1150, %v2102, %v2096
    %v2107 = vmul.f32 %v2091, %v2105
    %v2108 = vmul.f32 %v2092, %v2104
    %v2109 = vmul.f32 %v2093, %v2103
    %v2110 = vmul.f32 %v2094, %v2106
    %v2111 = vadd.f32 %v2086, %v2107
    %v2112 = vadd.f32 %v2087, %v2108
    %v2113 = vadd.f32 %v2088, %v2109
    %v2114 = vadd.f32 %v2089, %v2110
    %v2115 = vld [vmem:[%s3 + $0x10] sm:$0xff]
    %2117 = vset.pattern.permute.xlu0 0
    %2118 = vperm.xlu0 %2117, %v2115
    %v2119 = vpop.permute.xlu0 %2118
    %v2121 = vadd.f32 %v2111, %v2119
    %v2122 = vadd.f32 %v2112, %v2119
    %v2123 = vadd.f32 %v2113, %v2119
    %v2124 = vadd.f32 %v2114, %v2119
    %v2125 = vmax.f32 %v2121, 0.0
    %v2126 = vmax.f32 %v2122, 0.0
    %v2127 = vmax.f32 %v2123, 0.0
    %v2128 = vmax.f32 %v2124, 0.0
    %v2129 = vld [vmem:[#allocation7 + $0x28] sm:$0xff]
    %v2130 = vpack.c.bf16 %v2129, %v2129
    %v2131 = vpack.c.bf16 %v2125, %v2125
    %v2132 = vpack.c.bf16 %v2126, %v2126
    %v2133 = vpack.c.bf16 %v2127, %v2127
    %v2134 = vpack.c.bf16 %v2128, %v2128
    %v2135 = vld [vmem:[%s3 + $0x18] sm:$0xff]
    %2137 = vset.pattern.permute.xlu0 0
    %2138 = vperm.xlu0 %2137, %v2135
    %v2139 = vpop.permute.xlu0 %2138
    %v2142 = vsel %vm1189, %v2130, 0
    %v2145 = vsel %vm447, %v2131, 0
    %v2148 = vsel %vm447, %v2132, 0
    %v2151 = vsel %vm447, %v2133, 0
    %v2154 = vsel %vm447, %v2134, 0
    %2156 = vmatpush.bf16.msra.mxu0 0
    %2157 = vmatpush.bf16.msra.mxu0 0
    %2158 = vmatpush.bf16.msra.mxu0 0
    %2159 = vmatpush.bf16.msra.mxu0 0
    %2160 = vmatpush.bf16.msra.mxu0 0
    %2161 = vmatpush.bf16.msra.mxu0 0
    %2162 = vmatpush.bf16.msra.mxu0 0
    %2163 = vmatpush.bf16.msra.mxu0 %v2145
    %2164 = vmatmul.bf16.gmra.mxu0 %v2142
    %v2165 = vpop.f32.mrf.mxu0
    %v2166 = vadd.f32 %v2139, %v2165
    %v2167 = vpop.f32.mrf.mxu0
    %2168 = vdwg.mxu0
    %2169 = vmatpush.bf16.msra.mxu0 0
    %2170 = vmatpush.bf16.msra.mxu0 0
    %2171 = vmatpush.bf16.msra.mxu0 0
    %2172 = vmatpush.bf16.msra.mxu0 0
    %2173 = vmatpush.bf16.msra.mxu0 0
    %2174 = vmatpush.bf16.msra.mxu0 0
    %2175 = vmatpush.bf16.msra.mxu0 0
    %2176 = vmatpush.bf16.msra.mxu0 %v2148
    %2177 = vmatmul.bf16.gmra.mxu0 %v2142
    %v2178 = vpop.f32.mrf.mxu0
    %v2179 = vadd.f32 %v2139, %v2178
    %v2180 = vpop.f32.mrf.mxu0
    %2181 = vdwg.mxu0
    %2182 = vmatpush.bf16.msra.mxu0 0
    %2183 = vmatpush.bf16.msra.mxu0 0
    %2184 = vmatpush.bf16.msra.mxu0 0
    %2185 = vmatpush.bf16.msra.mxu0 0
    %2186 = vmatpush.bf16.msra.mxu0 0
    %2187 = vmatpush.bf16.msra.mxu0 0
    %2188 = vmatpush.bf16.msra.mxu0 0
    %2189 = vmatpush.bf16.msra.mxu0 %v2151
    %2190 = vmatmul.bf16.gmra.mxu0 %v2142
    %v2191 = vpop.f32.mrf.mxu0
    %v2192 = vadd.f32 %v2139, %v2191
    %v2193 = vpop.f32.mrf.mxu0
    %2194 = vdwg.mxu0
    %2195 = vmatpush.bf16.msra.mxu0 0
    %2196 = vmatpush.bf16.msra.mxu0 0
    %2197 = vmatpush.bf16.msra.mxu0 0
    %2198 = vmatpush.bf16.msra.mxu0 0
    %2199 = vmatpush.bf16.msra.mxu0 0
    %2200 = vmatpush.bf16.msra.mxu0 0
    %2201 = vmatpush.bf16.msra.mxu0 0
    %2202 = vmatpush.bf16.msra.mxu0 %v2154
    %2203 = vmatmul.bf16.gmra.mxu0 %v2142
    %v2204 = vpop.f32.mrf.mxu0
    %v2205 = vadd.f32 %v2139, %v2204
    %v2206 = vpop.f32.mrf.mxu0
    %2207 = vdwg.mxu0
    %v2208 = vmax.f32 %v2166, 0.0
    %v2209 = vmax.f32 %v2179, 0.0
    %v2210 = vmax.f32 %v2192, 0.0
    %v2211 = vmax.f32 %v2205, 0.0
    %v2212 = vadd.f32 %v1261, %v2208
    %v2213 = vadd.f32 %v1262, %v2209
    %v2214 = vadd.f32 %v1263, %v2210
    %v2215 = vadd.f32 %v1264, %v2211
    %2216 = vrot.lane.b32.xlu0 %v2212, 17
    %v2217 = vpop.permute.xlu0 %2216
    %2218 = vrot.lane.b32.xlu0 %v2213, 17
    %v2219 = vpop.permute.xlu0 %2218
    %2220 = vrot.lane.b32.xlu0 %v2214, 17
    %v2221 = vpop.permute.xlu0 %2220
    %2222 = vrot.lane.b32.xlu0 %v2215, 17
    %v2223 = vpop.permute.xlu0 %2222
    %v2224 = vsel %vm249, %v2221, %v2223
    %v2225 = vsel %vm249, %v2219, %v2221
    %v2226 = vsel %vm249, %v2217, %v2219
    %v2227 = vsel %vm249, %v2223, %v2217
    %v2228 = vmul.f32 %v2227, %v254
    %v2229 = vmul.f32 %v2226, %v255
    %v2230 = vmul.f32 %v2225, %v256
    %v2231 = vmul.f32 %v2224, %v257
    %2232 = vrot.lane.b32.xlu0 %v2212, 16
    %v2233 = vpop.permute.xlu0 %2232
    %2234 = vrot.lane.b32.xlu0 %v2213, 16
    %v2235 = vpop.permute.xlu0 %2234
    %2236 = vrot.lane.b32.xlu0 %v2214, 16
    %v2237 = vpop.permute.xlu0 %2236
    %2238 = vrot.lane.b32.xlu0 %v2215, 16
    %v2239 = vpop.permute.xlu0 %2238
    %v2240 = vsel %vm270, %v2237, %v2239
    %v2241 = vsel %vm270, %v2235, %v2237
    %v2242 = vsel %vm270, %v2233, %v2235
    %v2243 = vsel %vm270, %v2239, %v2233
    %v2244 = vmul.f32 %v2243, %v275
    %v2245 = vmul.f32 %v2242, %v276
    %v2246 = vmul.f32 %v2241, %v277
    %v2247 = vmul.f32 %v2240, %v278
    %2248 = vrot.lane.b32.xlu0 %v2212, 15
    %v2249 = vpop.permute.xlu0 %2248
    %2250 = vrot.lane.b32.xlu0 %v2213, 15
    %v2251 = vpop.permute.xlu0 %2250
    %2252 = vrot.lane.b32.xlu0 %v2214, 15
    %v2253 = vpop.permute.xlu0 %2252
    %2254 = vrot.lane.b32.xlu0 %v2215, 15
    %v2255 = vpop.permute.xlu0 %2254
    %v2256 = vsel %vm291, %v2253, %v2255
    %v2257 = vsel %vm291, %v2251, %v2253
    %v2258 = vsel %vm291, %v2249, %v2251
    %v2259 = vsel %vm291, %v2255, %v2249
    %v2260 = vmul.f32 %v2259, %v296
    %v2261 = vmul.f32 %v2258, %v297
    %v2262 = vmul.f32 %v2257, %v298
    %v2263 = vmul.f32 %v2256, %v299
    %2264 = vrot.lane.b32.xlu0 %v2212, 1
    %v2265 = vpop.permute.xlu0 %2264
    %2266 = vrot.lane.b32.xlu0 %v2213, 1
    %v2267 = vpop.permute.xlu0 %2266
    %2268 = vrot.lane.b32.xlu0 %v2214, 1
    %v2269 = vpop.permute.xlu0 %2268
    %2270 = vrot.lane.b32.xlu0 %v2215, 1
    %v2271 = vpop.permute.xlu0 %2270
    %v2272 = vsel %vm312, %v2269, %v2271
    %v2273 = vsel %vm312, %v2267, %v2269
    %v2274 = vsel %vm312, %v2265, %v2267
    %v2275 = vsel %vm312, %v2271, %v2265
    %v2276 = vmul.f32 %v2275, %v317
    %v2277 = vmul.f32 %v2274, %v318
    %v2278 = vmul.f32 %v2273, %v319
    %v2279 = vmul.f32 %v2272, %v320
    %2280 = vrot.lane.b32.xlu0 %v2212, 127
    %v2281 = vpop.permute.xlu0 %2280
    %2282 = vrot.lane.b32.xlu0 %v2213, 127
    %v2283 = vpop.permute.xlu0 %2282
    %2284 = vrot.lane.b32.xlu0 %v2214, 127
    %v2285 = vpop.permute.xlu0 %2284
    %2286 = vrot.lane.b32.xlu0 %v2215, 127
    %v2287 = vpop.permute.xlu0 %2286
    %v2288 = vsel %vm333, %v2285, %v2287
    %v2289 = vsel %vm333, %v2283, %v2285
    %v2290 = vsel %vm333, %v2281, %v2283
    %v2291 = vsel %vm333, %v2287, %v2281
    %v2292 = vmul.f32 %v2290, %v338
    %v2293 = vmul.f32 %v2289, %v339
    %v2294 = vmul.f32 %v2288, %v340
    %v2295 = vmul.f32 %v2291, %v341
    %2296 = vrot.lane.b32.xlu0 %v2212, 113
    %v2297 = vpop.permute.xlu0 %2296
    %2298 = vrot.lane.b32.xlu0 %v2213, 113
    %v2299 = vpop.permute.xlu0 %2298
    %2300 = vrot.lane.b32.xlu0 %v2214, 113
    %v2301 = vpop.permute.xlu0 %2300
    %2302 = vrot.lane.b32.xlu0 %v2215, 113
    %v2303 = vpop.permute.xlu0 %2302
    %v2304 = vsel %vm354, %v2301, %v2303
    %v2305 = vsel %vm354, %v2299, %v2301
    %v2306 = vsel %vm354, %v2297, %v2299
    %v2307 = vsel %vm354, %v2303, %v2297
    %v2308 = vmul.f32 %v2306, %v359
    %v2309 = vmul.f32 %v2305, %v360
    %v2310 = vmul.f32 %v2304, %v361
    %v2311 = vmul.f32 %v2307, %v362
    %2312 = vrot.lane.b32.xlu0 %v2212, 112
    %v2313 = vpop.permute.xlu0 %2312
    %2314 = vrot.lane.b32.xlu0 %v2213, 112
    %v2315 = vpop.permute.xlu0 %2314
    %2316 = vrot.lane.b32.xlu0 %v2214, 112
    %v2317 = vpop.permute.xlu0 %2316
    %2318 = vrot.lane.b32.xlu0 %v2215, 112
    %v2319 = vpop.permute.xlu0 %2318
    %v2320 = vsel %vm375, %v2317, %v2319
    %v2321 = vsel %vm375, %v2315, %v2317
    %v2322 = vsel %vm375, %v2313, %v2315
    %v2323 = vsel %vm375, %v2319, %v2313
    %v2324 = vmul.f32 %v2322, %v380
    %v2325 = vmul.f32 %v2321, %v381
    %v2326 = vmul.f32 %v2320, %v382
    %v2327 = vmul.f32 %v2323, %v383
    %2328 = vrot.lane.b32.xlu0 %v2212, 111
    %v2329 = vpop.permute.xlu0 %2328
    %2330 = vrot.lane.b32.xlu0 %v2213, 111
    %v2331 = vpop.permute.xlu0 %2330
    %2332 = vrot.lane.b32.xlu0 %v2214, 111
    %v2333 = vpop.permute.xlu0 %2332
    %2334 = vrot.lane.b32.xlu0 %v2215, 111
    %v2335 = vpop.permute.xlu0 %2334
    %v2336 = vsel %vm396, %v2333, %v2335
    %v2337 = vsel %vm396, %v2331, %v2333
    %v2338 = vsel %vm396, %v2329, %v2331
    %v2339 = vsel %vm396, %v2335, %v2329
    %v2340 = vmul.f32 %v2338, %v401
    %v2341 = vmul.f32 %v2337, %v402
    %v2342 = vmul.f32 %v2336, %v403
    %v2343 = vmul.f32 %v2339, %v404
    %v2344 = vld [vmem:[#allocation7 + $0x30] sm:$0xff]
    %v2345 = vpack.c.bf16 %v2344, %v2344
    %v2346 = vpack.c.bf16 %v2244, %v2228
    %v2347 = vpack.c.bf16 %v2245, %v2229
    %v2348 = vpack.c.bf16 %v2246, %v2230
    %v2349 = vpack.c.bf16 %v2247, %v2231
    %v2350 = vpack.c.bf16 %v2276, %v2260
    %v2351 = vpack.c.bf16 %v2277, %v2261
    %v2352 = vpack.c.bf16 %v2278, %v2262
    %v2353 = vpack.c.bf16 %v2279, %v2263
    %v2354 = vpack.c.bf16 %v2292, %v2212
    %v2355 = vpack.c.bf16 %v2293, %v2213
    %v2356 = vpack.c.bf16 %v2294, %v2214
    %v2357 = vpack.c.bf16 %v2295, %v2215
    %v2358 = vpack.c.bf16 %v2324, %v2308
    %v2359 = vpack.c.bf16 %v2325, %v2309
    %v2360 = vpack.c.bf16 %v2326, %v2310
    %v2361 = vpack.c.bf16 %v2327, %v2311
    %v2362 = vpack.c.bf16 %v413, %v2340
    %v2363 = vpack.c.bf16 %v414, %v2341
    %v2364 = vpack.c.bf16 %v415, %v2342
    %v2365 = vpack.c.bf16 %v416, %v2343
    %v2367 = vsel %vm443, %v2345, 0
    %v2370 = vand.u32 %v2362, %v450
    %v2373 = vand.u32 %v2363, %v450
    %v2376 = vand.u32 %v2364, %v450
    %v2379 = vand.u32 %v2365, %v450
    %2381 = vmatpush.bf16.msra.mxu0 0
    %2382 = vmatpush.bf16.msra.mxu0 0
    %2383 = vmatpush.bf16.msra.mxu0 0
    %2384 = vmatpush.bf16.msra.mxu0 %v2370
    %2385 = vmatpush.bf16.msra.mxu0 %v2358
    %2386 = vmatpush.bf16.msra.mxu0 %v2354
    %2387 = vmatpush.bf16.msra.mxu0 %v2350
    %2388 = vmatpush.bf16.msra.mxu0 %v2346
    %2389 = vmatmul.bf16.gmra.mxu0 %v2367
    %v2390 = vpop.f32.mrf.mxu0
    %v2391 = vadd.f32 0.0, %v2390
    %v2392 = vpop.f32.mrf.mxu0
    %2393 = vdwg.mxu0
    %2394 = vmatpush.bf16.msra.mxu0 0
    %2395 = vmatpush.bf16.msra.mxu0 0
    %2396 = vmatpush.bf16.msra.mxu0 0
    %2397 = vmatpush.bf16.msra.mxu0 %v2373
    %2398 = vmatpush.bf16.msra.mxu0 %v2359
    %2399 = vmatpush.bf16.msra.mxu0 %v2355
    %2400 = vmatpush.bf16.msra.mxu0 %v2351
    %2401 = vmatpush.bf16.msra.mxu0 %v2347
    %2402 = vmatmul.bf16.gmra.mxu0 %v2367
    %v2403 = vpop.f32.mrf.mxu0
    %v2404 = vadd.f32 0.0, %v2403
    %v2405 = vpop.f32.mrf.mxu0
    %2406 = vdwg.mxu0
    %2407 = vmatpush.bf16.msra.mxu0 0
    %2408 = vmatpush.bf16.msra.mxu0 0
    %2409 = vmatpush.bf16.msra.mxu0 0
    %2410 = vmatpush.bf16.msra.mxu0 %v2376
    %2411 = vmatpush.bf16.msra.mxu0 %v2360
    %2412 = vmatpush.bf16.msra.mxu0 %v2356
    %2413 = vmatpush.bf16.msra.mxu0 %v2352
    %2414 = vmatpush.bf16.msra.mxu0 %v2348
    %2415 = vmatmul.bf16.gmra.mxu0 %v2367
    %v2416 = vpop.f32.mrf.mxu0
    %v2417 = vadd.f32 0.0, %v2416
    %v2418 = vpop.f32.mrf.mxu0
    %2419 = vdwg.mxu0
    %2420 = vmatpush.bf16.msra.mxu0 0
    %2421 = vmatpush.bf16.msra.mxu0 0
    %2422 = vmatpush.bf16.msra.mxu0 0
    %2423 = vmatpush.bf16.msra.mxu0 %v2379
    %2424 = vmatpush.bf16.msra.mxu0 %v2361
    %2425 = vmatpush.bf16.msra.mxu0 %v2357
    %2426 = vmatpush.bf16.msra.mxu0 %v2353
    %2427 = vmatpush.bf16.msra.mxu0 %v2349
    %2428 = vmatmul.bf16.gmra.mxu0 %v2367
    %v2429 = vpop.f32.mrf.mxu0
    %v2430 = vadd.f32 0.0, %v2429
    %v2431 = vpop.f32.mrf.mxu0
    %2432 = vdwg.mxu0
    %v2433 = vsub.f32 0.0, %v2391
    %v2434 = vsub.f32 0.0, %v2404
    %v2435 = vsub.f32 0.0, %v2417
    %v2436 = vsub.f32 0.0, %v2430
    %v2437 = vmul.f32 %v2433, 1.442695
    %v2438 = vpow.pop %v2437
    %v2439 = vmul.f32 %v2434, 1.442695
    %v2440 = vpow.pop %v2439
    %v2441 = vmul.f32 %v2435, 1.442695
    %v2442 = vpow.pop %v2441
    %v2443 = vmul.f32 %v2436, 1.442695
    %v2444 = vpow.pop %v2443
    %v2445 = vadd.f32 %v2438, 1.0
    %v2446 = vadd.f32 %v2440, 1.0
    %v2447 = vadd.f32 %v2442, 1.0
    %v2448 = vadd.f32 %v2444, 1.0
    %v2449 = vrcp.pop %v2445
    %v2450 = vrcp.pop %v2446
    %v2451 = vrcp.pop %v2447
    %v2452 = vrcp.pop %v2448
    %v2453 = vmul.f32 %v2391, %v2449
    %v2454 = vmul.f32 %v2404, %v2450
    %v2455 = vmul.f32 %v2417, %v2451
    %v2456 = vmul.f32 %v2430, %v2452
    %s2457 = scalar_lea.vmem [#allocation8], 1600
    %v2458 = vld [vmem:[%s2457] sm:$0xff]
    %v2459 = vld [vmem:[%s2457 + $0x8] sm:$0xff]
    %v2460 = vld [vmem:[%s2457 + $0x10] sm:$0xff]
    %v2461 = vld [vmem:[%s2457 + $0x18] sm:$0xff]
    %2462 = vrot.lane.b32.xlu0 %v2453, 34
    %v2463 = vpop.permute.xlu0 %2462
    %2464 = vrot.lane.b32.xlu0 %v2454, 34
    %v2465 = vpop.permute.xlu0 %2464
    %2466 = vrot.lane.b32.xlu0 %v2455, 34
    %v2467 = vpop.permute.xlu0 %2466
    %2468 = vrot.lane.b32.xlu0 %v2456, 34
    %v2469 = vpop.permute.xlu0 %2468
    %v2470 = vsel %vm551, %v2467, %v2469
    %v2471 = vsel %vm551, %v2465, %v2467
    %v2472 = vsel %vm551, %v2463, %v2465
    %v2473 = vsel %vm551, %v2469, %v2463
    %v2474 = vmul.f32 %v2458, %v2473
    %v2475 = vmul.f32 %v2459, %v2472
    %v2476 = vmul.f32 %v2460, %v2471
    %v2477 = vmul.f32 %v2461, %v2470
    %s2478 = scalar_lea.vmem [#allocation8], 1632
    %v2479 = vld [vmem:[%s2478] sm:$0xff]
    %v2480 = vld [vmem:[%s2478 + $0x8] sm:$0xff]
    %v2481 = vld [vmem:[%s2478 + $0x10] sm:$0xff]
    %v2482 = vld [vmem:[%s2478 + $0x18] sm:$0xff]
    %2483 = vrot.lane.b32.xlu0 %v2453, 33
    %v2484 = vpop.permute.xlu0 %2483
    %2485 = vrot.lane.b32.xlu0 %v2454, 33
    %v2486 = vpop.permute.xlu0 %2485
    %2487 = vrot.lane.b32.xlu0 %v2455, 33
    %v2488 = vpop.permute.xlu0 %2487
    %2489 = vrot.lane.b32.xlu0 %v2456, 33
    %v2490 = vpop.permute.xlu0 %2489
    %v2491 = vsel %vm573, %v2488, %v2490
    %v2492 = vsel %vm573, %v2486, %v2488
    %v2493 = vsel %vm573, %v2484, %v2486
    %v2494 = vsel %vm573, %v2490, %v2484
    %v2495 = vmul.f32 %v2479, %v2494
    %v2496 = vmul.f32 %v2480, %v2493
    %v2497 = vmul.f32 %v2481, %v2492
    %v2498 = vmul.f32 %v2482, %v2491
    %v2499 = vadd.f32 %v2474, %v2495
    %v2500 = vadd.f32 %v2475, %v2496
    %v2501 = vadd.f32 %v2476, %v2497
    %v2502 = vadd.f32 %v2477, %v2498
    %s2503 = scalar_lea.vmem [#allocation8], 1664
    %v2504 = vld [vmem:[%s2503] sm:$0xff]
    %v2505 = vld [vmem:[%s2503 + $0x8] sm:$0xff]
    %v2506 = vld [vmem:[%s2503 + $0x10] sm:$0xff]
    %v2507 = vld [vmem:[%s2503 + $0x18] sm:$0xff]
    %2508 = vrot.lane.b32.xlu0 %v2453, 32
    %v2509 = vpop.permute.xlu0 %2508
    %2510 = vrot.lane.b32.xlu0 %v2454, 32
    %v2511 = vpop.permute.xlu0 %2510
    %2512 = vrot.lane.b32.xlu0 %v2455, 32
    %v2513 = vpop.permute.xlu0 %2512
    %2514 = vrot.lane.b32.xlu0 %v2456, 32
    %v2515 = vpop.permute.xlu0 %2514
    %v2516 = vsel %vm599, %v2513, %v2515
    %v2517 = vsel %vm599, %v2511, %v2513
    %v2518 = vsel %vm599, %v2509, %v2511
    %v2519 = vsel %vm599, %v2515, %v2509
    %v2520 = vmul.f32 %v2504, %v2519
    %v2521 = vmul.f32 %v2505, %v2518
    %v2522 = vmul.f32 %v2506, %v2517
    %v2523 = vmul.f32 %v2507, %v2516
    %v2524 = vadd.f32 %v2499, %v2520
    %v2525 = vadd.f32 %v2500, %v2521
    %v2526 = vadd.f32 %v2501, %v2522
    %v2527 = vadd.f32 %v2502, %v2523
    %s2528 = scalar_lea.vmem [#allocation8], 1696
    %v2529 = vld [vmem:[%s2528] sm:$0xff]
    %v2530 = vld [vmem:[%s2528 + $0x8] sm:$0xff]
    %v2531 = vld [vmem:[%s2528 + $0x10] sm:$0xff]
    %v2532 = vld [vmem:[%s2528 + $0x18] sm:$0xff]
    %2533 = vrot.lane.b32.xlu0 %v2453, 31
    %v2534 = vpop.permute.xlu0 %2533
    %2535 = vrot.lane.b32.xlu0 %v2454, 31
    %v2536 = vpop.permute.xlu0 %2535
    %2537 = vrot.lane.b32.xlu0 %v2455, 31
    %v2538 = vpop.permute.xlu0 %2537
    %2539 = vrot.lane.b32.xlu0 %v2456, 31
    %v2540 = vpop.permute.xlu0 %2539
    %v2541 = vsel %vm625, %v2538, %v2540
    %v2542 = vsel %vm625, %v2536, %v2538
    %v2543 = vsel %vm625, %v2534, %v2536
    %v2544 = vsel %vm625, %v2540, %v2534
    %v2545 = vmul.f32 %v2529, %v2544
    %v2546 = vmul.f32 %v2530, %v2543
    %v2547 = vmul.f32 %v2531, %v2542
    %v2548 = vmul.f32 %v2532, %v2541
    %v2549 = vadd.f32 %v2524, %v2545
    %v2550 = vadd.f32 %v2525, %v2546
    %v2551 = vadd.f32 %v2526, %v2547
    %v2552 = vadd.f32 %v2527, %v2548
    %s2553 = scalar_lea.vmem [#allocation8], 1728
    %v2554 = vld [vmem:[%s2553] sm:$0xff]
    %v2555 = vld [vmem:[%s2553 + $0x8] sm:$0xff]
    %v2556 = vld [vmem:[%s2553 + $0x10] sm:$0xff]
    %v2557 = vld [vmem:[%s2553 + $0x18] sm:$0xff]
    %2558 = vrot.lane.b32.xlu0 %v2453, 30
    %v2559 = vpop.permute.xlu0 %2558
    %2560 = vrot.lane.b32.xlu0 %v2454, 30
    %v2561 = vpop.permute.xlu0 %2560
    %2562 = vrot.lane.b32.xlu0 %v2455, 30
    %v2563 = vpop.permute.xlu0 %2562
    %2564 = vrot.lane.b32.xlu0 %v2456, 30
    %v2565 = vpop.permute.xlu0 %2564
    %v2566 = vsel %vm651, %v2563, %v2565
    %v2567 = vsel %vm651, %v2561, %v2563
    %v2568 = vsel %vm651, %v2559, %v2561
    %v2569 = vsel %vm651, %v2565, %v2559
    %v2570 = vmul.f32 %v2554, %v2569
    %v2571 = vmul.f32 %v2555, %v2568
    %v2572 = vmul.f32 %v2556, %v2567
    %v2573 = vmul.f32 %v2557, %v2566
    %v2574 = vadd.f32 %v2549, %v2570
    %v2575 = vadd.f32 %v2550, %v2571
    %v2576 = vadd.f32 %v2551, %v2572
    %v2577 = vadd.f32 %v2552, %v2573
    %s2578 = scalar_lea.vmem [#allocation8], 1760
    %v2579 = vld [vmem:[%s2578] sm:$0xff]
    %v2580 = vld [vmem:[%s2578 + $0x8] sm:$0xff]
    %v2581 = vld [vmem:[%s2578 + $0x10] sm:$0xff]
    %v2582 = vld [vmem:[%s2578 + $0x18] sm:$0xff]
    %2583 = vrot.lane.b32.xlu0 %v2453, 18
    %v2584 = vpop.permute.xlu0 %2583
    %2585 = vrot.lane.b32.xlu0 %v2454, 18
    %v2586 = vpop.permute.xlu0 %2585
    %2587 = vrot.lane.b32.xlu0 %v2455, 18
    %v2588 = vpop.permute.xlu0 %2587
    %2589 = vrot.lane.b32.xlu0 %v2456, 18
    %v2590 = vpop.permute.xlu0 %2589
    %v2591 = vsel %vm677, %v2588, %v2590
    %v2592 = vsel %vm677, %v2586, %v2588
    %v2593 = vsel %vm677, %v2584, %v2586
    %v2594 = vsel %vm677, %v2590, %v2584
    %v2595 = vmul.f32 %v2579, %v2594
    %v2596 = vmul.f32 %v2580, %v2593
    %v2597 = vmul.f32 %v2581, %v2592
    %v2598 = vmul.f32 %v2582, %v2591
    %v2599 = vadd.f32 %v2574, %v2595
    %v2600 = vadd.f32 %v2575, %v2596
    %v2601 = vadd.f32 %v2576, %v2597
    %v2602 = vadd.f32 %v2577, %v2598
    %s2603 = scalar_lea.vmem [#allocation8], 1792
    %v2604 = vld [vmem:[%s2603] sm:$0xff]
    %v2605 = vld [vmem:[%s2603 + $0x8] sm:$0xff]
    %v2606 = vld [vmem:[%s2603 + $0x10] sm:$0xff]
    %v2607 = vld [vmem:[%s2603 + $0x18] sm:$0xff]
    %2608 = vrot.lane.b32.xlu0 %v2453, 17
    %v2609 = vpop.permute.xlu0 %2608
    %2610 = vrot.lane.b32.xlu0 %v2454, 17
    %v2611 = vpop.permute.xlu0 %2610
    %2612 = vrot.lane.b32.xlu0 %v2455, 17
    %v2613 = vpop.permute.xlu0 %2612
    %2614 = vrot.lane.b32.xlu0 %v2456, 17
    %v2615 = vpop.permute.xlu0 %2614
    %v2616 = vsel %vm249, %v2613, %v2615
    %v2617 = vsel %vm249, %v2611, %v2613
    %v2618 = vsel %vm249, %v2609, %v2611
    %v2619 = vsel %vm249, %v2615, %v2609
    %v2620 = vmul.f32 %v2604, %v2619
    %v2621 = vmul.f32 %v2605, %v2618
    %v2622 = vmul.f32 %v2606, %v2617
    %v2623 = vmul.f32 %v2607, %v2616
    %v2624 = vadd.f32 %v2599, %v2620
    %v2625 = vadd.f32 %v2600, %v2621
    %v2626 = vadd.f32 %v2601, %v2622
    %v2627 = vadd.f32 %v2602, %v2623
    %s2628 = scalar_lea.vmem [#allocation8], 1824
    %v2629 = vld [vmem:[%s2628] sm:$0xff]
    %v2630 = vld [vmem:[%s2628 + $0x8] sm:$0xff]
    %v2631 = vld [vmem:[%s2628 + $0x10] sm:$0xff]
    %v2632 = vld [vmem:[%s2628 + $0x18] sm:$0xff]
    %2633 = vrot.lane.b32.xlu0 %v2453, 16
    %v2634 = vpop.permute.xlu0 %2633
    %2635 = vrot.lane.b32.xlu0 %v2454, 16
    %v2636 = vpop.permute.xlu0 %2635
    %2637 = vrot.lane.b32.xlu0 %v2455, 16
    %v2638 = vpop.permute.xlu0 %2637
    %2639 = vrot.lane.b32.xlu0 %v2456, 16
    %v2640 = vpop.permute.xlu0 %2639
    %v2641 = vsel %vm270, %v2638, %v2640
    %v2642 = vsel %vm270, %v2636, %v2638
    %v2643 = vsel %vm270, %v2634, %v2636
    %v2644 = vsel %vm270, %v2640, %v2634
    %v2645 = vmul.f32 %v2629, %v2644
    %v2646 = vmul.f32 %v2630, %v2643
    %v2647 = vmul.f32 %v2631, %v2642
    %v2648 = vmul.f32 %v2632, %v2641
    %v2649 = vadd.f32 %v2624, %v2645
    %v2650 = vadd.f32 %v2625, %v2646
    %v2651 = vadd.f32 %v2626, %v2647
    %v2652 = vadd.f32 %v2627, %v2648
    %s2653 = scalar_lea.vmem [#allocation8], 1856
    %v2654 = vld [vmem:[%s2653] sm:$0xff]
    %v2655 = vld [vmem:[%s2653 + $0x8] sm:$0xff]
    %v2656 = vld [vmem:[%s2653 + $0x10] sm:$0xff]
    %v2657 = vld [vmem:[%s2653 + $0x18] sm:$0xff]
    %2658 = vrot.lane.b32.xlu0 %v2453, 15
    %v2659 = vpop.permute.xlu0 %2658
    %2660 = vrot.lane.b32.xlu0 %v2454, 15
    %v2661 = vpop.permute.xlu0 %2660
    %2662 = vrot.lane.b32.xlu0 %v2455, 15
    %v2663 = vpop.permute.xlu0 %2662
    %2664 = vrot.lane.b32.xlu0 %v2456, 15
    %v2665 = vpop.permute.xlu0 %2664
    %v2666 = vsel %vm291, %v2663, %v2665
    %v2667 = vsel %vm291, %v2661, %v2663
    %v2668 = vsel %vm291, %v2659, %v2661
    %v2669 = vsel %vm291, %v2665, %v2659
    %v2670 = vmul.f32 %v2654, %v2669
    %v2671 = vmul.f32 %v2655, %v2668
    %v2672 = vmul.f32 %v2656, %v2667
    %v2673 = vmul.f32 %v2657, %v2666
    %v2674 = vadd.f32 %v2649, %v2670
    %v2675 = vadd.f32 %v2650, %v2671
    %v2676 = vadd.f32 %v2651, %v2672
    %v2677 = vadd.f32 %v2652, %v2673
    %s2678 = scalar_lea.vmem [#allocation8], 1888
    %v2679 = vld [vmem:[%s2678] sm:$0xff]
    %v2680 = vld [vmem:[%s2678 + $0x8] sm:$0xff]
    %v2681 = vld [vmem:[%s2678 + $0x10] sm:$0xff]
    %v2682 = vld [vmem:[%s2678 + $0x18] sm:$0xff]
    %2683 = vrot.lane.b32.xlu0 %v2453, 14
    %v2684 = vpop.permute.xlu0 %2683
    %2685 = vrot.lane.b32.xlu0 %v2454, 14
    %v2686 = vpop.permute.xlu0 %2685
    %2687 = vrot.lane.b32.xlu0 %v2455, 14
    %v2688 = vpop.permute.xlu0 %2687
    %2689 = vrot.lane.b32.xlu0 %v2456, 14
    %v2690 = vpop.permute.xlu0 %2689
    %v2691 = vsel %vm778, %v2688, %v2690
    %v2692 = vsel %vm778, %v2686, %v2688
    %v2693 = vsel %vm778, %v2684, %v2686
    %v2694 = vsel %vm778, %v2690, %v2684
    %v2695 = vmul.f32 %v2679, %v2694
    %v2696 = vmul.f32 %v2680, %v2693
    %v2697 = vmul.f32 %v2681, %v2692
    %v2698 = vmul.f32 %v2682, %v2691
    %v2699 = vadd.f32 %v2674, %v2695
    %v2700 = vadd.f32 %v2675, %v2696
    %v2701 = vadd.f32 %v2676, %v2697
    %v2702 = vadd.f32 %v2677, %v2698
    %s2703 = scalar_lea.vmem [#allocation8], 1920
    %v2704 = vld [vmem:[%s2703] sm:$0xff]
    %v2705 = vld [vmem:[%s2703 + $0x8] sm:$0xff]
    %v2706 = vld [vmem:[%s2703 + $0x10] sm:$0xff]
    %v2707 = vld [vmem:[%s2703 + $0x18] sm:$0xff]
    %2708 = vrot.lane.b32.xlu0 %v2453, 2
    %v2709 = vpop.permute.xlu0 %2708
    %2710 = vrot.lane.b32.xlu0 %v2454, 2
    %v2711 = vpop.permute.xlu0 %2710
    %2712 = vrot.lane.b32.xlu0 %v2455, 2
    %v2713 = vpop.permute.xlu0 %2712
    %2714 = vrot.lane.b32.xlu0 %v2456, 2
    %v2715 = vpop.permute.xlu0 %2714
    %v2716 = vsel %vm804, %v2713, %v2715
    %v2717 = vsel %vm804, %v2711, %v2713
    %v2718 = vsel %vm804, %v2709, %v2711
    %v2719 = vsel %vm804, %v2715, %v2709
    %v2720 = vmul.f32 %v2704, %v2719
    %v2721 = vmul.f32 %v2705, %v2718
    %v2722 = vmul.f32 %v2706, %v2717
    %v2723 = vmul.f32 %v2707, %v2716
    %v2724 = vadd.f32 %v2699, %v2720
    %v2725 = vadd.f32 %v2700, %v2721
    %v2726 = vadd.f32 %v2701, %v2722
    %v2727 = vadd.f32 %v2702, %v2723
    %s2728 = scalar_lea.vmem [#allocation8], 1952
    %v2729 = vld [vmem:[%s2728] sm:$0xff]
    %v2730 = vld [vmem:[%s2728 + $0x8] sm:$0xff]
    %v2731 = vld [vmem:[%s2728 + $0x10] sm:$0xff]
    %v2732 = vld [vmem:[%s2728 + $0x18] sm:$0xff]
    %2733 = vrot.lane.b32.xlu0 %v2453, 1
    %v2734 = vpop.permute.xlu0 %2733
    %2735 = vrot.lane.b32.xlu0 %v2454, 1
    %v2736 = vpop.permute.xlu0 %2735
    %2737 = vrot.lane.b32.xlu0 %v2455, 1
    %v2738 = vpop.permute.xlu0 %2737
    %2739 = vrot.lane.b32.xlu0 %v2456, 1
    %v2740 = vpop.permute.xlu0 %2739
    %v2741 = vsel %vm312, %v2738, %v2740
    %v2742 = vsel %vm312, %v2736, %v2738
    %v2743 = vsel %vm312, %v2734, %v2736
    %v2744 = vsel %vm312, %v2740, %v2734
    %v2745 = vmul.f32 %v2729, %v2744
    %v2746 = vmul.f32 %v2730, %v2743
    %v2747 = vmul.f32 %v2731, %v2742
    %v2748 = vmul.f32 %v2732, %v2741
    %v2749 = vadd.f32 %v2724, %v2745
    %v2750 = vadd.f32 %v2725, %v2746
    %v2751 = vadd.f32 %v2726, %v2747
    %v2752 = vadd.f32 %v2727, %v2748
    %s2753 = scalar_lea.vmem [#allocation8], 1984
    %v2754 = vld [vmem:[%s2753] sm:$0xff]
    %v2755 = vld [vmem:[%s2753 + $0x8] sm:$0xff]
    %v2756 = vld [vmem:[%s2753 + $0x10] sm:$0xff]
    %v2757 = vld [vmem:[%s2753 + $0x18] sm:$0xff]
    %v2758 = vmul.f32 %v2754, %v2453
    %v2759 = vmul.f32 %v2755, %v2454
    %v2760 = vmul.f32 %v2756, %v2455
    %v2761 = vmul.f32 %v2757, %v2456
    %v2762 = vadd.f32 %v2749, %v2758
    %v2763 = vadd.f32 %v2750, %v2759
    %v2764 = vadd.f32 %v2751, %v2760
    %v2765 = vadd.f32 %v2752, %v2761
    %s2766 = scalar_lea.vmem [#allocation8], 2016
    %v2767 = vld [vmem:[%s2766] sm:$0xff]
    %v2768 = vld [vmem:[%s2766 + $0x8] sm:$0xff]
    %v2769 = vld [vmem:[%s2766 + $0x10] sm:$0xff]
    %v2770 = vld [vmem:[%s2766 + $0x18] sm:$0xff]
    %2771 = vrot.lane.b32.xlu0 %v2453, 127
    %v2772 = vpop.permute.xlu0 %2771
    %2773 = vrot.lane.b32.xlu0 %v2454, 127
    %v2774 = vpop.permute.xlu0 %2773
    %2775 = vrot.lane.b32.xlu0 %v2455, 127
    %v2776 = vpop.permute.xlu0 %2775
    %2777 = vrot.lane.b32.xlu0 %v2456, 127
    %v2778 = vpop.permute.xlu0 %2777
    %v2779 = vsel %vm333, %v2776, %v2778
    %v2780 = vsel %vm333, %v2774, %v2776
    %v2781 = vsel %vm333, %v2772, %v2774
    %v2782 = vsel %vm333, %v2778, %v2772
    %v2783 = vmul.f32 %v2767, %v2781
    %v2784 = vmul.f32 %v2768, %v2780
    %v2785 = vmul.f32 %v2769, %v2779
    %v2786 = vmul.f32 %v2770, %v2782
    %v2787 = vadd.f32 %v2762, %v2783
    %v2788 = vadd.f32 %v2763, %v2784
    %v2789 = vadd.f32 %v2764, %v2785
    %v2790 = vadd.f32 %v2765, %v2786
    %s2791 = scalar_lea.vmem [#allocation8], 2048
    %v2792 = vld [vmem:[%s2791] sm:$0xff]
    %v2793 = vld [vmem:[%s2791 + $0x8] sm:$0xff]
    %v2794 = vld [vmem:[%s2791 + $0x10] sm:$0xff]
    %v2795 = vld [vmem:[%s2791 + $0x18] sm:$0xff]
    %2796 = vrot.lane.b32.xlu0 %v2453, 126
    %v2797 = vpop.permute.xlu0 %2796
    %2798 = vrot.lane.b32.xlu0 %v2454, 126
    %v2799 = vpop.permute.xlu0 %2798
    %2800 = vrot.lane.b32.xlu0 %v2455, 126
    %v2801 = vpop.permute.xlu0 %2800
    %2802 = vrot.lane.b32.xlu0 %v2456, 126
    %v2803 = vpop.permute.xlu0 %2802
    %v2804 = vsel %vm893, %v2801, %v2803
    %v2805 = vsel %vm893, %v2799, %v2801
    %v2806 = vsel %vm893, %v2797, %v2799
    %v2807 = vsel %vm893, %v2803, %v2797
    %v2808 = vmul.f32 %v2792, %v2806
    %v2809 = vmul.f32 %v2793, %v2805
    %v2810 = vmul.f32 %v2794, %v2804
    %v2811 = vmul.f32 %v2795, %v2807
    %v2812 = vadd.f32 %v2787, %v2808
    %v2813 = vadd.f32 %v2788, %v2809
    %v2814 = vadd.f32 %v2789, %v2810
    %v2815 = vadd.f32 %v2790, %v2811
    %s2816 = scalar_lea.vmem [#allocation8], 2080
    %v2817 = vld [vmem:[%s2816] sm:$0xff]
    %v2818 = vld [vmem:[%s2816 + $0x8] sm:$0xff]
    %v2819 = vld [vmem:[%s2816 + $0x10] sm:$0xff]
    %v2820 = vld [vmem:[%s2816 + $0x18] sm:$0xff]
    %2821 = vrot.lane.b32.xlu0 %v2453, 114
    %v2822 = vpop.permute.xlu0 %2821
    %2823 = vrot.lane.b32.xlu0 %v2454, 114
    %v2824 = vpop.permute.xlu0 %2823
    %2825 = vrot.lane.b32.xlu0 %v2455, 114
    %v2826 = vpop.permute.xlu0 %2825
    %2827 = vrot.lane.b32.xlu0 %v2456, 114
    %v2828 = vpop.permute.xlu0 %2827
    %v2829 = vsel %vm919, %v2826, %v2828
    %v2830 = vsel %vm919, %v2824, %v2826
    %v2831 = vsel %vm919, %v2822, %v2824
    %v2832 = vsel %vm919, %v2828, %v2822
    %v2833 = vmul.f32 %v2817, %v2831
    %v2834 = vmul.f32 %v2818, %v2830
    %v2835 = vmul.f32 %v2819, %v2829
    %v2836 = vmul.f32 %v2820, %v2832
    %v2837 = vadd.f32 %v2812, %v2833
    %v2838 = vadd.f32 %v2813, %v2834
    %v2839 = vadd.f32 %v2814, %v2835
    %v2840 = vadd.f32 %v2815, %v2836
    %s2841 = scalar_lea.vmem [#allocation8], 2112
    %v2842 = vld [vmem:[%s2841] sm:$0xff]
    %v2843 = vld [vmem:[%s2841 + $0x8] sm:$0xff]
    %v2844 = vld [vmem:[%s2841 + $0x10] sm:$0xff]
    %v2845 = vld [vmem:[%s2841 + $0x18] sm:$0xff]
    %2846 = vrot.lane.b32.xlu0 %v2453, 113
    %v2847 = vpop.permute.xlu0 %2846
    %2848 = vrot.lane.b32.xlu0 %v2454, 113
    %v2849 = vpop.permute.xlu0 %2848
    %2850 = vrot.lane.b32.xlu0 %v2455, 113
    %v2851 = vpop.permute.xlu0 %2850
    %2852 = vrot.lane.b32.xlu0 %v2456, 113
    %v2853 = vpop.permute.xlu0 %2852
    %v2854 = vsel %vm354, %v2851, %v2853
    %v2855 = vsel %vm354, %v2849, %v2851
    %v2856 = vsel %vm354, %v2847, %v2849
    %v2857 = vsel %vm354, %v2853, %v2847
    %v2858 = vmul.f32 %v2842, %v2856
    %v2859 = vmul.f32 %v2843, %v2855
    %v2860 = vmul.f32 %v2844, %v2854
    %v2861 = vmul.f32 %v2845, %v2857
    %v2862 = vadd.f32 %v2837, %v2858
    %v2863 = vadd.f32 %v2838, %v2859
    %v2864 = vadd.f32 %v2839, %v2860
    %v2865 = vadd.f32 %v2840, %v2861
    %s2866 = scalar_lea.vmem [#allocation8], 2144
    %v2867 = vld [vmem:[%s2866] sm:$0xff]
    %v2868 = vld [vmem:[%s2866 + $0x8] sm:$0xff]
    %v2869 = vld [vmem:[%s2866 + $0x10] sm:$0xff]
    %v2870 = vld [vmem:[%s2866 + $0x18] sm:$0xff]
    %2871 = vrot.lane.b32.xlu0 %v2453, 112
    %v2872 = vpop.permute.xlu0 %2871
    %2873 = vrot.lane.b32.xlu0 %v2454, 112
    %v2874 = vpop.permute.xlu0 %2873
    %2875 = vrot.lane.b32.xlu0 %v2455, 112
    %v2876 = vpop.permute.xlu0 %2875
    %2877 = vrot.lane.b32.xlu0 %v2456, 112
    %v2878 = vpop.permute.xlu0 %2877
    %v2879 = vsel %vm375, %v2876, %v2878
    %v2880 = vsel %vm375, %v2874, %v2876
    %v2881 = vsel %vm375, %v2872, %v2874
    %v2882 = vsel %vm375, %v2878, %v2872
    %v2883 = vmul.f32 %v2867, %v2881
    %v2884 = vmul.f32 %v2868, %v2880
    %v2885 = vmul.f32 %v2869, %v2879
    %v2886 = vmul.f32 %v2870, %v2882
    %v2887 = vadd.f32 %v2862, %v2883
    %v2888 = vadd.f32 %v2863, %v2884
    %v2889 = vadd.f32 %v2864, %v2885
    %v2890 = vadd.f32 %v2865, %v2886
    %s2891 = scalar_lea.vmem [#allocation8], 2176
    %v2892 = vld [vmem:[%s2891] sm:$0xff]
    %v2893 = vld [vmem:[%s2891 + $0x8] sm:$0xff]
    %v2894 = vld [vmem:[%s2891 + $0x10] sm:$0xff]
    %v2895 = vld [vmem:[%s2891 + $0x18] sm:$0xff]
    %2896 = vrot.lane.b32.xlu0 %v2453, 111
    %v2897 = vpop.permute.xlu0 %2896
    %2898 = vrot.lane.b32.xlu0 %v2454, 111
    %v2899 = vpop.permute.xlu0 %2898
    %2900 = vrot.lane.b32.xlu0 %v2455, 111
    %v2901 = vpop.permute.xlu0 %2900
    %2902 = vrot.lane.b32.xlu0 %v2456, 111
    %v2903 = vpop.permute.xlu0 %2902
    %v2904 = vsel %vm396, %v2901, %v2903
    %v2905 = vsel %vm396, %v2899, %v2901
    %v2906 = vsel %vm396, %v2897, %v2899
    %v2907 = vsel %vm396, %v2903, %v2897
    %v2908 = vmul.f32 %v2892, %v2906
    %v2909 = vmul.f32 %v2893, %v2905
    %v2910 = vmul.f32 %v2894, %v2904
    %v2911 = vmul.f32 %v2895, %v2907
    %v2912 = vadd.f32 %v2887, %v2908
    %v2913 = vadd.f32 %v2888, %v2909
    %v2914 = vadd.f32 %v2889, %v2910
    %v2915 = vadd.f32 %v2890, %v2911
    %s2916 = scalar_lea.vmem [#allocation8], 2208
    %v2917 = vld [vmem:[%s2916] sm:$0xff]
    %v2918 = vld [vmem:[%s2916 + $0x8] sm:$0xff]
    %v2919 = vld [vmem:[%s2916 + $0x10] sm:$0xff]
    %v2920 = vld [vmem:[%s2916 + $0x18] sm:$0xff]
    %2921 = vrot.lane.b32.xlu0 %v2453, 110
    %v2922 = vpop.permute.xlu0 %2921
    %2923 = vrot.lane.b32.xlu0 %v2454, 110
    %v2924 = vpop.permute.xlu0 %2923
    %2925 = vrot.lane.b32.xlu0 %v2455, 110
    %v2926 = vpop.permute.xlu0 %2925
    %2927 = vrot.lane.b32.xlu0 %v2456, 110
    %v2928 = vpop.permute.xlu0 %2927
    %v2929 = vsel %vm1020, %v2926, %v2928
    %v2930 = vsel %vm1020, %v2924, %v2926
    %v2931 = vsel %vm1020, %v2922, %v2924
    %v2932 = vsel %vm1020, %v2928, %v2922
    %v2933 = vmul.f32 %v2917, %v2931
    %v2934 = vmul.f32 %v2918, %v2930
    %v2935 = vmul.f32 %v2919, %v2929
    %v2936 = vmul.f32 %v2920, %v2932
    %v2937 = vadd.f32 %v2912, %v2933
    %v2938 = vadd.f32 %v2913, %v2934
    %v2939 = vadd.f32 %v2914, %v2935
    %v2940 = vadd.f32 %v2915, %v2936
    %s2941 = scalar_lea.vmem [#allocation8], 2240
    %v2942 = vld [vmem:[%s2941] sm:$0xff]
    %v2943 = vld [vmem:[%s2941 + $0x8] sm:$0xff]
    %v2944 = vld [vmem:[%s2941 + $0x10] sm:$0xff]
    %v2945 = vld [vmem:[%s2941 + $0x18] sm:$0xff]
    %2946 = vrot.lane.b32.xlu0 %v2453, 98
    %v2947 = vpop.permute.xlu0 %2946
    %2948 = vrot.lane.b32.xlu0 %v2454, 98
    %v2949 = vpop.permute.xlu0 %2948
    %2950 = vrot.lane.b32.xlu0 %v2455, 98
    %v2951 = vpop.permute.xlu0 %2950
    %2952 = vrot.lane.b32.xlu0 %v2456, 98
    %v2953 = vpop.permute.xlu0 %2952
    %v2954 = vsel %vm1046, %v2951, %v2953
    %v2955 = vsel %vm1046, %v2949, %v2951
    %v2956 = vsel %vm1046, %v2947, %v2949
    %v2957 = vsel %vm1046, %v2953, %v2947
    %v2958 = vmul.f32 %v2942, %v2956
    %v2959 = vmul.f32 %v2943, %v2955
    %v2960 = vmul.f32 %v2944, %v2954
    %v2961 = vmul.f32 %v2945, %v2957
    %v2962 = vadd.f32 %v2937, %v2958
    %v2963 = vadd.f32 %v2938, %v2959
    %v2964 = vadd.f32 %v2939, %v2960
    %v2965 = vadd.f32 %v2940, %v2961
    %s2966 = scalar_lea.vmem [#allocation8], 2272
    %v2967 = vld [vmem:[%s2966] sm:$0xff]
    %v2968 = vld [vmem:[%s2966 + $0x8] sm:$0xff]
    %v2969 = vld [vmem:[%s2966 + $0x10] sm:$0xff]
    %v2970 = vld [vmem:[%s2966 + $0x18] sm:$0xff]
    %2971 = vrot.lane.b32.xlu0 %v2453, 97
    %v2972 = vpop.permute.xlu0 %2971
    %2973 = vrot.lane.b32.xlu0 %v2454, 97
    %v2974 = vpop.permute.xlu0 %2973
    %2975 = vrot.lane.b32.xlu0 %v2455, 97
    %v2976 = vpop.permute.xlu0 %2975
    %2977 = vrot.lane.b32.xlu0 %v2456, 97
    %v2978 = vpop.permute.xlu0 %2977
    %v2979 = vsel %vm1072, %v2976, %v2978
    %v2980 = vsel %vm1072, %v2974, %v2976
    %v2981 = vsel %vm1072, %v2972, %v2974
    %v2982 = vsel %vm1072, %v2978, %v2972
    %v2983 = vmul.f32 %v2967, %v2981
    %v2984 = vmul.f32 %v2968, %v2980
    %v2985 = vmul.f32 %v2969, %v2979
    %v2986 = vmul.f32 %v2970, %v2982
    %v2987 = vadd.f32 %v2962, %v2983
    %v2988 = vadd.f32 %v2963, %v2984
    %v2989 = vadd.f32 %v2964, %v2985
    %v2990 = vadd.f32 %v2965, %v2986
    %s2991 = scalar_lea.vmem [#allocation8], 2304
    %v2992 = vld [vmem:[%s2991] sm:$0xff]
    %v2993 = vld [vmem:[%s2991 + $0x8] sm:$0xff]
    %v2994 = vld [vmem:[%s2991 + $0x10] sm:$0xff]
    %v2995 = vld [vmem:[%s2991 + $0x18] sm:$0xff]
    %2996 = vrot.lane.b32.xlu0 %v2453, 96
    %v2997 = vpop.permute.xlu0 %2996
    %2998 = vrot.lane.b32.xlu0 %v2454, 96
    %v2999 = vpop.permute.xlu0 %2998
    %3000 = vrot.lane.b32.xlu0 %v2455, 96
    %v3001 = vpop.permute.xlu0 %3000
    %3002 = vrot.lane.b32.xlu0 %v2456, 96
    %v3003 = vpop.permute.xlu0 %3002
    %v3004 = vsel %vm1098, %v3001, %v3003
    %v3005 = vsel %vm1098, %v2999, %v3001
    %v3006 = vsel %vm1098, %v2997, %v2999
    %v3007 = vsel %vm1098, %v3003, %v2997
    %v3008 = vmul.f32 %v2992, %v3006
    %v3009 = vmul.f32 %v2993, %v3005
    %v3010 = vmul.f32 %v2994, %v3004
    %v3011 = vmul.f32 %v2995, %v3007
    %v3012 = vadd.f32 %v2987, %v3008
    %v3013 = vadd.f32 %v2988, %v3009
    %v3014 = vadd.f32 %v2989, %v3010
    %v3015 = vadd.f32 %v2990, %v3011
    %s3016 = scalar_lea.vmem [#allocation8], 2336
    %v3017 = vld [vmem:[%s3016] sm:$0xff]
    %v3018 = vld [vmem:[%s3016 + $0x8] sm:$0xff]
    %v3019 = vld [vmem:[%s3016 + $0x10] sm:$0xff]
    %v3020 = vld [vmem:[%s3016 + $0x18] sm:$0xff]
    %3021 = vrot.lane.b32.xlu0 %v2453, 95
    %v3022 = vpop.permute.xlu0 %3021
    %3023 = vrot.lane.b32.xlu0 %v2454, 95
    %v3024 = vpop.permute.xlu0 %3023
    %3025 = vrot.lane.b32.xlu0 %v2455, 95
    %v3026 = vpop.permute.xlu0 %3025
    %3027 = vrot.lane.b32.xlu0 %v2456, 95
    %v3028 = vpop.permute.xlu0 %3027
    %v3029 = vsel %vm1124, %v3026, %v3028
    %v3030 = vsel %vm1124, %v3024, %v3026
    %v3031 = vsel %vm1124, %v3022, %v3024
    %v3032 = vsel %vm1124, %v3028, %v3022
    %v3033 = vmul.f32 %v3017, %v3031
    %v3034 = vmul.f32 %v3018, %v3030
    %v3035 = vmul.f32 %v3019, %v3029
    %v3036 = vmul.f32 %v3020, %v3032
    %v3037 = vadd.f32 %v3012, %v3033
    %v3038 = vadd.f32 %v3013, %v3034
    %v3039 = vadd.f32 %v3014, %v3035
    %v3040 = vadd.f32 %v3015, %v3036
    %s3041 = scalar_lea.vmem [#allocation8], 2368
    %v3042 = vld [vmem:[%s3041] sm:$0xff]
    %v3043 = vld [vmem:[%s3041 + $0x8] sm:$0xff]
    %v3044 = vld [vmem:[%s3041 + $0x10] sm:$0xff]
    %v3045 = vld [vmem:[%s3041 + $0x18] sm:$0xff]
    %3046 = vrot.lane.b32.xlu0 %v2453, 94
    %v3047 = vpop.permute.xlu0 %3046
    %3048 = vrot.lane.b32.xlu0 %v2454, 94
    %v3049 = vpop.permute.xlu0 %3048
    %3050 = vrot.lane.b32.xlu0 %v2455, 94
    %v3051 = vpop.permute.xlu0 %3050
    %3052 = vrot.lane.b32.xlu0 %v2456, 94
    %v3053 = vpop.permute.xlu0 %3052
    %v3054 = vsel %vm1150, %v3051, %v3053
    %v3055 = vsel %vm1150, %v3049, %v3051
    %v3056 = vsel %vm1150, %v3047, %v3049
    %v3057 = vsel %vm1150, %v3053, %v3047
    %v3058 = vmul.f32 %v3042, %v3056
    %v3059 = vmul.f32 %v3043, %v3055
    %v3060 = vmul.f32 %v3044, %v3054
    %v3061 = vmul.f32 %v3045, %v3057
    %v3062 = vadd.f32 %v3037, %v3058
    %v3063 = vadd.f32 %v3038, %v3059
    %v3064 = vadd.f32 %v3039, %v3060
    %v3065 = vadd.f32 %v3040, %v3061
    %v3066 = vld [vmem:[%s3 + $0x20] sm:$0xff]
    %3068 = vset.pattern.permute.xlu0 0
    %3069 = vperm.xlu0 %3068, %v3066
    %v3070 = vpop.permute.xlu0 %3069
    %v3072 = vadd.f32 %v3062, %v3070
    %v3073 = vadd.f32 %v3063, %v3070
    %v3074 = vadd.f32 %v3064, %v3070
    %v3075 = vadd.f32 %v3065, %v3070
    %v3076 = vmax.f32 %v3072, 0.0
    %v3077 = vmax.f32 %v3073, 0.0
    %v3078 = vmax.f32 %v3074, 0.0
    %v3079 = vmax.f32 %v3075, 0.0
    %v3080 = vld [vmem:[#allocation7 + $0x38] sm:$0xff]
    %v3081 = vpack.c.bf16 %v3080, %v3080
    %v3082 = vpack.c.bf16 %v3076, %v3076
    %v3083 = vpack.c.bf16 %v3077, %v3077
    %v3084 = vpack.c.bf16 %v3078, %v3078
    %v3085 = vpack.c.bf16 %v3079, %v3079
    %v3086 = vld [vmem:[%s3 + $0x28] sm:$0xff]
    %3088 = vset.pattern.permute.xlu0 0
    %3089 = vperm.xlu0 %3088, %v3086
    %v3090 = vpop.permute.xlu0 %3089
    %v3093 = vsel %vm1189, %v3081, 0
    %v3096 = vsel %vm447, %v3082, 0
    %v3099 = vsel %vm447, %v3083, 0
    %v3102 = vsel %vm447, %v3084, 0
    %v3105 = vsel %vm447, %v3085, 0
    %3107 = vmatpush.bf16.msra.mxu0 0
    %3108 = vmatpush.bf16.msra.mxu0 0
    %3109 = vmatpush.bf16.msra.mxu0 0
    %3110 = vmatpush.bf16.msra.mxu0 0
    %3111 = vmatpush.bf16.msra.mxu0 0
    %3112 = vmatpush.bf16.msra.mxu0 0
    %3113 = vmatpush.bf16.msra.mxu0 0
    %3114 = vmatpush.bf16.msra.mxu0 %v3096
    %3115 = vmatmul.bf16.gmra.mxu0 %v3093
    %v3116 = vpop.f32.mrf.mxu0
    %v3117 = vadd.f32 %v3090, %v3116
    %v3118 = vpop.f32.mrf.mxu0
    %3119 = vdwg.mxu0
    %3120 = vmatpush.bf16.msra.mxu0 0
    %3121 = vmatpush.bf16.msra.mxu0 0
    %3122 = vmatpush.bf16.msra.mxu0 0
    %3123 = vmatpush.bf16.msra.mxu0 0
    %3124 = vmatpush.bf16.msra.mxu0 0
    %3125 = vmatpush.bf16.msra.mxu0 0
    %3126 = vmatpush.bf16.msra.mxu0 0
    %3127 = vmatpush.bf16.msra.mxu0 %v3099
    %3128 = vmatmul.bf16.gmra.mxu0 %v3093
    %v3129 = vpop.f32.mrf.mxu0
    %v3130 = vadd.f32 %v3090, %v3129
    %v3131 = vpop.f32.mrf.mxu0
    %3132 = vdwg.mxu0
    %3133 = vmatpush.bf16.msra.mxu0 0
    %3134 = vmatpush.bf16.msra.mxu0 0
    %3135 = vmatpush.bf16.msra.mxu0 0
    %3136 = vmatpush.bf16.msra.mxu0 0
    %3137 = vmatpush.bf16.msra.mxu0 0
    %3138 = vmatpush.bf16.msra.mxu0 0
    %3139 = vmatpush.bf16.msra.mxu0 0
    %3140 = vmatpush.bf16.msra.mxu0 %v3102
    %3141 = vmatmul.bf16.gmra.mxu0 %v3093
    %v3142 = vpop.f32.mrf.mxu0
    %v3143 = vadd.f32 %v3090, %v3142
    %v3144 = vpop.f32.mrf.mxu0
    %3145 = vdwg.mxu0
    %3146 = vmatpush.bf16.msra.mxu0 0
    %3147 = vmatpush.bf16.msra.mxu0 0
    %3148 = vmatpush.bf16.msra.mxu0 0
    %3149 = vmatpush.bf16.msra.mxu0 0
    %3150 = vmatpush.bf16.msra.mxu0 0
    %3151 = vmatpush.bf16.msra.mxu0 0
    %3152 = vmatpush.bf16.msra.mxu0 0
    %3153 = vmatpush.bf16.msra.mxu0 %v3105
    %3154 = vmatmul.bf16.gmra.mxu0 %v3093
    %v3155 = vpop.f32.mrf.mxu0
    %v3156 = vadd.f32 %v3090, %v3155
    %v3157 = vpop.f32.mrf.mxu0
    %3158 = vdwg.mxu0
    %v3159 = vmax.f32 %v3117, 0.0
    %v3160 = vmax.f32 %v3130, 0.0
    %v3161 = vmax.f32 %v3143, 0.0
    %v3162 = vmax.f32 %v3156, 0.0
    %v3163 = vadd.f32 %v2212, %v3159
    %v3164 = vadd.f32 %v2213, %v3160
    %v3165 = vadd.f32 %v2214, %v3161
    %v3166 = vadd.f32 %v2215, %v3162
    %v3167 = vld [vmem:[#allocation7 + $0x40] sm:$0xff]
    %v3168 = vld [vmem:[#allocation7 + $0x48] sm:$0xff]
    %v3169 = vpack.c.bf16 %v3168, %v3167
    %v3170 = vpack.c.bf16 %v1261, %v231
    %v3171 = vpack.c.bf16 %v1262, %v232
    %v3172 = vpack.c.bf16 %v1263, %v233
    %v3173 = vpack.c.bf16 %v1264, %v234
    %v3174 = vpack.c.bf16 %v3163, %v2212
    %v3175 = vpack.c.bf16 %v3164, %v2213
    %v3176 = vpack.c.bf16 %v3165, %v2214
    %v3177 = vpack.c.bf16 %v3166, %v2215
    %v3178 = vld [vmem:[%s3 + $0x30] sm:$0xff]
    %v3179 = vld [vmem:[%s3 + $0x38] sm:$0xff]
    %3181 = vset.pattern.permute.xlu0 0
    %3182 = vperm.xlu0 %3181, %v3178
    %v3183 = vpop.permute.xlu0 %3182
    %3186 = vset.pattern.permute.xlu0 0
    %3187 = vperm.xlu0 %3186, %v3179
    %v3188 = vpop.permute.xlu0 %3187
    %vm3190 = vcmask 261120
    %v3192 = vsel %vm3190, %v3169, 0
    %3194 = vmatpush.bf16.msra.mxu0 0
    %3195 = vmatpush.bf16.msra.mxu0 0
    %3196 = vmatpush.bf16.msra.mxu0 0
    %3197 = vmatpush.bf16.msra.mxu0 0
    %3198 = vmatpush.bf16.msra.mxu0 0
    %3199 = vmatpush.bf16.msra.mxu0 0
    %3200 = vmatpush.bf16.msra.mxu0 %v3174
    %3201 = vmatpush.bf16.msra.mxu0 %v3170
    %3202 = vmatmul.bf16.gmra.mxu0 %v3192
    %v3203 = vpop.f32.mrf.mxu0
    %v3204 = vadd.f32 %v3183, %v3203
    %v3205 = vpop.f32.mrf.mxu0
    %v3206 = vadd.f32 %v3188, %v3205
    %3207 = vdwg.mxu0
    %3208 = vmatpush.bf16.msra.mxu0 0
    %3209 = vmatpush.bf16.msra.mxu0 0
    %3210 = vmatpush.bf16.msra.mxu0 0
    %3211 = vmatpush.bf16.msra.mxu0 0
    %3212 = vmatpush.bf16.msra.mxu0 0
    %3213 = vmatpush.bf16.msra.mxu0 0
    %3214 = vmatpush.bf16.msra.mxu0 %v3175
    %3215 = vmatpush.bf16.msra.mxu0 %v3171
    %3216 = vmatmul.bf16.gmra.mxu0 %v3192
    %v3217 = vpop.f32.mrf.mxu0
    %v3218 = vadd.f32 %v3183, %v3217
    %v3219 = vpop.f32.mrf.mxu0
    %v3220 = vadd.f32 %v3188, %v3219
    %3221 = vdwg.mxu0
    %3222 = vmatpush.bf16.msra.mxu0 0
    %3223 = vmatpush.bf16.msra.mxu0 0
    %3224 = vmatpush.bf16.msra.mxu0 0
    %3225 = vmatpush.bf16.msra.mxu0 0
    %3226 = vmatpush.bf16.msra.mxu0 0
    %3227 = vmatpush.bf16.msra.mxu0 0
    %3228 = vmatpush.bf16.msra.mxu0 %v3176
    %3229 = vmatpush.bf16.msra.mxu0 %v3172
    %3230 = vmatmul.bf16.gmra.mxu0 %v3192
    %v3231 = vpop.f32.mrf.mxu0
    %v3232 = vadd.f32 %v3183, %v3231
    %v3233 = vpop.f32.mrf.mxu0
    %v3234 = vadd.f32 %v3188, %v3233
    %3235 = vdwg.mxu0
    %3236 = vmatpush.bf16.msra.mxu0 0
    %3237 = vmatpush.bf16.msra.mxu0 0
    %3238 = vmatpush.bf16.msra.mxu0 0
    %3239 = vmatpush.bf16.msra.mxu0 0
    %3240 = vmatpush.bf16.msra.mxu0 0
    %3241 = vmatpush.bf16.msra.mxu0 0
    %3242 = vmatpush.bf16.msra.mxu0 %v3177
    %3243 = vmatpush.bf16.msra.mxu0 %v3173
    %3244 = vmatmul.bf16.gmra.mxu0 %v3192
    %v3245 = vpop.f32.mrf.mxu0
    %v3246 = vadd.f32 %v3183, %v3245
    %v3247 = vpop.f32.mrf.mxu0
    %v3248 = vadd.f32 %v3188, %v3247
    %3249 = vdwg.mxu0
    %v3250 = vsub.f32 0.0, %v3204
    %v3251 = vsub.f32 0.0, %v3218
    %v3252 = vsub.f32 0.0, %v3232
    %v3253 = vsub.f32 0.0, %v3246
    %v3254 = vsub.f32 0.0, %v3206
    %v3255 = vsub.f32 0.0, %v3220
    %v3256 = vsub.f32 0.0, %v3234
    %v3257 = vsub.f32 0.0, %v3248
    %v3258 = vmul.f32 %v3250, 1.442695
    %v3259 = vpow.pop %v3258
    %v3260 = vmul.f32 %v3251, 1.442695
    %v3261 = vpow.pop %v3260
    %v3262 = vmul.f32 %v3252, 1.442695
    %v3263 = vpow.pop %v3262
    %v3264 = vmul.f32 %v3253, 1.442695
    %v3265 = vpow.pop %v3264
    %v3266 = vmul.f32 %v3254, 1.442695
    %v3267 = vpow.pop %v3266
    %v3268 = vmul.f32 %v3255, 1.442695
    %v3269 = vpow.pop %v3268
    %v3270 = vmul.f32 %v3256, 1.442695
    %v3271 = vpow.pop %v3270
    %v3272 = vmul.f32 %v3257, 1.442695
    %v3273 = vpow.pop %v3272
    %v3274 = vadd.f32 %v3259, 1.0
    %v3275 = vadd.f32 %v3261, 1.0
    %v3276 = vadd.f32 %v3263, 1.0
    %v3277 = vadd.f32 %v3265, 1.0
    %v3278 = vadd.f32 %v3267, 1.0
    %v3279 = vadd.f32 %v3269, 1.0
    %v3280 = vadd.f32 %v3271, 1.0
    %v3281 = vadd.f32 %v3273, 1.0
    %v3282 = vrcp.pop %v3274
    %v3283 = vrcp.pop %v3275
    %v3284 = vrcp.pop %v3276
    %v3285 = vrcp.pop %v3277
    %v3286 = vrcp.pop %v3278
    %v3287 = vrcp.pop %v3279
    %v3288 = vrcp.pop %v3280
    %v3289 = vrcp.pop %v3281
    %v3290 = vmul.f32 %v3204, %v3282
    %v3291 = vmul.f32 %v3218, %v3283
    %v3292 = vmul.f32 %v3232, %v3284
    %v3293 = vmul.f32 %v3246, %v3285
    %v3294 = vmul.f32 %v3206, %v3286
    %v3295 = vmul.f32 %v3220, %v3287
    %v3296 = vmul.f32 %v3234, %v3288
    %v3297 = vmul.f32 %v3248, %v3289
    %3298 = vst [vmem:[#allocation10] sm:$0xff] %v3290
    %3299 = vst [vmem:[#allocation10 + $0x8] sm:$0xff] %v3291
    %3300 = vst [vmem:[#allocation10 + $0x10] sm:$0xff] %v3292
    %3301 = vst [vmem:[#allocation10 + $0x18] sm:$0xff] %v3293
    %3302 = vst [vmem:[#allocation10 + $0x20] sm:$0xff] %v3294
    %3303 = vst [vmem:[#allocation10 + $0x28] sm:$0xff] %v3295
    %3304 = vst [vmem:[#allocation10 + $0x30] sm:$0xff] %v3296
    %3305 = vst [vmem:[#allocation10 + $0x38] sm:$0xff] %v3297
    // Predicated region
    $region38: #{tpu_custom_call.1} parent=1 // pred_check
      _
    $region39: #{tpu_custom_call.1} parent=1 // pred_check_branch
      %3307 = sbr.rel (0) target = $region41
    $region40: #{tpu_custom_call.1} parent=1 // pred_region
      %3309 = vsyncadd [#allocation4], 0
      %s3310 = sshll.u32 [#allocation10], 4
      %s3311 = int_to_ptr.vmem [resolvable:$true] %s3310
      %s3312 = sshll.u32 %s5, 4
      %s3313 = int_to_ptr.hbm [resolvable:$true] %s3312
      %3318 = dma.vmem_to_hbm [thread:$0]  %s3311, 1024, %s3313, [#allocation4], 512, 512, 32
    $region41: #{tpu_custom_call.1} parent=1 // pred_fallthru
      _
    // Predicated region
    $region42: #{tpu_custom_call.1} parent=1 // pred_check
      _
    $region43: #{tpu_custom_call.1} parent=1 // pred_check_branch
      %3320 = sbr.rel (0) target = $region45
    $region44: #{tpu_custom_call.1} parent=1 // pred_region
      %3322 = dma.done [#allocation4], 1024
    $region45: #{tpu_custom_call.1} parent=1 // pred_fallthru
      _
    %3323 = vsyncpa [#allocation3], 1
    %3324 = vsyncpa [#allocation6], 1
    %3325 = vsyncpa [#allocation9], 1
    %3326 = vsyncpa [#allocation4], 1

</llo_original>
